<compile_context>
chip_gen: v7x
topology: tpu7x:2x2x1
jax: 0.10.0
libtpu: 0.0.40
codegen_flags: <defaults>
</compile_context>

<pallas_src>
import functools

import jax
import jax.numpy as jnp
import numpy as np
from jax import lax
from jax.experimental import pallas as pl
from jax.experimental.pallas import tpu as pltpu


def _kl_sum(logits_s, logits_t):
    """F.kl_div(log_softmax(s), softmax(t), reduction='sum') over the plane.

    Simplified form:  KL = (sum et*(lt - ls)) / zt + log zs - log zt
    with ls = s - max(s), lt = t - max(t), et = exp(lt), zs = sum exp(ls),
    zt = sum et.  No per-pixel divide, no materialized p/log-p planes.
    """
    ms = jnp.max(logits_s)
    mt = jnp.max(logits_t)
    ls = logits_s - ms
    lt = logits_t - mt
    et = jnp.exp(lt)
    zs = jnp.sum(jnp.exp(ls))
    zt = jnp.sum(et)
    num = jnp.sum(et * (lt - ls))
    return num / zt + (jnp.log(zs) - jnp.log(zt))


def _bpkd_kernel(gt_ref, s_ref, t_ref, out_ref, *,
                 temperature, num_classes, class_block, num_groups):
    # Block shapes:
    #   gt_ref : (1, 1, H, W) int32
    #   s_ref  : (1, class_block, H, W)
    #   t_ref  : (1, class_block, H, W)
    #   out_ref: (1, 1, 8, 128) f32   rows 0/1/2 = edge-KL, body-KL, edge-count
    H = gt_ref.shape[2]
    W = gt_ref.shape[3]

    gt = gt_ref[0, 0]                       # (H, W) int32

    # Hoisted once per grid step (shared by all classes of the group).
    rows = lax.broadcasted_iota(jnp.int32, (H, W), 0)
    cols = lax.broadcasted_iota(jnp.int32, (H, W), 1)
    ok_up = rows >= 1
    ok_down = rows <= H - 2
    ok_left = cols >= 1
    ok_right = cols <= W - 2
    zero = jnp.zeros((H, W), jnp.float32)

    inv_t = 1.0 / temperature
    t2 = temperature * temperature

    le_acc = jnp.float32(0.0)               # sum of edge-KL over valid classes
    lb_acc = jnp.float32(0.0)               # sum of body-KL over valid classes
    ne_acc = jnp.float32(0.0)               # number of edge pixels (valid classes)

    g = 0 if num_groups == 1 else pl.program_id(1)

    for j in range(class_block):
        if num_groups == 1:
            # Single group: class index is static; skip background statically.
            cls = j
            if cls == 0 or cls >= num_classes:
                continue
            m = (gt == cls).astype(jnp.float32)
        else:
            # Multiple groups: class index is dynamic; gate background and the
            # (possibly ragged) tail of the last group by zeroing the mask so
            # such classes fall out via the edges-count check below.
            cls = g * class_block + j
            class_ok = jnp.logical_and(cls >= 1, cls < num_classes)
            m = jnp.where(class_ok, (gt == cls).astype(jnp.float32), zero)

        # 4-connected neighbors with zero padding (scipy-default 3x3 cross
        # structuring element, border_value=0), matching binary_dilation ^
        # binary_erosion of monai.get_mask_edges.
        nb_up = jnp.where(ok_up, pltpu.roll(m, 1, 0), zero)       # from (r-1, c)
        nb_down = jnp.where(ok_down, pltpu.roll(m, H - 1, 0), zero)   # (r+1, c)
        nb_left = jnp.where(ok_left, pltpu.roll(m, 1, 1), zero)       # (r, c-1)
        nb_right = jnp.where(ok_right, pltpu.roll(m, W - 1, 1), zero)  # (r, c+1)

        dil = jnp.maximum(jnp.maximum(jnp.maximum(m, nb_up),
                                      jnp.maximum(nb_down, nb_left)), nb_right)
        ero = jnp.minimum(jnp.minimum(jnp.minimum(m, nb_up),
                                      jnp.minimum(nb_down, nb_left)), nb_right)
        edges = dil - ero                   # dilation XOR erosion (0/1 plane)
        bodies = m * (1.0 - edges)          # mask & ~edges
        ec = jnp.sum(edges)

        def _compute(j=j, edges=edges, bodies=bodies):
            # Only runs when this class has edge pixels: the loads, exps and
            # reductions are skipped entirely for absent classes.
            s = s_ref[0, j].astype(jnp.float32)
            t = t_ref[0, j].astype(jnp.float32)
            if temperature != 1.0:
                e_mask = edges * inv_t      # fold 1/T into the masks
                b_mask = bodies * inv_t
            else:
                e_mask = edges
                b_mask = bodies
            kl_e = _kl_sum(s * e_mask, t * e_mask) * t2
            kl_b = _kl_sum(s * b_mask, t * b_mask) * t2
            return kl_e, kl_b

        kl_e, kl_b = lax.cond(
            ec > 0.0,
            _compute,
            lambda: (jnp.float32(0.0), jnp.float32(0.0)),
        )

        le_acc = le_acc + kl_e
        lb_acc = lb_acc + kl_b
        ne_acc = ne_acc + ec                # ec == 0 for skipped classes

    # Pack the three per-(batch, group) partial sums into one output tile.
    row = lax.broadcasted_iota(jnp.int32, (8, 128), 0)
    tile = jnp.where(row == 0, le_acc,
                     jnp.where(row == 1, lb_acc,
                               jnp.where(row == 2, ne_acc, 0.0)))
    out_ref[0, 0] = tile


def bpkd_loss(preds_S, preds_T, gt_labels, *, alpha=2.0, temperature=1.0,
              num_classes=14, edge_weight=50.0, body_weight=20.0,
              loss_weight=1.0, class_budget_bytes=20 << 20):
    # alpha kept for signature parity with the PyTorch module (unused there too).
    del alpha
    B, C, H, W = preds_S.shape
    assert C == num_classes
    gt = gt_labels.astype(jnp.int32)

    # --- choose the class-group size from a VMEM byte budget -----------------
    # Per step: S + T class-group blocks, double-buffered -> 4 * cb * plane.
    # ~20 MiB keeps double-buffering alive well under v7x's 64 MiB physical
    # VMEM while still letting v5e/v6e take the whole class axis in one group
    # for typical segmentation shapes.
    plane_bytes = H * W * jnp.dtype(preds_S.dtype).itemsize
    cb = int(max(1, min(C, class_budget_bytes // max(1, 4 * plane_bytes))))
    ng = -(-C // cb)                         # ceil(C / cb)

    vmem_need = (2 * H * W * 4               # gt plane, double-buffered
                 + 4 * cb * plane_bytes      # S + T, double-buffered
                 + 2 * 8 * 128 * 4)          # output tile, double-buffered
    vmem_limit = int(min(max(2 * vmem_need, 4 << 20), 48 << 20))

    kernel = functools.partial(
        _bpkd_kernel,
        temperature=float(temperature),
        num_classes=int(C),
        class_block=cb,
        num_groups=ng,
    )

    grid_spec = pltpu.PrefetchScalarGridSpec(
        num_scalar_prefetch=0,
        grid=(B, ng),                        # ng innermost -> gt block reused
        in_specs=[
            pl.BlockSpec((1, 1, H, W), lambda b, g: (b, 0, 0, 0)),    # gt
            pl.BlockSpec((1, cb, H, W), lambda b, g: (b, g, 0, 0)),   # preds_S
            pl.BlockSpec((1, cb, H, W), lambda b, g: (b, g, 0, 0)),   # preds_T
        ],
        out_specs=pl.BlockSpec((1, 1, 8, 128), lambda b, g: (b, g, 0, 0)),
    )

    out = pl.pallas_call(
        kernel,
        out_shape=jax.ShapeDtypeStruct((B, ng, 8, 128), jnp.float32),
        grid_spec=grid_spec,
        compiler_params=pltpu.CompilerParams(
            dimension_semantics=("parallel", "parallel"),
            vmem_limit_bytes=vmem_limit),
    )(gt, preds_S, preds_T)

    # --- tiny O(B * ng) glue: the per-batch `if loss_edges_i > 0` logic ------
    le = jnp.sum(out[:, :, 0, 0], axis=1)    # (B,) edge-KL sums
    lb = jnp.sum(out[:, :, 1, 0], axis=1)    # (B,) body-KL sums
    ne = jnp.sum(out[:, :, 2, 0], axis=1)    # (B,) edge-pixel counts

    loss_edges_b = jnp.where(le > 0.0, le / jnp.maximum(ne, 1.0), 0.0)
    loss_edges = loss_weight * edge_weight * jnp.sum(loss_edges_b) / B
    loss_bodies = loss_weight * body_weight * jnp.sum(lb) / (num_classes * B)
    return dict(loss_edges=loss_edges, loss_bodies=loss_bodies)


def _reference_bpkd(preds_S, preds_T, gt_labels, *, temperature, num_classes,
                    edge_weight, body_weight, loss_weight):
    """Pure numpy (float64) re-implementation of the PyTorch forward."""
    ps = np.asarray(preds_S, dtype=np.float64)
    pt = np.asarray(preds_T, dtype=np.float64)
    gt = np.asarray(gt_labels)
    B, _, H, W = ps.shape
    loss_edges = 0.0
    loss_bodies = 0.0

    def klsum(a, b):
        a = a.reshape(-1) / temperature
        b = b.reshape(-1) / temperature
        la = a - a.max()
        lb = b - b.max()
        lpa = la - np.log(np.exp(la).sum())
        lpb = lb - np.log(np.exp(lb).sum())
        pb = np.exp(lpb)
        return float((pb * (lpb - lpa)).sum()) * temperature ** 2

    for bsi in range(B):
        le_i = 0.0
        nep = 0.0
        for i in range(1, num_classes):
            m = (gt[bsi, 0] == i).astype(np.float64)
            pad = np.pad(m, 1)
            up = pad[0:H, 1:W + 1]
            down = pad[2:H + 2, 1:W + 1]
            left = pad[1:H + 1, 0:W]
            right = pad[1:H + 1, 2:W + 2]
            dil = np.maximum.reduce([m, up, down, left, right])
            ero = np.minimum.reduce([m, up, down, left, right])
            edges = dil - ero
            bodies = m * (1.0 - edges)
            if edges.sum() == 0:
                continue
            nep += edges.sum()
            le_i += klsum(ps[bsi, i] * edges, pt[bsi, i] * edges)
            loss_bodies += klsum(ps[bsi, i] * bodies, pt[bsi, i] * bodies)
        if le_i > 0:
            loss_edges += le_i / nep
    loss_edges = loss_weight * edge_weight * loss_edges / B
    loss_bodies = loss_weight * body_weight * loss_bodies / (num_classes * B)
    return loss_edges, loss_bodies


if __name__ == "__main__":
    B, C, H, W = 2, 14, 16, 128
    key = jax.random.PRNGKey(0)
    k1, k2, k3 = jax.random.split(key, 3)
    preds_S = jax.random.normal(k1, (B, C, H, W), dtype=jnp.float32)
    preds_T = jax.random.normal(k2, (B, C, H, W), dtype=jnp.float32)
    gt_labels = jax.random.randint(k3, (B, 1, H, W), 0, C, dtype=jnp.int32)

    out = bpkd_loss(preds_S, preds_T, gt_labels,
                    alpha=2.0, temperature=1.0, num_classes=C,
                    edge_weight=50.0, body_weight=20.0, loss_weight=1.0)
    out = jax.tree_util.tree_map(jax.block_until_ready, out)

    ref_e, ref_b = _reference_bpkd(preds_S, preds_T, gt_labels,
                                   temperature=1.0, num_classes=C,
                                   edge_weight=50.0, body_weight=20.0,
                                   loss_weight=1.0)
    np.testing.assert_allclose(float(out["loss_edges"]), ref_e, rtol=1e-2, atol=1e-3)
    np.testing.assert_allclose(float(out["loss_bodies"]), ref_b, rtol=1e-2, atol=1e-3)

    print("KERNEL_OK")
</pallas_src>

<mosaic_0001>
module attributes {stable_mosaic.version = 11 : i64} {
  func.func @_bpkd_kernel(%arg0: i32, %arg1: i32, %arg2: memref<1x1x16x128xi32, #tpu.memory_space<vmem>>, %arg3: memref<1x14x16x128xf32, #tpu.memory_space<vmem>>, %arg4: memref<1x14x16x128xf32, #tpu.memory_space<vmem>>, %arg5: memref<1x1x8x128xf32, #tpu.memory_space<vmem>>) attributes {dimension_semantics = [#tpu.dimension_semantics<parallel>, #tpu.dimension_semantics<parallel>], iteration_bounds = array<i64: 2, 1>, scalar_prefetch = 0 : i64, scratch_operands = 0 : i64, tpu.core_type = #tpu.core_type<tc>, window_params = [{transform_indices = @transform_0, window_bounds = array<i64: 1, 1, 16, 128>}, {transform_indices = @transform_1, window_bounds = array<i64: 1, 14, 16, 128>}, {transform_indices = @transform_2, window_bounds = array<i64: 1, 14, 16, 128>}, {transform_indices = @transform_3, window_bounds = array<i64: 1, 1, 8, 128>}]} {
    %c0 = arith.constant 0 : index
    %c0_0 = arith.constant 0 : index
    %c0_1 = arith.constant 0 : index
    %c0_2 = arith.constant 0 : index
    %0 = vector.load %arg2[%c0, %c0_0, %c0_1, %c0_2] : memref<1x1x16x128xi32, #tpu.memory_space<vmem>>, vector<1x1x16x128xi32>
    %1 = vector.shape_cast %0 : vector<1x1x16x128xi32> to vector<16x128xi32>
    %2 = tpu.iota {dimensions = array<i32: 0>} : vector<16x128xi32>
    %3 = tpu.iota {dimensions = array<i32: 1>} : vector<16x128xi32>
    %c1_i32 = arith.constant 1 : i32
    %4 = vector.broadcast %c1_i32 : i32 to vector<16x128xi32>
    %5 = arith.cmpi sge, %2, %4 : vector<16x128xi32>
    %c14_i32 = arith.constant 14 : i32
    %6 = vector.broadcast %c14_i32 : i32 to vector<16x128xi32>
    %7 = arith.cmpi sle, %2, %6 : vector<16x128xi32>
    %c1_i32_3 = arith.constant 1 : i32
    %8 = vector.broadcast %c1_i32_3 : i32 to vector<16x128xi32>
    %9 = arith.cmpi sge, %3, %8 : vector<16x128xi32>
    %c126_i32 = arith.constant 126 : i32
    %10 = vector.broadcast %c126_i32 : i32 to vector<16x128xi32>
    %11 = arith.cmpi sle, %3, %10 : vector<16x128xi32>
    %cst = arith.constant 0.000000e+00 : f32
    %12 = vector.broadcast %cst : f32 to vector<16x128xf32>
    %c1_i32_4 = arith.constant 1 : i32
    %13 = vector.broadcast %c1_i32_4 : i32 to vector<16x128xi32>
    %14 = arith.cmpi eq, %1, %13 : vector<16x128xi32>
    %15 = arith.extui %14 : vector<16x128xi1> to vector<16x128xi32>
    %16 = arith.sitofp %15 : vector<16x128xi32> to vector<16x128xf32>
    %c1_i32_5 = arith.constant 1 : i32
    %17 = tpu.dynamic_rotate %16 by %c1_i32_5 dim 0 : vector<16x128xf32>, i32 -> vector<16x128xf32>
    %18 = arith.select %5, %17, %12 : vector<16x128xi1>, vector<16x128xf32>
    %c15_i32 = arith.constant 15 : i32
    %19 = tpu.dynamic_rotate %16 by %c15_i32 dim 0 : vector<16x128xf32>, i32 -> vector<16x128xf32>
    %20 = arith.select %7, %19, %12 : vector<16x128xi1>, vector<16x128xf32>
    %c1_i32_6 = arith.constant 1 : i32
    %21 = tpu.dynamic_rotate %16 by %c1_i32_6 dim 1 : vector<16x128xf32>, i32 -> vector<16x128xf32>
    %22 = arith.select %9, %21, %12 : vector<16x128xi1>, vector<16x128xf32>
    %c127_i32 = arith.constant 127 : i32
    %23 = tpu.dynamic_rotate %16 by %c127_i32 dim 1 : vector<16x128xf32>, i32 -> vector<16x128xf32>
    %24 = arith.select %11, %23, %12 : vector<16x128xi1>, vector<16x128xf32>
    %25 = arith.maximumf %16, %18 : vector<16x128xf32>
    %26 = arith.maximumf %20, %22 : vector<16x128xf32>
    %27 = arith.maximumf %25, %26 : vector<16x128xf32>
    %28 = arith.maximumf %27, %24 : vector<16x128xf32>
    %29 = arith.minimumf %16, %18 : vector<16x128xf32>
    %30 = arith.minimumf %20, %22 : vector<16x128xf32>
    %31 = arith.minimumf %29, %30 : vector<16x128xf32>
    %32 = arith.minimumf %31, %24 : vector<16x128xf32>
    %33 = arith.subf %28, %32 : vector<16x128xf32>
    %cst_7 = arith.constant 1.000000e+00 : f32
    %34 = vector.broadcast %cst_7 : f32 to vector<16x128xf32>
    %35 = arith.subf %34, %33 : vector<16x128xf32>
    %36 = arith.mulf %16, %35 : vector<16x128xf32>
    %37 = vector.shape_cast %33 : vector<16x128xf32> to vector<1x16x128xf32>
    %cst_8 = arith.constant dense<0.000000e+00> : vector<1xf32>
    %38 = vector.multi_reduction <add>, %37, %cst_8 [1, 2] : vector<1x16x128xf32> to vector<1xf32>
    %39 = vector.shape_cast %38 : vector<1xf32> to vector<1x1x1xf32>
    %40 = vector.extract %39[0, 0, 0] : f32 from vector<1x1x1xf32>
    %cst_9 = arith.constant 0.000000e+00 : f32
    %41 = arith.cmpf ogt, %40, %cst_9 : f32
    %42 = arith.extui %41 : i1 to i32
    %c0_i32 = arith.constant 0 : i32
    %43 = arith.cmpi ne, %42, %c0_i32 : i32
    %44:2 = scf.if %43 -> (f32, f32) {
      %c0_117 = arith.constant 0 : index
      %c1 = arith.constant 1 : index
      %c0_118 = arith.constant 0 : index
      %c0_119 = arith.constant 0 : index
      %485 = vector.load %arg3[%c0_117, %c1, %c0_118, %c0_119] : memref<1x14x16x128xf32, #tpu.memory_space<vmem>>, vector<1x1x16x128xf32>
      %486 = vector.shape_cast %485 : vector<1x1x16x128xf32> to vector<16x128xf32>
      %c0_120 = arith.constant 0 : index
      %c1_121 = arith.constant 1 : index
      %c0_122 = arith.constant 0 : index
      %c0_123 = arith.constant 0 : index
      %487 = vector.load %arg4[%c0_120, %c1_121, %c0_122, %c0_123] : memref<1x14x16x128xf32, #tpu.memory_space<vmem>>, vector<1x1x16x128xf32>
      %488 = vector.shape_cast %487 : vector<1x1x16x128xf32> to vector<16x128xf32>
      %489 = arith.mulf %486, %33 : vector<16x128xf32>
      %490 = arith.mulf %488, %33 : vector<16x128xf32>
      %491 = vector.shape_cast %489 : vector<16x128xf32> to vector<1x16x128xf32>
      %cst_124 = arith.constant dense<0xFF800000> : vector<1xf32>
      %492 = vector.multi_reduction <maximumf>, %491, %cst_124 [1, 2] : vector<1x16x128xf32> to vector<1xf32>
      %493 = vector.shape_cast %492 : vector<1xf32> to vector<1x1x1xf32>
      %494 = vector.extract %493[0, 0, 0] : f32 from vector<1x1x1xf32>
      %495 = vector.shape_cast %490 : vector<16x128xf32> to vector<1x16x128xf32>
      %cst_125 = arith.constant dense<0xFF800000> : vector<1xf32>
      %496 = vector.multi_reduction <maximumf>, %495, %cst_125 [1, 2] : vector<1x16x128xf32> to vector<1xf32>
      %497 = vector.shape_cast %496 : vector<1xf32> to vector<1x1x1xf32>
      %498 = vector.extract %497[0, 0, 0] : f32 from vector<1x1x1xf32>
      %499 = vector.broadcast %494 : f32 to vector<16x128xf32>
      %500 = arith.subf %489, %499 : vector<16x128xf32>
      %501 = vector.broadcast %498 : f32 to vector<16x128xf32>
      %502 = arith.subf %490, %501 : vector<16x128xf32>
      %503 = math.exp %502 : vector<16x128xf32>
      %504 = math.exp %500 : vector<16x128xf32>
      %505 = vector.shape_cast %504 : vector<16x128xf32> to vector<1x16x128xf32>
      %cst_126 = arith.constant dense<0.000000e+00> : vector<1xf32>
      %506 = vector.multi_reduction <add>, %505, %cst_126 [1, 2] : vector<1x16x128xf32> to vector<1xf32>
      %507 = vector.shape_cast %506 : vector<1xf32> to vector<1x1x1xf32>
      %508 = vector.extract %507[0, 0, 0] : f32 from vector<1x1x1xf32>
      %509 = vector.shape_cast %503 : vector<16x128xf32> to vector<1x16x128xf32>
      %cst_127 = arith.constant dense<0.000000e+00> : vector<1xf32>
      %510 = vector.multi_reduction <add>, %509, %cst_127 [1, 2] : vector<1x16x128xf32> to vector<1xf32>
      %511 = vector.shape_cast %510 : vector<1xf32> to vector<1x1x1xf32>
      %512 = vector.extract %511[0, 0, 0] : f32 from vector<1x1x1xf32>
      %513 = arith.subf %502, %500 : vector<16x128xf32>
      %514 = arith.mulf %503, %513 : vector<16x128xf32>
      %515 = vector.shape_cast %514 : vector<16x128xf32> to vector<1x16x128xf32>
      %cst_128 = arith.constant dense<0.000000e+00> : vector<1xf32>
      %516 = vector.multi_reduction <add>, %515, %cst_128 [1, 2] : vector<1x16x128xf32> to vector<1xf32>
      %517 = vector.shape_cast %516 : vector<1xf32> to vector<1x1x1xf32>
      %518 = vector.extract %517[0, 0, 0] : f32 from vector<1x1x1xf32>
      %519 = arith.divf %518, %512 : f32
      %520 = math.log %508 : f32
      %521 = math.log %512 : f32
      %522 = arith.subf %520, %521 : f32
      %523 = arith.addf %519, %522 : f32
      %cst_129 = arith.constant 1.000000e+00 : f32
      %524 = arith.mulf %523, %cst_129 : f32
      %525 = arith.mulf %486, %36 : vector<16x128xf32>
      %526 = arith.mulf %488, %36 : vector<16x128xf32>
      %527 = vector.shape_cast %525 : vector<16x128xf32> to vector<1x16x128xf32>
      %cst_130 = arith.constant dense<0xFF800000> : vector<1xf32>
      %528 = vector.multi_reduction <maximumf>, %527, %cst_130 [1, 2] : vector<1x16x128xf32> to vector<1xf32>
      %529 = vector.shape_cast %528 : vector<1xf32> to vector<1x1x1xf32>
      %530 = vector.extract %529[0, 0, 0] : f32 from vector<1x1x1xf32>
      %531 = vector.shape_cast %526 : vector<16x128xf32> to vector<1x16x128xf32>
      %cst_131 = arith.constant dense<0xFF800000> : vector<1xf32>
      %532 = vector.multi_reduction <maximumf>, %531, %cst_131 [1, 2] : vector<1x16x128xf32> to vector<1xf32>
      %533 = vector.shape_cast %532 : vector<1xf32> to vector<1x1x1xf32>
      %534 = vector.extract %533[0, 0, 0] : f32 from vector<1x1x1xf32>
      %535 = vector.broadcast %530 : f32 to vector<16x128xf32>
      %536 = arith.subf %525, %535 : vector<16x128xf32>
      %537 = vector.broadcast %534 : f32 to vector<16x128xf32>
      %538 = arith.subf %526, %537 : vector<16x128xf32>
      %539 = math.exp %538 : vector<16x128xf32>
      %540 = math.exp %536 : vector<16x128xf32>
      %541 = vector.shape_cast %540 : vector<16x128xf32> to vector<1x16x128xf32>
      %cst_132 = arith.constant dense<0.000000e+00> : vector<1xf32>
      %542 = vector.multi_reduction <add>, %541, %cst_132 [1, 2] : vector<1x16x128xf32> to vector<1xf32>
      %543 = vector.shape_cast %542 : vector<1xf32> to vector<1x1x1xf32>
      %544 = vector.extract %543[0, 0, 0] : f32 from vector<1x1x1xf32>
      %545 = vector.shape_cast %539 : vector<16x128xf32> to vector<1x16x128xf32>
      %cst_133 = arith.constant dense<0.000000e+00> : vector<1xf32>
      %546 = vector.multi_reduction <add>, %545, %cst_133 [1, 2] : vector<1x16x128xf32> to vector<1xf32>
      %547 = vector.shape_cast %546 : vector<1xf32> to vector<1x1x1xf32>
      %548 = vector.extract %547[0, 0, 0] : f32 from vector<1x1x1xf32>
      %549 = arith.subf %538, %536 : vector<16x128xf32>
      %550 = arith.mulf %539, %549 : vector<16x128xf32>
      %551 = vector.shape_cast %550 : vector<16x128xf32> to vector<1x16x128xf32>
      %cst_134 = arith.constant dense<0.000000e+00> : vector<1xf32>
      %552 = vector.multi_reduction <add>, %551, %cst_134 [1, 2] : vector<1x16x128xf32> to vector<1xf32>
      %553 = vector.shape_cast %552 : vector<1xf32> to vector<1x1x1xf32>
      %554 = vector.extract %553[0, 0, 0] : f32 from vector<1x1x1xf32>
      %555 = arith.divf %554, %548 : f32
      %556 = math.log %544 : f32
      %557 = math.log %548 : f32
      %558 = arith.subf %556, %557 : f32
      %559 = arith.addf %555, %558 : f32
      %cst_135 = arith.constant 1.000000e+00 : f32
      %560 = arith.mulf %559, %cst_135 : f32
      scf.yield %524, %560 : f32, f32
    } else {
      %cst_117 = arith.constant 0.000000e+00 : f32
      %cst_118 = arith.constant 0.000000e+00 : f32
      scf.yield %cst_117, %cst_118 : f32, f32
    }
    %cst_10 = arith.constant 0.000000e+00 : f32
    %45 = arith.addf %cst_10, %44#0 : f32
    %cst_11 = arith.constant 0.000000e+00 : f32
    %46 = arith.addf %cst_11, %44#1 : f32
    %cst_12 = arith.constant 0.000000e+00 : f32
    %47 = arith.addf %cst_12, %40 : f32
    %c2_i32 = arith.constant 2 : i32
    %48 = vector.broadcast %c2_i32 : i32 to vector<16x128xi32>
    %49 = arith.cmpi eq, %1, %48 : vector<16x128xi32>
    %50 = arith.extui %49 : vector<16x128xi1> to vector<16x128xi32>
    %51 = arith.sitofp %50 : vector<16x128xi32> to vector<16x128xf32>
    %c1_i32_13 = arith.constant 1 : i32
    %52 = tpu.dynamic_rotate %51 by %c1_i32_13 dim 0 : vector<16x128xf32>, i32 -> vector<16x128xf32>
    %53 = arith.select %5, %52, %12 : vector<16x128xi1>, vector<16x128xf32>
    %c15_i32_14 = arith.constant 15 : i32
    %54 = tpu.dynamic_rotate %51 by %c15_i32_14 dim 0 : vector<16x128xf32>, i32 -> vector<16x128xf32>
    %55 = arith.select %7, %54, %12 : vector<16x128xi1>, vector<16x128xf32>
    %c1_i32_15 = arith.constant 1 : i32
    %56 = tpu.dynamic_rotate %51 by %c1_i32_15 dim 1 : vector<16x128xf32>, i32 -> vector<16x128xf32>
    %57 = arith.select %9, %56, %12 : vector<16x128xi1>, vector<16x128xf32>
    %c127_i32_16 = arith.constant 127 : i32
    %58 = tpu.dynamic_rotate %51 by %c127_i32_16 dim 1 : vector<16x128xf32>, i32 -> vector<16x128xf32>
    %59 = arith.select %11, %58, %12 : vector<16x128xi1>, vector<16x128xf32>
    %60 = arith.maximumf %51, %53 : vector<16x128xf32>
    %61 = arith.maximumf %55, %57 : vector<16x128xf32>
    %62 = arith.maximumf %60, %61 : vector<16x128xf32>
    %63 = arith.maximumf %62, %59 : vector<16x128xf32>
    %64 = arith.minimumf %51, %53 : vector<16x128xf32>
    %65 = arith.minimumf %55, %57 : vector<16x128xf32>
    %66 = arith.minimumf %64, %65 : vector<16x128xf32>
    %67 = arith.minimumf %66, %59 : vector<16x128xf32>
    %68 = arith.subf %63, %67 : vector<16x128xf32>
    %cst_17 = arith.constant 1.000000e+00 : f32
    %69 = vector.broadcast %cst_17 : f32 to vector<16x128xf32>
    %70 = arith.subf %69, %68 : vector<16x128xf32>
    %71 = arith.mulf %51, %70 : vector<16x128xf32>
    %72 = vector.shape_cast %68 : vector<16x128xf32> to vector<1x16x128xf32>
    %cst_18 = arith.constant dense<0.000000e+00> : vector<1xf32>
    %73 = vector.multi_reduction <add>, %72, %cst_18 [1, 2] : vector<1x16x128xf32> to vector<1xf32>
    %74 = vector.shape_cast %73 : vector<1xf32> to vector<1x1x1xf32>
    %75 = vector.extract %74[0, 0, 0] : f32 from vector<1x1x1xf32>
    %cst_19 = arith.constant 0.000000e+00 : f32
    %76 = arith.cmpf ogt, %75, %cst_19 : f32
    %77 = arith.extui %76 : i1 to i32
    %c0_i32_20 = arith.constant 0 : i32
    %78 = arith.cmpi ne, %77, %c0_i32_20 : i32
    %79:2 = scf.if %78 -> (f32, f32) {
      %c0_117 = arith.constant 0 : index
      %c2 = arith.constant 2 : index
      %c0_118 = arith.constant 0 : index
      %c0_119 = arith.constant 0 : index
      %485 = vector.load %arg3[%c0_117, %c2, %c0_118, %c0_119] : memref<1x14x16x128xf32, #tpu.memory_space<vmem>>, vector<1x1x16x128xf32>
      %486 = vector.shape_cast %485 : vector<1x1x16x128xf32> to vector<16x128xf32>
      %c0_120 = arith.constant 0 : index
      %c2_121 = arith.constant 2 : index
      %c0_122 = arith.constant 0 : index
      %c0_123 = arith.constant 0 : index
      %487 = vector.load %arg4[%c0_120, %c2_121, %c0_122, %c0_123] : memref<1x14x16x128xf32, #tpu.memory_space<vmem>>, vector<1x1x16x128xf32>
      %488 = vector.shape_cast %487 : vector<1x1x16x128xf32> to vector<16x128xf32>
      %489 = arith.mulf %486, %68 : vector<16x128xf32>
      %490 = arith.mulf %488, %68 : vector<16x128xf32>
      %491 = vector.shape_cast %489 : vector<16x128xf32> to vector<1x16x128xf32>
      %cst_124 = arith.constant dense<0xFF800000> : vector<1xf32>
      %492 = vector.multi_reduction <maximumf>, %491, %cst_124 [1, 2] : vector<1x16x128xf32> to vector<1xf32>
      %493 = vector.shape_cast %492 : vector<1xf32> to vector<1x1x1xf32>
      %494 = vector.extract %493[0, 0, 0] : f32 from vector<1x1x1xf32>
      %495 = vector.shape_cast %490 : vector<16x128xf32> to vector<1x16x128xf32>
      %cst_125 = arith.constant dense<0xFF800000> : vector<1xf32>
      %496 = vector.multi_reduction <maximumf>, %495, %cst_125 [1, 2] : vector<1x16x128xf32> to vector<1xf32>
      %497 = vector.shape_cast %496 : vector<1xf32> to vector<1x1x1xf32>
      %498 = vector.extract %497[0, 0, 0] : f32 from vector<1x1x1xf32>
      %499 = vector.broadcast %494 : f32 to vector<16x128xf32>
      %500 = arith.subf %489, %499 : vector<16x128xf32>
      %501 = vector.broadcast %498 : f32 to vector<16x128xf32>
      %502 = arith.subf %490, %501 : vector<16x128xf32>
      %503 = math.exp %502 : vector<16x128xf32>
      %504 = math.exp %500 : vector<16x128xf32>
      %505 = vector.shape_cast %504 : vector<16x128xf32> to vector<1x16x128xf32>
      %cst_126 = arith.constant dense<0.000000e+00> : vector<1xf32>
      %506 = vector.multi_reduction <add>, %505, %cst_126 [1, 2] : vector<1x16x128xf32> to vector<1xf32>
      %507 = vector.shape_cast %506 : vector<1xf32> to vector<1x1x1xf32>
      %508 = vector.extract %507[0, 0, 0] : f32 from vector<1x1x1xf32>
      %509 = vector.shape_cast %503 : vector<16x128xf32> to vector<1x16x128xf32>
      %cst_127 = arith.constant dense<0.000000e+00> : vector<1xf32>
      %510 = vector.multi_reduction <add>, %509, %cst_127 [1, 2] : vector<1x16x128xf32> to vector<1xf32>
      %511 = vector.shape_cast %510 : vector<1xf32> to vector<1x1x1xf32>
      %512 = vector.extract %511[0, 0, 0] : f32 from vector<1x1x1xf32>
      %513 = arith.subf %502, %500 : vector<16x128xf32>
      %514 = arith.mulf %503, %513 : vector<16x128xf32>
      %515 = vector.shape_cast %514 : vector<16x128xf32> to vector<1x16x128xf32>
      %cst_128 = arith.constant dense<0.000000e+00> : vector<1xf32>
      %516 = vector.multi_reduction <add>, %515, %cst_128 [1, 2] : vector<1x16x128xf32> to vector<1xf32>
      %517 = vector.shape_cast %516 : vector<1xf32> to vector<1x1x1xf32>
      %518 = vector.extract %517[0, 0, 0] : f32 from vector<1x1x1xf32>
      %519 = arith.divf %518, %512 : f32
      %520 = math.log %508 : f32
      %521 = math.log %512 : f32
      %522 = arith.subf %520, %521 : f32
      %523 = arith.addf %519, %522 : f32
      %cst_129 = arith.constant 1.000000e+00 : f32
      %524 = arith.mulf %523, %cst_129 : f32
      %525 = arith.mulf %486, %71 : vector<16x128xf32>
      %526 = arith.mulf %488, %71 : vector<16x128xf32>
      %527 = vector.shape_cast %525 : vector<16x128xf32> to vector<1x16x128xf32>
      %cst_130 = arith.constant dense<0xFF800000> : vector<1xf32>
      %528 = vector.multi_reduction <maximumf>, %527, %cst_130 [1, 2] : vector<1x16x128xf32> to vector<1xf32>
      %529 = vector.shape_cast %528 : vector<1xf32> to vector<1x1x1xf32>
      %530 = vector.extract %529[0, 0, 0] : f32 from vector<1x1x1xf32>
      %531 = vector.shape_cast %526 : vector<16x128xf32> to vector<1x16x128xf32>
      %cst_131 = arith.constant dense<0xFF800000> : vector<1xf32>
      %532 = vector.multi_reduction <maximumf>, %531, %cst_131 [1, 2] : vector<1x16x128xf32> to vector<1xf32>
      %533 = vector.shape_cast %532 : vector<1xf32> to vector<1x1x1xf32>
      %534 = vector.extract %533[0, 0, 0] : f32 from vector<1x1x1xf32>
      %535 = vector.broadcast %530 : f32 to vector<16x128xf32>
      %536 = arith.subf %525, %535 : vector<16x128xf32>
      %537 = vector.broadcast %534 : f32 to vector<16x128xf32>
      %538 = arith.subf %526, %537 : vector<16x128xf32>
      %539 = math.exp %538 : vector<16x128xf32>
      %540 = math.exp %536 : vector<16x128xf32>
      %541 = vector.shape_cast %540 : vector<16x128xf32> to vector<1x16x128xf32>
      %cst_132 = arith.constant dense<0.000000e+00> : vector<1xf32>
      %542 = vector.multi_reduction <add>, %541, %cst_132 [1, 2] : vector<1x16x128xf32> to vector<1xf32>
      %543 = vector.shape_cast %542 : vector<1xf32> to vector<1x1x1xf32>
      %544 = vector.extract %543[0, 0, 0] : f32 from vector<1x1x1xf32>
      %545 = vector.shape_cast %539 : vector<16x128xf32> to vector<1x16x128xf32>
      %cst_133 = arith.constant dense<0.000000e+00> : vector<1xf32>
      %546 = vector.multi_reduction <add>, %545, %cst_133 [1, 2] : vector<1x16x128xf32> to vector<1xf32>
      %547 = vector.shape_cast %546 : vector<1xf32> to vector<1x1x1xf32>
      %548 = vector.extract %547[0, 0, 0] : f32 from vector<1x1x1xf32>
      %549 = arith.subf %538, %536 : vector<16x128xf32>
      %550 = arith.mulf %539, %549 : vector<16x128xf32>
      %551 = vector.shape_cast %550 : vector<16x128xf32> to vector<1x16x128xf32>
      %cst_134 = arith.constant dense<0.000000e+00> : vector<1xf32>
      %552 = vector.multi_reduction <add>, %551, %cst_134 [1, 2] : vector<1x16x128xf32> to vector<1xf32>
      %553 = vector.shape_cast %552 : vector<1xf32> to vector<1x1x1xf32>
      %554 = vector.extract %553[0, 0, 0] : f32 from vector<1x1x1xf32>
      %555 = arith.divf %554, %548 : f32
      %556 = math.log %544 : f32
      %557 = math.log %548 : f32
      %558 = arith.subf %556, %557 : f32
      %559 = arith.addf %555, %558 : f32
      %cst_135 = arith.constant 1.000000e+00 : f32
      %560 = arith.mulf %559, %cst_135 : f32
      scf.yield %524, %560 : f32, f32
    } else {
      %cst_117 = arith.constant 0.000000e+00 : f32
      %cst_118 = arith.constant 0.000000e+00 : f32
      scf.yield %cst_117, %cst_118 : f32, f32
    }
    %80 = arith.addf %45, %79#0 : f32
    %81 = arith.addf %46, %79#1 : f32
    %82 = arith.addf %47, %75 : f32
    %c3_i32 = arith.constant 3 : i32
    %83 = vector.broadcast %c3_i32 : i32 to vector<16x128xi32>
    %84 = arith.cmpi eq, %1, %83 : vector<16x128xi32>
    %85 = arith.extui %84 : vector<16x128xi1> to vector<16x128xi32>
    %86 = arith.sitofp %85 : vector<16x128xi32> to vector<16x128xf32>
    %c1_i32_21 = arith.constant 1 : i32
    %87 = tpu.dynamic_rotate %86 by %c1_i32_21 dim 0 : vector<16x128xf32>, i32 -> vector<16x128xf32>
    %88 = arith.select %5, %87, %12 : vector<16x128xi1>, vector<16x128xf32>
    %c15_i32_22 = arith.constant 15 : i32
    %89 = tpu.dynamic_rotate %86 by %c15_i32_22 dim 0 : vector<16x128xf32>, i32 -> vector<16x128xf32>
    %90 = arith.select %7, %89, %12 : vector<16x128xi1>, vector<16x128xf32>
    %c1_i32_23 = arith.constant 1 : i32
    %91 = tpu.dynamic_rotate %86 by %c1_i32_23 dim 1 : vector<16x128xf32>, i32 -> vector<16x128xf32>
    %92 = arith.select %9, %91, %12 : vector<16x128xi1>, vector<16x128xf32>
    %c127_i32_24 = arith.constant 127 : i32
    %93 = tpu.dynamic_rotate %86 by %c127_i32_24 dim 1 : vector<16x128xf32>, i32 -> vector<16x128xf32>
    %94 = arith.select %11, %93, %12 : vector<16x128xi1>, vector<16x128xf32>
    %95 = arith.maximumf %86, %88 : vector<16x128xf32>
    %96 = arith.maximumf %90, %92 : vector<16x128xf32>
    %97 = arith.maximumf %95, %96 : vector<16x128xf32>
    %98 = arith.maximumf %97, %94 : vector<16x128xf32>
    %99 = arith.minimumf %86, %88 : vector<16x128xf32>
    %100 = arith.minimumf %90, %92 : vector<16x128xf32>
    %101 = arith.minimumf %99, %100 : vector<16x128xf32>
    %102 = arith.minimumf %101, %94 : vector<16x128xf32>
    %103 = arith.subf %98, %102 : vector<16x128xf32>
    %cst_25 = arith.constant 1.000000e+00 : f32
    %104 = vector.broadcast %cst_25 : f32 to vector<16x128xf32>
    %105 = arith.subf %104, %103 : vector<16x128xf32>
    %106 = arith.mulf %86, %105 : vector<16x128xf32>
    %107 = vector.shape_cast %103 : vector<16x128xf32> to vector<1x16x128xf32>
    %cst_26 = arith.constant dense<0.000000e+00> : vector<1xf32>
    %108 = vector.multi_reduction <add>, %107, %cst_26 [1, 2] : vector<1x16x128xf32> to vector<1xf32>
    %109 = vector.shape_cast %108 : vector<1xf32> to vector<1x1x1xf32>
    %110 = vector.extract %109[0, 0, 0] : f32 from vector<1x1x1xf32>
    %cst_27 = arith.constant 0.000000e+00 : f32
    %111 = arith.cmpf ogt, %110, %cst_27 : f32
    %112 = arith.extui %111 : i1 to i32
    %c0_i32_28 = arith.constant 0 : i32
    %113 = arith.cmpi ne, %112, %c0_i32_28 : i32
    %114:2 = scf.if %113 -> (f32, f32) {
      %c0_117 = arith.constant 0 : index
      %c3 = arith.constant 3 : index
      %c0_118 = arith.constant 0 : index
      %c0_119 = arith.constant 0 : index
      %485 = vector.load %arg3[%c0_117, %c3, %c0_118, %c0_119] : memref<1x14x16x128xf32, #tpu.memory_space<vmem>>, vector<1x1x16x128xf32>
      %486 = vector.shape_cast %485 : vector<1x1x16x128xf32> to vector<16x128xf32>
      %c0_120 = arith.constant 0 : index
      %c3_121 = arith.constant 3 : index
      %c0_122 = arith.constant 0 : index
      %c0_123 = arith.constant 0 : index
      %487 = vector.load %arg4[%c0_120, %c3_121, %c0_122, %c0_123] : memref<1x14x16x128xf32, #tpu.memory_space<vmem>>, vector<1x1x16x128xf32>
      %488 = vector.shape_cast %487 : vector<1x1x16x128xf32> to vector<16x128xf32>
      %489 = arith.mulf %486, %103 : vector<16x128xf32>
      %490 = arith.mulf %488, %103 : vector<16x128xf32>
      %491 = vector.shape_cast %489 : vector<16x128xf32> to vector<1x16x128xf32>
      %cst_124 = arith.constant dense<0xFF800000> : vector<1xf32>
      %492 = vector.multi_reduction <maximumf>, %491, %cst_124 [1, 2] : vector<1x16x128xf32> to vector<1xf32>
      %493 = vector.shape_cast %492 : vector<1xf32> to vector<1x1x1xf32>
      %494 = vector.extract %493[0, 0, 0] : f32 from vector<1x1x1xf32>
      %495 = vector.shape_cast %490 : vector<16x128xf32> to vector<1x16x128xf32>
      %cst_125 = arith.constant dense<0xFF800000> : vector<1xf32>
      %496 = vector.multi_reduction <maximumf>, %495, %cst_125 [1, 2] : vector<1x16x128xf32> to vector<1xf32>
      %497 = vector.shape_cast %496 : vector<1xf32> to vector<1x1x1xf32>
      %498 = vector.extract %497[0, 0, 0] : f32 from vector<1x1x1xf32>
      %499 = vector.broadcast %494 : f32 to vector<16x128xf32>
      %500 = arith.subf %489, %499 : vector<16x128xf32>
      %501 = vector.broadcast %498 : f32 to vector<16x128xf32>
      %502 = arith.subf %490, %501 : vector<16x128xf32>
      %503 = math.exp %502 : vector<16x128xf32>
      %504 = math.exp %500 : vector<16x128xf32>
      %505 = vector.shape_cast %504 : vector<16x128xf32> to vector<1x16x128xf32>
      %cst_126 = arith.constant dense<0.000000e+00> : vector<1xf32>
      %506 = vector.multi_reduction <add>, %505, %cst_126 [1, 2] : vector<1x16x128xf32> to vector<1xf32>
      %507 = vector.shape_cast %506 : vector<1xf32> to vector<1x1x1xf32>
      %508 = vector.extract %507[0, 0, 0] : f32 from vector<1x1x1xf32>
      %509 = vector.shape_cast %503 : vector<16x128xf32> to vector<1x16x128xf32>
      %cst_127 = arith.constant dense<0.000000e+00> : vector<1xf32>
      %510 = vector.multi_reduction <add>, %509, %cst_127 [1, 2] : vector<1x16x128xf32> to vector<1xf32>
      %511 = vector.shape_cast %510 : vector<1xf32> to vector<1x1x1xf32>
      %512 = vector.extract %511[0, 0, 0] : f32 from vector<1x1x1xf32>
      %513 = arith.subf %502, %500 : vector<16x128xf32>
      %514 = arith.mulf %503, %513 : vector<16x128xf32>
      %515 = vector.shape_cast %514 : vector<16x128xf32> to vector<1x16x128xf32>
      %cst_128 = arith.constant dense<0.000000e+00> : vector<1xf32>
      %516 = vector.multi_reduction <add>, %515, %cst_128 [1, 2] : vector<1x16x128xf32> to vector<1xf32>
      %517 = vector.shape_cast %516 : vector<1xf32> to vector<1x1x1xf32>
      %518 = vector.extract %517[0, 0, 0] : f32 from vector<1x1x1xf32>
      %519 = arith.divf %518, %512 : f32
      %520 = math.log %508 : f32
      %521 = math.log %512 : f32
      %522 = arith.subf %520, %521 : f32
      %523 = arith.addf %519, %522 : f32
      %cst_129 = arith.constant 1.000000e+00 : f32
      %524 = arith.mulf %523, %cst_129 : f32
      %525 = arith.mulf %486, %106 : vector<16x128xf32>
      %526 = arith.mulf %488, %106 : vector<16x128xf32>
      %527 = vector.shape_cast %525 : vector<16x128xf32> to vector<1x16x128xf32>
      %cst_130 = arith.constant dense<0xFF800000> : vector<1xf32>
      %528 = vector.multi_reduction <maximumf>, %527, %cst_130 [1, 2] : vector<1x16x128xf32> to vector<1xf32>
      %529 = vector.shape_cast %528 : vector<1xf32> to vector<1x1x1xf32>
      %530 = vector.extract %529[0, 0, 0] : f32 from vector<1x1x1xf32>
      %531 = vector.shape_cast %526 : vector<16x128xf32> to vector<1x16x128xf32>
      %cst_131 = arith.constant dense<0xFF800000> : vector<1xf32>
      %532 = vector.multi_reduction <maximumf>, %531, %cst_131 [1, 2] : vector<1x16x128xf32> to vector<1xf32>
      %533 = vector.shape_cast %532 : vector<1xf32> to vector<1x1x1xf32>
      %534 = vector.extract %533[0, 0, 0] : f32 from vector<1x1x1xf32>
      %535 = vector.broadcast %530 : f32 to vector<16x128xf32>
      %536 = arith.subf %525, %535 : vector<16x128xf32>
      %537 = vector.broadcast %534 : f32 to vector<16x128xf32>
      %538 = arith.subf %526, %537 : vector<16x128xf32>
      %539 = math.exp %538 : vector<16x128xf32>
      %540 = math.exp %536 : vector<16x128xf32>
      %541 = vector.shape_cast %540 : vector<16x128xf32> to vector<1x16x128xf32>
      %cst_132 = arith.constant dense<0.000000e+00> : vector<1xf32>
      %542 = vector.multi_reduction <add>, %541, %cst_132 [1, 2] : vector<1x16x128xf32> to vector<1xf32>
      %543 = vector.shape_cast %542 : vector<1xf32> to vector<1x1x1xf32>
      %544 = vector.extract %543[0, 0, 0] : f32 from vector<1x1x1xf32>
      %545 = vector.shape_cast %539 : vector<16x128xf32> to vector<1x16x128xf32>
      %cst_133 = arith.constant dense<0.000000e+00> : vector<1xf32>
      %546 = vector.multi_reduction <add>, %545, %cst_133 [1, 2] : vector<1x16x128xf32> to vector<1xf32>
      %547 = vector.shape_cast %546 : vector<1xf32> to vector<1x1x1xf32>
      %548 = vector.extract %547[0, 0, 0] : f32 from vector<1x1x1xf32>
      %549 = arith.subf %538, %536 : vector<16x128xf32>
      %550 = arith.mulf %539, %549 : vector<16x128xf32>
      %551 = vector.shape_cast %550 : vector<16x128xf32> to vector<1x16x128xf32>
      %cst_134 = arith.constant dense<0.000000e+00> : vector<1xf32>
      %552 = vector.multi_reduction <add>, %551, %cst_134 [1, 2] : vector<1x16x128xf32> to vector<1xf32>
      %553 = vector.shape_cast %552 : vector<1xf32> to vector<1x1x1xf32>
      %554 = vector.extract %553[0, 0, 0] : f32 from vector<1x1x1xf32>
      %555 = arith.divf %554, %548 : f32
      %556 = math.log %544 : f32
      %557 = math.log %548 : f32
      %558 = arith.subf %556, %557 : f32
      %559 = arith.addf %555, %558 : f32
      %cst_135 = arith.constant 1.000000e+00 : f32
      %560 = arith.mulf %559, %cst_135 : f32
      scf.yield %524, %560 : f32, f32
    } else {
      %cst_117 = arith.constant 0.000000e+00 : f32
      %cst_118 = arith.constant 0.000000e+00 : f32
      scf.yield %cst_117, %cst_118 : f32, f32
    }
    %115 = arith.addf %80, %114#0 : f32
    %116 = arith.addf %81, %114#1 : f32
    %117 = arith.addf %82, %110 : f32
    %c4_i32 = arith.constant 4 : i32
    %118 = vector.broadcast %c4_i32 : i32 to vector<16x128xi32>
    %119 = arith.cmpi eq, %1, %118 : vector<16x128xi32>
    %120 = arith.extui %119 : vector<16x128xi1> to vector<16x128xi32>
    %121 = arith.sitofp %120 : vector<16x128xi32> to vector<16x128xf32>
    %c1_i32_29 = arith.constant 1 : i32
    %122 = tpu.dynamic_rotate %121 by %c1_i32_29 dim 0 : vector<16x128xf32>, i32 -> vector<16x128xf32>
    %123 = arith.select %5, %122, %12 : vector<16x128xi1>, vector<16x128xf32>
    %c15_i32_30 = arith.constant 15 : i32
    %124 = tpu.dynamic_rotate %121 by %c15_i32_30 dim 0 : vector<16x128xf32>, i32 -> vector<16x128xf32>
    %125 = arith.select %7, %124, %12 : vector<16x128xi1>, vector<16x128xf32>
    %c1_i32_31 = arith.constant 1 : i32
    %126 = tpu.dynamic_rotate %121 by %c1_i32_31 dim 1 : vector<16x128xf32>, i32 -> vector<16x128xf32>
    %127 = arith.select %9, %126, %12 : vector<16x128xi1>, vector<16x128xf32>
    %c127_i32_32 = arith.constant 127 : i32
    %128 = tpu.dynamic_rotate %121 by %c127_i32_32 dim 1 : vector<16x128xf32>, i32 -> vector<16x128xf32>
    %129 = arith.select %11, %128, %12 : vector<16x128xi1>, vector<16x128xf32>
    %130 = arith.maximumf %121, %123 : vector<16x128xf32>
    %131 = arith.maximumf %125, %127 : vector<16x128xf32>
    %132 = arith.maximumf %130, %131 : vector<16x128xf32>
    %133 = arith.maximumf %132, %129 : vector<16x128xf32>
    %134 = arith.minimumf %121, %123 : vector<16x128xf32>
    %135 = arith.minimumf %125, %127 : vector<16x128xf32>
    %136 = arith.minimumf %134, %135 : vector<16x128xf32>
    %137 = arith.minimumf %136, %129 : vector<16x128xf32>
    %138 = arith.subf %133, %137 : vector<16x128xf32>
    %cst_33 = arith.constant 1.000000e+00 : f32
    %139 = vector.broadcast %cst_33 : f32 to vector<16x128xf32>
    %140 = arith.subf %139, %138 : vector<16x128xf32>
    %141 = arith.mulf %121, %140 : vector<16x128xf32>
    %142 = vector.shape_cast %138 : vector<16x128xf32> to vector<1x16x128xf32>
    %cst_34 = arith.constant dense<0.000000e+00> : vector<1xf32>
    %143 = vector.multi_reduction <add>, %142, %cst_34 [1, 2] : vector<1x16x128xf32> to vector<1xf32>
    %144 = vector.shape_cast %143 : vector<1xf32> to vector<1x1x1xf32>
    %145 = vector.extract %144[0, 0, 0] : f32 from vector<1x1x1xf32>
    %cst_35 = arith.constant 0.000000e+00 : f32
    %146 = arith.cmpf ogt, %145, %cst_35 : f32
    %147 = arith.extui %146 : i1 to i32
    %c0_i32_36 = arith.constant 0 : i32
    %148 = arith.cmpi ne, %147, %c0_i32_36 : i32
    %149:2 = scf.if %148 -> (f32, f32) {
      %c0_117 = arith.constant 0 : index
      %c4 = arith.constant 4 : index
      %c0_118 = arith.constant 0 : index
      %c0_119 = arith.constant 0 : index
      %485 = vector.load %arg3[%c0_117, %c4, %c0_118, %c0_119] : memref<1x14x16x128xf32, #tpu.memory_space<vmem>>, vector<1x1x16x128xf32>
      %486 = vector.shape_cast %485 : vector<1x1x16x128xf32> to vector<16x128xf32>
      %c0_120 = arith.constant 0 : index
      %c4_121 = arith.constant 4 : index
      %c0_122 = arith.constant 0 : index
      %c0_123 = arith.constant 0 : index
      %487 = vector.load %arg4[%c0_120, %c4_121, %c0_122, %c0_123] : memref<1x14x16x128xf32, #tpu.memory_space<vmem>>, vector<1x1x16x128xf32>
      %488 = vector.shape_cast %487 : vector<1x1x16x128xf32> to vector<16x128xf32>
      %489 = arith.mulf %486, %138 : vector<16x128xf32>
      %490 = arith.mulf %488, %138 : vector<16x128xf32>
      %491 = vector.shape_cast %489 : vector<16x128xf32> to vector<1x16x128xf32>
      %cst_124 = arith.constant dense<0xFF800000> : vector<1xf32>
      %492 = vector.multi_reduction <maximumf>, %491, %cst_124 [1, 2] : vector<1x16x128xf32> to vector<1xf32>
      %493 = vector.shape_cast %492 : vector<1xf32> to vector<1x1x1xf32>
      %494 = vector.extract %493[0, 0, 0] : f32 from vector<1x1x1xf32>
      %495 = vector.shape_cast %490 : vector<16x128xf32> to vector<1x16x128xf32>
      %cst_125 = arith.constant dense<0xFF800000> : vector<1xf32>
      %496 = vector.multi_reduction <maximumf>, %495, %cst_125 [1, 2] : vector<1x16x128xf32> to vector<1xf32>
      %497 = vector.shape_cast %496 : vector<1xf32> to vector<1x1x1xf32>
      %498 = vector.extract %497[0, 0, 0] : f32 from vector<1x1x1xf32>
      %499 = vector.broadcast %494 : f32 to vector<16x128xf32>
      %500 = arith.subf %489, %499 : vector<16x128xf32>
      %501 = vector.broadcast %498 : f32 to vector<16x128xf32>
      %502 = arith.subf %490, %501 : vector<16x128xf32>
      %503 = math.exp %502 : vector<16x128xf32>
      %504 = math.exp %500 : vector<16x128xf32>
      %505 = vector.shape_cast %504 : vector<16x128xf32> to vector<1x16x128xf32>
      %cst_126 = arith.constant dense<0.000000e+00> : vector<1xf32>
      %506 = vector.multi_reduction <add>, %505, %cst_126 [1, 2] : vector<1x16x128xf32> to vector<1xf32>
      %507 = vector.shape_cast %506 : vector<1xf32> to vector<1x1x1xf32>
      %508 = vector.extract %507[0, 0, 0] : f32 from vector<1x1x1xf32>
      %509 = vector.shape_cast %503 : vector<16x128xf32> to vector<1x16x128xf32>
      %cst_127 = arith.constant dense<0.000000e+00> : vector<1xf32>
      %510 = vector.multi_reduction <add>, %509, %cst_127 [1, 2] : vector<1x16x128xf32> to vector<1xf32>
      %511 = vector.shape_cast %510 : vector<1xf32> to vector<1x1x1xf32>
      %512 = vector.extract %511[0, 0, 0] : f32 from vector<1x1x1xf32>
      %513 = arith.subf %502, %500 : vector<16x128xf32>
      %514 = arith.mulf %503, %513 : vector<16x128xf32>
      %515 = vector.shape_cast %514 : vector<16x128xf32> to vector<1x16x128xf32>
      %cst_128 = arith.constant dense<0.000000e+00> : vector<1xf32>
      %516 = vector.multi_reduction <add>, %515, %cst_128 [1, 2] : vector<1x16x128xf32> to vector<1xf32>
      %517 = vector.shape_cast %516 : vector<1xf32> to vector<1x1x1xf32>
      %518 = vector.extract %517[0, 0, 0] : f32 from vector<1x1x1xf32>
      %519 = arith.divf %518, %512 : f32
      %520 = math.log %508 : f32
      %521 = math.log %512 : f32
      %522 = arith.subf %520, %521 : f32
      %523 = arith.addf %519, %522 : f32
      %cst_129 = arith.constant 1.000000e+00 : f32
      %524 = arith.mulf %523, %cst_129 : f32
      %525 = arith.mulf %486, %141 : vector<16x128xf32>
      %526 = arith.mulf %488, %141 : vector<16x128xf32>
      %527 = vector.shape_cast %525 : vector<16x128xf32> to vector<1x16x128xf32>
      %cst_130 = arith.constant dense<0xFF800000> : vector<1xf32>
      %528 = vector.multi_reduction <maximumf>, %527, %cst_130 [1, 2] : vector<1x16x128xf32> to vector<1xf32>
      %529 = vector.shape_cast %528 : vector<1xf32> to vector<1x1x1xf32>
      %530 = vector.extract %529[0, 0, 0] : f32 from vector<1x1x1xf32>
      %531 = vector.shape_cast %526 : vector<16x128xf32> to vector<1x16x128xf32>
      %cst_131 = arith.constant dense<0xFF800000> : vector<1xf32>
      %532 = vector.multi_reduction <maximumf>, %531, %cst_131 [1, 2] : vector<1x16x128xf32> to vector<1xf32>
      %533 = vector.shape_cast %532 : vector<1xf32> to vector<1x1x1xf32>
      %534 = vector.extract %533[0, 0, 0] : f32 from vector<1x1x1xf32>
      %535 = vector.broadcast %530 : f32 to vector<16x128xf32>
      %536 = arith.subf %525, %535 : vector<16x128xf32>
      %537 = vector.broadcast %534 : f32 to vector<16x128xf32>
      %538 = arith.subf %526, %537 : vector<16x128xf32>
      %539 = math.exp %538 : vector<16x128xf32>
      %540 = math.exp %536 : vector<16x128xf32>
      %541 = vector.shape_cast %540 : vector<16x128xf32> to vector<1x16x128xf32>
      %cst_132 = arith.constant dense<0.000000e+00> : vector<1xf32>
      %542 = vector.multi_reduction <add>, %541, %cst_132 [1, 2] : vector<1x16x128xf32> to vector<1xf32>
      %543 = vector.shape_cast %542 : vector<1xf32> to vector<1x1x1xf32>
      %544 = vector.extract %543[0, 0, 0] : f32 from vector<1x1x1xf32>
      %545 = vector.shape_cast %539 : vector<16x128xf32> to vector<1x16x128xf32>
      %cst_133 = arith.constant dense<0.000000e+00> : vector<1xf32>
      %546 = vector.multi_reduction <add>, %545, %cst_133 [1, 2] : vector<1x16x128xf32> to vector<1xf32>
      %547 = vector.shape_cast %546 : vector<1xf32> to vector<1x1x1xf32>
      %548 = vector.extract %547[0, 0, 0] : f32 from vector<1x1x1xf32>
      %549 = arith.subf %538, %536 : vector<16x128xf32>
      %550 = arith.mulf %539, %549 : vector<16x128xf32>
      %551 = vector.shape_cast %550 : vector<16x128xf32> to vector<1x16x128xf32>
      %cst_134 = arith.constant dense<0.000000e+00> : vector<1xf32>
      %552 = vector.multi_reduction <add>, %551, %cst_134 [1, 2] : vector<1x16x128xf32> to vector<1xf32>
      %553 = vector.shape_cast %552 : vector<1xf32> to vector<1x1x1xf32>
      %554 = vector.extract %553[0, 0, 0] : f32 from vector<1x1x1xf32>
      %555 = arith.divf %554, %548 : f32
      %556 = math.log %544 : f32
      %557 = math.log %548 : f32
      %558 = arith.subf %556, %557 : f32
      %559 = arith.addf %555, %558 : f32
      %cst_135 = arith.constant 1.000000e+00 : f32
      %560 = arith.mulf %559, %cst_135 : f32
      scf.yield %524, %560 : f32, f32
    } else {
      %cst_117 = arith.constant 0.000000e+00 : f32
      %cst_118 = arith.constant 0.000000e+00 : f32
      scf.yield %cst_117, %cst_118 : f32, f32
    }
    %150 = arith.addf %115, %149#0 : f32
    %151 = arith.addf %116, %149#1 : f32
    %152 = arith.addf %117, %145 : f32
    %c5_i32 = arith.constant 5 : i32
    %153 = vector.broadcast %c5_i32 : i32 to vector<16x128xi32>
    %154 = arith.cmpi eq, %1, %153 : vector<16x128xi32>
    %155 = arith.extui %154 : vector<16x128xi1> to vector<16x128xi32>
    %156 = arith.sitofp %155 : vector<16x128xi32> to vector<16x128xf32>
    %c1_i32_37 = arith.constant 1 : i32
    %157 = tpu.dynamic_rotate %156 by %c1_i32_37 dim 0 : vector<16x128xf32>, i32 -> vector<16x128xf32>
    %158 = arith.select %5, %157, %12 : vector<16x128xi1>, vector<16x128xf32>
    %c15_i32_38 = arith.constant 15 : i32
    %159 = tpu.dynamic_rotate %156 by %c15_i32_38 dim 0 : vector<16x128xf32>, i32 -> vector<16x128xf32>
    %160 = arith.select %7, %159, %12 : vector<16x128xi1>, vector<16x128xf32>
    %c1_i32_39 = arith.constant 1 : i32
    %161 = tpu.dynamic_rotate %156 by %c1_i32_39 dim 1 : vector<16x128xf32>, i32 -> vector<16x128xf32>
    %162 = arith.select %9, %161, %12 : vector<16x128xi1>, vector<16x128xf32>
    %c127_i32_40 = arith.constant 127 : i32
    %163 = tpu.dynamic_rotate %156 by %c127_i32_40 dim 1 : vector<16x128xf32>, i32 -> vector<16x128xf32>
    %164 = arith.select %11, %163, %12 : vector<16x128xi1>, vector<16x128xf32>
    %165 = arith.maximumf %156, %158 : vector<16x128xf32>
    %166 = arith.maximumf %160, %162 : vector<16x128xf32>
    %167 = arith.maximumf %165, %166 : vector<16x128xf32>
    %168 = arith.maximumf %167, %164 : vector<16x128xf32>
    %169 = arith.minimumf %156, %158 : vector<16x128xf32>
    %170 = arith.minimumf %160, %162 : vector<16x128xf32>
    %171 = arith.minimumf %169, %170 : vector<16x128xf32>
    %172 = arith.minimumf %171, %164 : vector<16x128xf32>
    %173 = arith.subf %168, %172 : vector<16x128xf32>
    %cst_41 = arith.constant 1.000000e+00 : f32
    %174 = vector.broadcast %cst_41 : f32 to vector<16x128xf32>
    %175 = arith.subf %174, %173 : vector<16x128xf32>
    %176 = arith.mulf %156, %175 : vector<16x128xf32>
    %177 = vector.shape_cast %173 : vector<16x128xf32> to vector<1x16x128xf32>
    %cst_42 = arith.constant dense<0.000000e+00> : vector<1xf32>
    %178 = vector.multi_reduction <add>, %177, %cst_42 [1, 2] : vector<1x16x128xf32> to vector<1xf32>
    %179 = vector.shape_cast %178 : vector<1xf32> to vector<1x1x1xf32>
    %180 = vector.extract %179[0, 0, 0] : f32 from vector<1x1x1xf32>
    %cst_43 = arith.constant 0.000000e+00 : f32
    %181 = arith.cmpf ogt, %180, %cst_43 : f32
    %182 = arith.extui %181 : i1 to i32
    %c0_i32_44 = arith.constant 0 : i32
    %183 = arith.cmpi ne, %182, %c0_i32_44 : i32
    %184:2 = scf.if %183 -> (f32, f32) {
      %c0_117 = arith.constant 0 : index
      %c5 = arith.constant 5 : index
      %c0_118 = arith.constant 0 : index
      %c0_119 = arith.constant 0 : index
      %485 = vector.load %arg3[%c0_117, %c5, %c0_118, %c0_119] : memref<1x14x16x128xf32, #tpu.memory_space<vmem>>, vector<1x1x16x128xf32>
      %486 = vector.shape_cast %485 : vector<1x1x16x128xf32> to vector<16x128xf32>
      %c0_120 = arith.constant 0 : index
      %c5_121 = arith.constant 5 : index
      %c0_122 = arith.constant 0 : index
      %c0_123 = arith.constant 0 : index
      %487 = vector.load %arg4[%c0_120, %c5_121, %c0_122, %c0_123] : memref<1x14x16x128xf32, #tpu.memory_space<vmem>>, vector<1x1x16x128xf32>
      %488 = vector.shape_cast %487 : vector<1x1x16x128xf32> to vector<16x128xf32>
      %489 = arith.mulf %486, %173 : vector<16x128xf32>
      %490 = arith.mulf %488, %173 : vector<16x128xf32>
      %491 = vector.shape_cast %489 : vector<16x128xf32> to vector<1x16x128xf32>
      %cst_124 = arith.constant dense<0xFF800000> : vector<1xf32>
      %492 = vector.multi_reduction <maximumf>, %491, %cst_124 [1, 2] : vector<1x16x128xf32> to vector<1xf32>
      %493 = vector.shape_cast %492 : vector<1xf32> to vector<1x1x1xf32>
      %494 = vector.extract %493[0, 0, 0] : f32 from vector<1x1x1xf32>
      %495 = vector.shape_cast %490 : vector<16x128xf32> to vector<1x16x128xf32>
      %cst_125 = arith.constant dense<0xFF800000> : vector<1xf32>
      %496 = vector.multi_reduction <maximumf>, %495, %cst_125 [1, 2] : vector<1x16x128xf32> to vector<1xf32>
      %497 = vector.shape_cast %496 : vector<1xf32> to vector<1x1x1xf32>
      %498 = vector.extract %497[0, 0, 0] : f32 from vector<1x1x1xf32>
      %499 = vector.broadcast %494 : f32 to vector<16x128xf32>
      %500 = arith.subf %489, %499 : vector<16x128xf32>
      %501 = vector.broadcast %498 : f32 to vector<16x128xf32>
      %502 = arith.subf %490, %501 : vector<16x128xf32>
      %503 = math.exp %502 : vector<16x128xf32>
      %504 = math.exp %500 : vector<16x128xf32>
      %505 = vector.shape_cast %504 : vector<16x128xf32> to vector<1x16x128xf32>
      %cst_126 = arith.constant dense<0.000000e+00> : vector<1xf32>
      %506 = vector.multi_reduction <add>, %505, %cst_126 [1, 2] : vector<1x16x128xf32> to vector<1xf32>
      %507 = vector.shape_cast %506 : vector<1xf32> to vector<1x1x1xf32>
      %508 = vector.extract %507[0, 0, 0] : f32 from vector<1x1x1xf32>
      %509 = vector.shape_cast %503 : vector<16x128xf32> to vector<1x16x128xf32>
      %cst_127 = arith.constant dense<0.000000e+00> : vector<1xf32>
      %510 = vector.multi_reduction <add>, %509, %cst_127 [1, 2] : vector<1x16x128xf32> to vector<1xf32>
      %511 = vector.shape_cast %510 : vector<1xf32> to vector<1x1x1xf32>
      %512 = vector.extract %511[0, 0, 0] : f32 from vector<1x1x1xf32>
      %513 = arith.subf %502, %500 : vector<16x128xf32>
      %514 = arith.mulf %503, %513 : vector<16x128xf32>
      %515 = vector.shape_cast %514 : vector<16x128xf32> to vector<1x16x128xf32>
      %cst_128 = arith.constant dense<0.000000e+00> : vector<1xf32>
      %516 = vector.multi_reduction <add>, %515, %cst_128 [1, 2] : vector<1x16x128xf32> to vector<1xf32>
      %517 = vector.shape_cast %516 : vector<1xf32> to vector<1x1x1xf32>
      %518 = vector.extract %517[0, 0, 0] : f32 from vector<1x1x1xf32>
      %519 = arith.divf %518, %512 : f32
      %520 = math.log %508 : f32
      %521 = math.log %512 : f32
      %522 = arith.subf %520, %521 : f32
      %523 = arith.addf %519, %522 : f32
      %cst_129 = arith.constant 1.000000e+00 : f32
      %524 = arith.mulf %523, %cst_129 : f32
      %525 = arith.mulf %486, %176 : vector<16x128xf32>
      %526 = arith.mulf %488, %176 : vector<16x128xf32>
      %527 = vector.shape_cast %525 : vector<16x128xf32> to vector<1x16x128xf32>
      %cst_130 = arith.constant dense<0xFF800000> : vector<1xf32>
      %528 = vector.multi_reduction <maximumf>, %527, %cst_130 [1, 2] : vector<1x16x128xf32> to vector<1xf32>
      %529 = vector.shape_cast %528 : vector<1xf32> to vector<1x1x1xf32>
      %530 = vector.extract %529[0, 0, 0] : f32 from vector<1x1x1xf32>
      %531 = vector.shape_cast %526 : vector<16x128xf32> to vector<1x16x128xf32>
      %cst_131 = arith.constant dense<0xFF800000> : vector<1xf32>
      %532 = vector.multi_reduction <maximumf>, %531, %cst_131 [1, 2] : vector<1x16x128xf32> to vector<1xf32>
      %533 = vector.shape_cast %532 : vector<1xf32> to vector<1x1x1xf32>
      %534 = vector.extract %533[0, 0, 0] : f32 from vector<1x1x1xf32>
      %535 = vector.broadcast %530 : f32 to vector<16x128xf32>
      %536 = arith.subf %525, %535 : vector<16x128xf32>
      %537 = vector.broadcast %534 : f32 to vector<16x128xf32>
      %538 = arith.subf %526, %537 : vector<16x128xf32>
      %539 = math.exp %538 : vector<16x128xf32>
      %540 = math.exp %536 : vector<16x128xf32>
      %541 = vector.shape_cast %540 : vector<16x128xf32> to vector<1x16x128xf32>
      %cst_132 = arith.constant dense<0.000000e+00> : vector<1xf32>
      %542 = vector.multi_reduction <add>, %541, %cst_132 [1, 2] : vector<1x16x128xf32> to vector<1xf32>
      %543 = vector.shape_cast %542 : vector<1xf32> to vector<1x1x1xf32>
      %544 = vector.extract %543[0, 0, 0] : f32 from vector<1x1x1xf32>
      %545 = vector.shape_cast %539 : vector<16x128xf32> to vector<1x16x128xf32>
      %cst_133 = arith.constant dense<0.000000e+00> : vector<1xf32>
      %546 = vector.multi_reduction <add>, %545, %cst_133 [1, 2] : vector<1x16x128xf32> to vector<1xf32>
      %547 = vector.shape_cast %546 : vector<1xf32> to vector<1x1x1xf32>
      %548 = vector.extract %547[0, 0, 0] : f32 from vector<1x1x1xf32>
      %549 = arith.subf %538, %536 : vector<16x128xf32>
      %550 = arith.mulf %539, %549 : vector<16x128xf32>
      %551 = vector.shape_cast %550 : vector<16x128xf32> to vector<1x16x128xf32>
      %cst_134 = arith.constant dense<0.000000e+00> : vector<1xf32>
      %552 = vector.multi_reduction <add>, %551, %cst_134 [1, 2] : vector<1x16x128xf32> to vector<1xf32>
      %553 = vector.shape_cast %552 : vector<1xf32> to vector<1x1x1xf32>
      %554 = vector.extract %553[0, 0, 0] : f32 from vector<1x1x1xf32>
      %555 = arith.divf %554, %548 : f32
      %556 = math.log %544 : f32
      %557 = math.log %548 : f32
      %558 = arith.subf %556, %557 : f32
      %559 = arith.addf %555, %558 : f32
      %cst_135 = arith.constant 1.000000e+00 : f32
      %560 = arith.mulf %559, %cst_135 : f32
      scf.yield %524, %560 : f32, f32
    } else {
      %cst_117 = arith.constant 0.000000e+00 : f32
      %cst_118 = arith.constant 0.000000e+00 : f32
      scf.yield %cst_117, %cst_118 : f32, f32
    }
    %185 = arith.addf %150, %184#0 : f32
    %186 = arith.addf %151, %184#1 : f32
    %187 = arith.addf %152, %180 : f32
    %c6_i32 = arith.constant 6 : i32
    %188 = vector.broadcast %c6_i32 : i32 to vector<16x128xi32>
    %189 = arith.cmpi eq, %1, %188 : vector<16x128xi32>
    %190 = arith.extui %189 : vector<16x128xi1> to vector<16x128xi32>
    %191 = arith.sitofp %190 : vector<16x128xi32> to vector<16x128xf32>
    %c1_i32_45 = arith.constant 1 : i32
    %192 = tpu.dynamic_rotate %191 by %c1_i32_45 dim 0 : vector<16x128xf32>, i32 -> vector<16x128xf32>
    %193 = arith.select %5, %192, %12 : vector<16x128xi1>, vector<16x128xf32>
    %c15_i32_46 = arith.constant 15 : i32
    %194 = tpu.dynamic_rotate %191 by %c15_i32_46 dim 0 : vector<16x128xf32>, i32 -> vector<16x128xf32>
    %195 = arith.select %7, %194, %12 : vector<16x128xi1>, vector<16x128xf32>
    %c1_i32_47 = arith.constant 1 : i32
    %196 = tpu.dynamic_rotate %191 by %c1_i32_47 dim 1 : vector<16x128xf32>, i32 -> vector<16x128xf32>
    %197 = arith.select %9, %196, %12 : vector<16x128xi1>, vector<16x128xf32>
    %c127_i32_48 = arith.constant 127 : i32
    %198 = tpu.dynamic_rotate %191 by %c127_i32_48 dim 1 : vector<16x128xf32>, i32 -> vector<16x128xf32>
    %199 = arith.select %11, %198, %12 : vector<16x128xi1>, vector<16x128xf32>
    %200 = arith.maximumf %191, %193 : vector<16x128xf32>
    %201 = arith.maximumf %195, %197 : vector<16x128xf32>
    %202 = arith.maximumf %200, %201 : vector<16x128xf32>
    %203 = arith.maximumf %202, %199 : vector<16x128xf32>
    %204 = arith.minimumf %191, %193 : vector<16x128xf32>
    %205 = arith.minimumf %195, %197 : vector<16x128xf32>
    %206 = arith.minimumf %204, %205 : vector<16x128xf32>
    %207 = arith.minimumf %206, %199 : vector<16x128xf32>
    %208 = arith.subf %203, %207 : vector<16x128xf32>
    %cst_49 = arith.constant 1.000000e+00 : f32
    %209 = vector.broadcast %cst_49 : f32 to vector<16x128xf32>
    %210 = arith.subf %209, %208 : vector<16x128xf32>
    %211 = arith.mulf %191, %210 : vector<16x128xf32>
    %212 = vector.shape_cast %208 : vector<16x128xf32> to vector<1x16x128xf32>
    %cst_50 = arith.constant dense<0.000000e+00> : vector<1xf32>
    %213 = vector.multi_reduction <add>, %212, %cst_50 [1, 2] : vector<1x16x128xf32> to vector<1xf32>
    %214 = vector.shape_cast %213 : vector<1xf32> to vector<1x1x1xf32>
    %215 = vector.extract %214[0, 0, 0] : f32 from vector<1x1x1xf32>
    %cst_51 = arith.constant 0.000000e+00 : f32
    %216 = arith.cmpf ogt, %215, %cst_51 : f32
    %217 = arith.extui %216 : i1 to i32
    %c0_i32_52 = arith.constant 0 : i32
    %218 = arith.cmpi ne, %217, %c0_i32_52 : i32
    %219:2 = scf.if %218 -> (f32, f32) {
      %c0_117 = arith.constant 0 : index
      %c6 = arith.constant 6 : index
      %c0_118 = arith.constant 0 : index
      %c0_119 = arith.constant 0 : index
      %485 = vector.load %arg3[%c0_117, %c6, %c0_118, %c0_119] : memref<1x14x16x128xf32, #tpu.memory_space<vmem>>, vector<1x1x16x128xf32>
      %486 = vector.shape_cast %485 : vector<1x1x16x128xf32> to vector<16x128xf32>
      %c0_120 = arith.constant 0 : index
      %c6_121 = arith.constant 6 : index
      %c0_122 = arith.constant 0 : index
      %c0_123 = arith.constant 0 : index
      %487 = vector.load %arg4[%c0_120, %c6_121, %c0_122, %c0_123] : memref<1x14x16x128xf32, #tpu.memory_space<vmem>>, vector<1x1x16x128xf32>
      %488 = vector.shape_cast %487 : vector<1x1x16x128xf32> to vector<16x128xf32>
      %489 = arith.mulf %486, %208 : vector<16x128xf32>
      %490 = arith.mulf %488, %208 : vector<16x128xf32>
      %491 = vector.shape_cast %489 : vector<16x128xf32> to vector<1x16x128xf32>
      %cst_124 = arith.constant dense<0xFF800000> : vector<1xf32>
      %492 = vector.multi_reduction <maximumf>, %491, %cst_124 [1, 2] : vector<1x16x128xf32> to vector<1xf32>
      %493 = vector.shape_cast %492 : vector<1xf32> to vector<1x1x1xf32>
      %494 = vector.extract %493[0, 0, 0] : f32 from vector<1x1x1xf32>
      %495 = vector.shape_cast %490 : vector<16x128xf32> to vector<1x16x128xf32>
      %cst_125 = arith.constant dense<0xFF800000> : vector<1xf32>
      %496 = vector.multi_reduction <maximumf>, %495, %cst_125 [1, 2] : vector<1x16x128xf32> to vector<1xf32>
      %497 = vector.shape_cast %496 : vector<1xf32> to vector<1x1x1xf32>
      %498 = vector.extract %497[0, 0, 0] : f32 from vector<1x1x1xf32>
      %499 = vector.broadcast %494 : f32 to vector<16x128xf32>
      %500 = arith.subf %489, %499 : vector<16x128xf32>
      %501 = vector.broadcast %498 : f32 to vector<16x128xf32>
      %502 = arith.subf %490, %501 : vector<16x128xf32>
      %503 = math.exp %502 : vector<16x128xf32>
      %504 = math.exp %500 : vector<16x128xf32>
      %505 = vector.shape_cast %504 : vector<16x128xf32> to vector<1x16x128xf32>
      %cst_126 = arith.constant dense<0.000000e+00> : vector<1xf32>
      %506 = vector.multi_reduction <add>, %505, %cst_126 [1, 2] : vector<1x16x128xf32> to vector<1xf32>
      %507 = vector.shape_cast %506 : vector<1xf32> to vector<1x1x1xf32>
      %508 = vector.extract %507[0, 0, 0] : f32 from vector<1x1x1xf32>
      %509 = vector.shape_cast %503 : vector<16x128xf32> to vector<1x16x128xf32>
      %cst_127 = arith.constant dense<0.000000e+00> : vector<1xf32>
      %510 = vector.multi_reduction <add>, %509, %cst_127 [1, 2] : vector<1x16x128xf32> to vector<1xf32>
      %511 = vector.shape_cast %510 : vector<1xf32> to vector<1x1x1xf32>
      %512 = vector.extract %511[0, 0, 0] : f32 from vector<1x1x1xf32>
      %513 = arith.subf %502, %500 : vector<16x128xf32>
      %514 = arith.mulf %503, %513 : vector<16x128xf32>
      %515 = vector.shape_cast %514 : vector<16x128xf32> to vector<1x16x128xf32>
      %cst_128 = arith.constant dense<0.000000e+00> : vector<1xf32>
      %516 = vector.multi_reduction <add>, %515, %cst_128 [1, 2] : vector<1x16x128xf32> to vector<1xf32>
      %517 = vector.shape_cast %516 : vector<1xf32> to vector<1x1x1xf32>
      %518 = vector.extract %517[0, 0, 0] : f32 from vector<1x1x1xf32>
      %519 = arith.divf %518, %512 : f32
      %520 = math.log %508 : f32
      %521 = math.log %512 : f32
      %522 = arith.subf %520, %521 : f32
      %523 = arith.addf %519, %522 : f32
      %cst_129 = arith.constant 1.000000e+00 : f32
      %524 = arith.mulf %523, %cst_129 : f32
      %525 = arith.mulf %486, %211 : vector<16x128xf32>
      %526 = arith.mulf %488, %211 : vector<16x128xf32>
      %527 = vector.shape_cast %525 : vector<16x128xf32> to vector<1x16x128xf32>
      %cst_130 = arith.constant dense<0xFF800000> : vector<1xf32>
      %528 = vector.multi_reduction <maximumf>, %527, %cst_130 [1, 2] : vector<1x16x128xf32> to vector<1xf32>
      %529 = vector.shape_cast %528 : vector<1xf32> to vector<1x1x1xf32>
      %530 = vector.extract %529[0, 0, 0] : f32 from vector<1x1x1xf32>
      %531 = vector.shape_cast %526 : vector<16x128xf32> to vector<1x16x128xf32>
      %cst_131 = arith.constant dense<0xFF800000> : vector<1xf32>
      %532 = vector.multi_reduction <maximumf>, %531, %cst_131 [1, 2] : vector<1x16x128xf32> to vector<1xf32>
      %533 = vector.shape_cast %532 : vector<1xf32> to vector<1x1x1xf32>
      %534 = vector.extract %533[0, 0, 0] : f32 from vector<1x1x1xf32>
      %535 = vector.broadcast %530 : f32 to vector<16x128xf32>
      %536 = arith.subf %525, %535 : vector<16x128xf32>
      %537 = vector.broadcast %534 : f32 to vector<16x128xf32>
      %538 = arith.subf %526, %537 : vector<16x128xf32>
      %539 = math.exp %538 : vector<16x128xf32>
      %540 = math.exp %536 : vector<16x128xf32>
      %541 = vector.shape_cast %540 : vector<16x128xf32> to vector<1x16x128xf32>
      %cst_132 = arith.constant dense<0.000000e+00> : vector<1xf32>
      %542 = vector.multi_reduction <add>, %541, %cst_132 [1, 2] : vector<1x16x128xf32> to vector<1xf32>
      %543 = vector.shape_cast %542 : vector<1xf32> to vector<1x1x1xf32>
      %544 = vector.extract %543[0, 0, 0] : f32 from vector<1x1x1xf32>
      %545 = vector.shape_cast %539 : vector<16x128xf32> to vector<1x16x128xf32>
      %cst_133 = arith.constant dense<0.000000e+00> : vector<1xf32>
      %546 = vector.multi_reduction <add>, %545, %cst_133 [1, 2] : vector<1x16x128xf32> to vector<1xf32>
      %547 = vector.shape_cast %546 : vector<1xf32> to vector<1x1x1xf32>
      %548 = vector.extract %547[0, 0, 0] : f32 from vector<1x1x1xf32>
      %549 = arith.subf %538, %536 : vector<16x128xf32>
      %550 = arith.mulf %539, %549 : vector<16x128xf32>
      %551 = vector.shape_cast %550 : vector<16x128xf32> to vector<1x16x128xf32>
      %cst_134 = arith.constant dense<0.000000e+00> : vector<1xf32>
      %552 = vector.multi_reduction <add>, %551, %cst_134 [1, 2] : vector<1x16x128xf32> to vector<1xf32>
      %553 = vector.shape_cast %552 : vector<1xf32> to vector<1x1x1xf32>
      %554 = vector.extract %553[0, 0, 0] : f32 from vector<1x1x1xf32>
      %555 = arith.divf %554, %548 : f32
      %556 = math.log %544 : f32
      %557 = math.log %548 : f32
      %558 = arith.subf %556, %557 : f32
      %559 = arith.addf %555, %558 : f32
      %cst_135 = arith.constant 1.000000e+00 : f32
      %560 = arith.mulf %559, %cst_135 : f32
      scf.yield %524, %560 : f32, f32
    } else {
      %cst_117 = arith.constant 0.000000e+00 : f32
      %cst_118 = arith.constant 0.000000e+00 : f32
      scf.yield %cst_117, %cst_118 : f32, f32
    }
    %220 = arith.addf %185, %219#0 : f32
    %221 = arith.addf %186, %219#1 : f32
    %222 = arith.addf %187, %215 : f32
    %c7_i32 = arith.constant 7 : i32
    %223 = vector.broadcast %c7_i32 : i32 to vector<16x128xi32>
    %224 = arith.cmpi eq, %1, %223 : vector<16x128xi32>
    %225 = arith.extui %224 : vector<16x128xi1> to vector<16x128xi32>
    %226 = arith.sitofp %225 : vector<16x128xi32> to vector<16x128xf32>
    %c1_i32_53 = arith.constant 1 : i32
    %227 = tpu.dynamic_rotate %226 by %c1_i32_53 dim 0 : vector<16x128xf32>, i32 -> vector<16x128xf32>
    %228 = arith.select %5, %227, %12 : vector<16x128xi1>, vector<16x128xf32>
    %c15_i32_54 = arith.constant 15 : i32
    %229 = tpu.dynamic_rotate %226 by %c15_i32_54 dim 0 : vector<16x128xf32>, i32 -> vector<16x128xf32>
    %230 = arith.select %7, %229, %12 : vector<16x128xi1>, vector<16x128xf32>
    %c1_i32_55 = arith.constant 1 : i32
    %231 = tpu.dynamic_rotate %226 by %c1_i32_55 dim 1 : vector<16x128xf32>, i32 -> vector<16x128xf32>
    %232 = arith.select %9, %231, %12 : vector<16x128xi1>, vector<16x128xf32>
    %c127_i32_56 = arith.constant 127 : i32
    %233 = tpu.dynamic_rotate %226 by %c127_i32_56 dim 1 : vector<16x128xf32>, i32 -> vector<16x128xf32>
    %234 = arith.select %11, %233, %12 : vector<16x128xi1>, vector<16x128xf32>
    %235 = arith.maximumf %226, %228 : vector<16x128xf32>
    %236 = arith.maximumf %230, %232 : vector<16x128xf32>
    %237 = arith.maximumf %235, %236 : vector<16x128xf32>
    %238 = arith.maximumf %237, %234 : vector<16x128xf32>
    %239 = arith.minimumf %226, %228 : vector<16x128xf32>
    %240 = arith.minimumf %230, %232 : vector<16x128xf32>
    %241 = arith.minimumf %239, %240 : vector<16x128xf32>
    %242 = arith.minimumf %241, %234 : vector<16x128xf32>
    %243 = arith.subf %238, %242 : vector<16x128xf32>
    %cst_57 = arith.constant 1.000000e+00 : f32
    %244 = vector.broadcast %cst_57 : f32 to vector<16x128xf32>
    %245 = arith.subf %244, %243 : vector<16x128xf32>
    %246 = arith.mulf %226, %245 : vector<16x128xf32>
    %247 = vector.shape_cast %243 : vector<16x128xf32> to vector<1x16x128xf32>
    %cst_58 = arith.constant dense<0.000000e+00> : vector<1xf32>
    %248 = vector.multi_reduction <add>, %247, %cst_58 [1, 2] : vector<1x16x128xf32> to vector<1xf32>
    %249 = vector.shape_cast %248 : vector<1xf32> to vector<1x1x1xf32>
    %250 = vector.extract %249[0, 0, 0] : f32 from vector<1x1x1xf32>
    %cst_59 = arith.constant 0.000000e+00 : f32
    %251 = arith.cmpf ogt, %250, %cst_59 : f32
    %252 = arith.extui %251 : i1 to i32
    %c0_i32_60 = arith.constant 0 : i32
    %253 = arith.cmpi ne, %252, %c0_i32_60 : i32
    %254:2 = scf.if %253 -> (f32, f32) {
      %c0_117 = arith.constant 0 : index
      %c7 = arith.constant 7 : index
      %c0_118 = arith.constant 0 : index
      %c0_119 = arith.constant 0 : index
      %485 = vector.load %arg3[%c0_117, %c7, %c0_118, %c0_119] : memref<1x14x16x128xf32, #tpu.memory_space<vmem>>, vector<1x1x16x128xf32>
      %486 = vector.shape_cast %485 : vector<1x1x16x128xf32> to vector<16x128xf32>
      %c0_120 = arith.constant 0 : index
      %c7_121 = arith.constant 7 : index
      %c0_122 = arith.constant 0 : index
      %c0_123 = arith.constant 0 : index
      %487 = vector.load %arg4[%c0_120, %c7_121, %c0_122, %c0_123] : memref<1x14x16x128xf32, #tpu.memory_space<vmem>>, vector<1x1x16x128xf32>
      %488 = vector.shape_cast %487 : vector<1x1x16x128xf32> to vector<16x128xf32>
      %489 = arith.mulf %486, %243 : vector<16x128xf32>
      %490 = arith.mulf %488, %243 : vector<16x128xf32>
      %491 = vector.shape_cast %489 : vector<16x128xf32> to vector<1x16x128xf32>
      %cst_124 = arith.constant dense<0xFF800000> : vector<1xf32>
      %492 = vector.multi_reduction <maximumf>, %491, %cst_124 [1, 2] : vector<1x16x128xf32> to vector<1xf32>
      %493 = vector.shape_cast %492 : vector<1xf32> to vector<1x1x1xf32>
      %494 = vector.extract %493[0, 0, 0] : f32 from vector<1x1x1xf32>
      %495 = vector.shape_cast %490 : vector<16x128xf32> to vector<1x16x128xf32>
      %cst_125 = arith.constant dense<0xFF800000> : vector<1xf32>
      %496 = vector.multi_reduction <maximumf>, %495, %cst_125 [1, 2] : vector<1x16x128xf32> to vector<1xf32>
      %497 = vector.shape_cast %496 : vector<1xf32> to vector<1x1x1xf32>
      %498 = vector.extract %497[0, 0, 0] : f32 from vector<1x1x1xf32>
      %499 = vector.broadcast %494 : f32 to vector<16x128xf32>
      %500 = arith.subf %489, %499 : vector<16x128xf32>
      %501 = vector.broadcast %498 : f32 to vector<16x128xf32>
      %502 = arith.subf %490, %501 : vector<16x128xf32>
      %503 = math.exp %502 : vector<16x128xf32>
      %504 = math.exp %500 : vector<16x128xf32>
      %505 = vector.shape_cast %504 : vector<16x128xf32> to vector<1x16x128xf32>
      %cst_126 = arith.constant dense<0.000000e+00> : vector<1xf32>
      %506 = vector.multi_reduction <add>, %505, %cst_126 [1, 2] : vector<1x16x128xf32> to vector<1xf32>
      %507 = vector.shape_cast %506 : vector<1xf32> to vector<1x1x1xf32>
      %508 = vector.extract %507[0, 0, 0] : f32 from vector<1x1x1xf32>
      %509 = vector.shape_cast %503 : vector<16x128xf32> to vector<1x16x128xf32>
      %cst_127 = arith.constant dense<0.000000e+00> : vector<1xf32>
      %510 = vector.multi_reduction <add>, %509, %cst_127 [1, 2] : vector<1x16x128xf32> to vector<1xf32>
      %511 = vector.shape_cast %510 : vector<1xf32> to vector<1x1x1xf32>
      %512 = vector.extract %511[0, 0, 0] : f32 from vector<1x1x1xf32>
      %513 = arith.subf %502, %500 : vector<16x128xf32>
      %514 = arith.mulf %503, %513 : vector<16x128xf32>
      %515 = vector.shape_cast %514 : vector<16x128xf32> to vector<1x16x128xf32>
      %cst_128 = arith.constant dense<0.000000e+00> : vector<1xf32>
      %516 = vector.multi_reduction <add>, %515, %cst_128 [1, 2] : vector<1x16x128xf32> to vector<1xf32>
      %517 = vector.shape_cast %516 : vector<1xf32> to vector<1x1x1xf32>
      %518 = vector.extract %517[0, 0, 0] : f32 from vector<1x1x1xf32>
      %519 = arith.divf %518, %512 : f32
      %520 = math.log %508 : f32
      %521 = math.log %512 : f32
      %522 = arith.subf %520, %521 : f32
      %523 = arith.addf %519, %522 : f32
      %cst_129 = arith.constant 1.000000e+00 : f32
      %524 = arith.mulf %523, %cst_129 : f32
      %525 = arith.mulf %486, %246 : vector<16x128xf32>
      %526 = arith.mulf %488, %246 : vector<16x128xf32>
      %527 = vector.shape_cast %525 : vector<16x128xf32> to vector<1x16x128xf32>
      %cst_130 = arith.constant dense<0xFF800000> : vector<1xf32>
      %528 = vector.multi_reduction <maximumf>, %527, %cst_130 [1, 2] : vector<1x16x128xf32> to vector<1xf32>
      %529 = vector.shape_cast %528 : vector<1xf32> to vector<1x1x1xf32>
      %530 = vector.extract %529[0, 0, 0] : f32 from vector<1x1x1xf32>
      %531 = vector.shape_cast %526 : vector<16x128xf32> to vector<1x16x128xf32>
      %cst_131 = arith.constant dense<0xFF800000> : vector<1xf32>
      %532 = vector.multi_reduction <maximumf>, %531, %cst_131 [1, 2] : vector<1x16x128xf32> to vector<1xf32>
      %533 = vector.shape_cast %532 : vector<1xf32> to vector<1x1x1xf32>
      %534 = vector.extract %533[0, 0, 0] : f32 from vector<1x1x1xf32>
      %535 = vector.broadcast %530 : f32 to vector<16x128xf32>
      %536 = arith.subf %525, %535 : vector<16x128xf32>
      %537 = vector.broadcast %534 : f32 to vector<16x128xf32>
      %538 = arith.subf %526, %537 : vector<16x128xf32>
      %539 = math.exp %538 : vector<16x128xf32>
      %540 = math.exp %536 : vector<16x128xf32>
      %541 = vector.shape_cast %540 : vector<16x128xf32> to vector<1x16x128xf32>
      %cst_132 = arith.constant dense<0.000000e+00> : vector<1xf32>
      %542 = vector.multi_reduction <add>, %541, %cst_132 [1, 2] : vector<1x16x128xf32> to vector<1xf32>
      %543 = vector.shape_cast %542 : vector<1xf32> to vector<1x1x1xf32>
      %544 = vector.extract %543[0, 0, 0] : f32 from vector<1x1x1xf32>
      %545 = vector.shape_cast %539 : vector<16x128xf32> to vector<1x16x128xf32>
      %cst_133 = arith.constant dense<0.000000e+00> : vector<1xf32>
      %546 = vector.multi_reduction <add>, %545, %cst_133 [1, 2] : vector<1x16x128xf32> to vector<1xf32>
      %547 = vector.shape_cast %546 : vector<1xf32> to vector<1x1x1xf32>
      %548 = vector.extract %547[0, 0, 0] : f32 from vector<1x1x1xf32>
      %549 = arith.subf %538, %536 : vector<16x128xf32>
      %550 = arith.mulf %539, %549 : vector<16x128xf32>
      %551 = vector.shape_cast %550 : vector<16x128xf32> to vector<1x16x128xf32>
      %cst_134 = arith.constant dense<0.000000e+00> : vector<1xf32>
      %552 = vector.multi_reduction <add>, %551, %cst_134 [1, 2] : vector<1x16x128xf32> to vector<1xf32>
      %553 = vector.shape_cast %552 : vector<1xf32> to vector<1x1x1xf32>
      %554 = vector.extract %553[0, 0, 0] : f32 from vector<1x1x1xf32>
      %555 = arith.divf %554, %548 : f32
      %556 = math.log %544 : f32
      %557 = math.log %548 : f32
      %558 = arith.subf %556, %557 : f32
      %559 = arith.addf %555, %558 : f32
      %cst_135 = arith.constant 1.000000e+00 : f32
      %560 = arith.mulf %559, %cst_135 : f32
      scf.yield %524, %560 : f32, f32
    } else {
      %cst_117 = arith.constant 0.000000e+00 : f32
      %cst_118 = arith.constant 0.000000e+00 : f32
      scf.yield %cst_117, %cst_118 : f32, f32
    }
    %255 = arith.addf %220, %254#0 : f32
    %256 = arith.addf %221, %254#1 : f32
    %257 = arith.addf %222, %250 : f32
    %c8_i32 = arith.constant 8 : i32
    %258 = vector.broadcast %c8_i32 : i32 to vector<16x128xi32>
    %259 = arith.cmpi eq, %1, %258 : vector<16x128xi32>
    %260 = arith.extui %259 : vector<16x128xi1> to vector<16x128xi32>
    %261 = arith.sitofp %260 : vector<16x128xi32> to vector<16x128xf32>
    %c1_i32_61 = arith.constant 1 : i32
    %262 = tpu.dynamic_rotate %261 by %c1_i32_61 dim 0 : vector<16x128xf32>, i32 -> vector<16x128xf32>
    %263 = arith.select %5, %262, %12 : vector<16x128xi1>, vector<16x128xf32>
    %c15_i32_62 = arith.constant 15 : i32
    %264 = tpu.dynamic_rotate %261 by %c15_i32_62 dim 0 : vector<16x128xf32>, i32 -> vector<16x128xf32>
    %265 = arith.select %7, %264, %12 : vector<16x128xi1>, vector<16x128xf32>
    %c1_i32_63 = arith.constant 1 : i32
    %266 = tpu.dynamic_rotate %261 by %c1_i32_63 dim 1 : vector<16x128xf32>, i32 -> vector<16x128xf32>
    %267 = arith.select %9, %266, %12 : vector<16x128xi1>, vector<16x128xf32>
    %c127_i32_64 = arith.constant 127 : i32
    %268 = tpu.dynamic_rotate %261 by %c127_i32_64 dim 1 : vector<16x128xf32>, i32 -> vector<16x128xf32>
    %269 = arith.select %11, %268, %12 : vector<16x128xi1>, vector<16x128xf32>
    %270 = arith.maximumf %261, %263 : vector<16x128xf32>
    %271 = arith.maximumf %265, %267 : vector<16x128xf32>
    %272 = arith.maximumf %270, %271 : vector<16x128xf32>
    %273 = arith.maximumf %272, %269 : vector<16x128xf32>
    %274 = arith.minimumf %261, %263 : vector<16x128xf32>
    %275 = arith.minimumf %265, %267 : vector<16x128xf32>
    %276 = arith.minimumf %274, %275 : vector<16x128xf32>
    %277 = arith.minimumf %276, %269 : vector<16x128xf32>
    %278 = arith.subf %273, %277 : vector<16x128xf32>
    %cst_65 = arith.constant 1.000000e+00 : f32
    %279 = vector.broadcast %cst_65 : f32 to vector<16x128xf32>
    %280 = arith.subf %279, %278 : vector<16x128xf32>
    %281 = arith.mulf %261, %280 : vector<16x128xf32>
    %282 = vector.shape_cast %278 : vector<16x128xf32> to vector<1x16x128xf32>
    %cst_66 = arith.constant dense<0.000000e+00> : vector<1xf32>
    %283 = vector.multi_reduction <add>, %282, %cst_66 [1, 2] : vector<1x16x128xf32> to vector<1xf32>
    %284 = vector.shape_cast %283 : vector<1xf32> to vector<1x1x1xf32>
    %285 = vector.extract %284[0, 0, 0] : f32 from vector<1x1x1xf32>
    %cst_67 = arith.constant 0.000000e+00 : f32
    %286 = arith.cmpf ogt, %285, %cst_67 : f32
    %287 = arith.extui %286 : i1 to i32
    %c0_i32_68 = arith.constant 0 : i32
    %288 = arith.cmpi ne, %287, %c0_i32_68 : i32
    %289:2 = scf.if %288 -> (f32, f32) {
      %c0_117 = arith.constant 0 : index
      %c8 = arith.constant 8 : index
      %c0_118 = arith.constant 0 : index
      %c0_119 = arith.constant 0 : index
      %485 = vector.load %arg3[%c0_117, %c8, %c0_118, %c0_119] : memref<1x14x16x128xf32, #tpu.memory_space<vmem>>, vector<1x1x16x128xf32>
      %486 = vector.shape_cast %485 : vector<1x1x16x128xf32> to vector<16x128xf32>
      %c0_120 = arith.constant 0 : index
      %c8_121 = arith.constant 8 : index
      %c0_122 = arith.constant 0 : index
      %c0_123 = arith.constant 0 : index
      %487 = vector.load %arg4[%c0_120, %c8_121, %c0_122, %c0_123] : memref<1x14x16x128xf32, #tpu.memory_space<vmem>>, vector<1x1x16x128xf32>
      %488 = vector.shape_cast %487 : vector<1x1x16x128xf32> to vector<16x128xf32>
      %489 = arith.mulf %486, %278 : vector<16x128xf32>
      %490 = arith.mulf %488, %278 : vector<16x128xf32>
      %491 = vector.shape_cast %489 : vector<16x128xf32> to vector<1x16x128xf32>
      %cst_124 = arith.constant dense<0xFF800000> : vector<1xf32>
      %492 = vector.multi_reduction <maximumf>, %491, %cst_124 [1, 2] : vector<1x16x128xf32> to vector<1xf32>
      %493 = vector.shape_cast %492 : vector<1xf32> to vector<1x1x1xf32>
      %494 = vector.extract %493[0, 0, 0] : f32 from vector<1x1x1xf32>
      %495 = vector.shape_cast %490 : vector<16x128xf32> to vector<1x16x128xf32>
      %cst_125 = arith.constant dense<0xFF800000> : vector<1xf32>
      %496 = vector.multi_reduction <maximumf>, %495, %cst_125 [1, 2] : vector<1x16x128xf32> to vector<1xf32>
      %497 = vector.shape_cast %496 : vector<1xf32> to vector<1x1x1xf32>
      %498 = vector.extract %497[0, 0, 0] : f32 from vector<1x1x1xf32>
      %499 = vector.broadcast %494 : f32 to vector<16x128xf32>
      %500 = arith.subf %489, %499 : vector<16x128xf32>
      %501 = vector.broadcast %498 : f32 to vector<16x128xf32>
      %502 = arith.subf %490, %501 : vector<16x128xf32>
      %503 = math.exp %502 : vector<16x128xf32>
      %504 = math.exp %500 : vector<16x128xf32>
      %505 = vector.shape_cast %504 : vector<16x128xf32> to vector<1x16x128xf32>
      %cst_126 = arith.constant dense<0.000000e+00> : vector<1xf32>
      %506 = vector.multi_reduction <add>, %505, %cst_126 [1, 2] : vector<1x16x128xf32> to vector<1xf32>
      %507 = vector.shape_cast %506 : vector<1xf32> to vector<1x1x1xf32>
      %508 = vector.extract %507[0, 0, 0] : f32 from vector<1x1x1xf32>
      %509 = vector.shape_cast %503 : vector<16x128xf32> to vector<1x16x128xf32>
      %cst_127 = arith.constant dense<0.000000e+00> : vector<1xf32>
      %510 = vector.multi_reduction <add>, %509, %cst_127 [1, 2] : vector<1x16x128xf32> to vector<1xf32>
      %511 = vector.shape_cast %510 : vector<1xf32> to vector<1x1x1xf32>
      %512 = vector.extract %511[0, 0, 0] : f32 from vector<1x1x1xf32>
      %513 = arith.subf %502, %500 : vector<16x128xf32>
      %514 = arith.mulf %503, %513 : vector<16x128xf32>
      %515 = vector.shape_cast %514 : vector<16x128xf32> to vector<1x16x128xf32>
      %cst_128 = arith.constant dense<0.000000e+00> : vector<1xf32>
      %516 = vector.multi_reduction <add>, %515, %cst_128 [1, 2] : vector<1x16x128xf32> to vector<1xf32>
      %517 = vector.shape_cast %516 : vector<1xf32> to vector<1x1x1xf32>
      %518 = vector.extract %517[0, 0, 0] : f32 from vector<1x1x1xf32>
      %519 = arith.divf %518, %512 : f32
      %520 = math.log %508 : f32
      %521 = math.log %512 : f32
      %522 = arith.subf %520, %521 : f32
      %523 = arith.addf %519, %522 : f32
      %cst_129 = arith.constant 1.000000e+00 : f32
      %524 = arith.mulf %523, %cst_129 : f32
      %525 = arith.mulf %486, %281 : vector<16x128xf32>
      %526 = arith.mulf %488, %281 : vector<16x128xf32>
      %527 = vector.shape_cast %525 : vector<16x128xf32> to vector<1x16x128xf32>
      %cst_130 = arith.constant dense<0xFF800000> : vector<1xf32>
      %528 = vector.multi_reduction <maximumf>, %527, %cst_130 [1, 2] : vector<1x16x128xf32> to vector<1xf32>
      %529 = vector.shape_cast %528 : vector<1xf32> to vector<1x1x1xf32>
      %530 = vector.extract %529[0, 0, 0] : f32 from vector<1x1x1xf32>
      %531 = vector.shape_cast %526 : vector<16x128xf32> to vector<1x16x128xf32>
      %cst_131 = arith.constant dense<0xFF800000> : vector<1xf32>
      %532 = vector.multi_reduction <maximumf>, %531, %cst_131 [1, 2] : vector<1x16x128xf32> to vector<1xf32>
      %533 = vector.shape_cast %532 : vector<1xf32> to vector<1x1x1xf32>
      %534 = vector.extract %533[0, 0, 0] : f32 from vector<1x1x1xf32>
      %535 = vector.broadcast %530 : f32 to vector<16x128xf32>
      %536 = arith.subf %525, %535 : vector<16x128xf32>
      %537 = vector.broadcast %534 : f32 to vector<16x128xf32>
      %538 = arith.subf %526, %537 : vector<16x128xf32>
      %539 = math.exp %538 : vector<16x128xf32>
      %540 = math.exp %536 : vector<16x128xf32>
      %541 = vector.shape_cast %540 : vector<16x128xf32> to vector<1x16x128xf32>
      %cst_132 = arith.constant dense<0.000000e+00> : vector<1xf32>
      %542 = vector.multi_reduction <add>, %541, %cst_132 [1, 2] : vector<1x16x128xf32> to vector<1xf32>
      %543 = vector.shape_cast %542 : vector<1xf32> to vector<1x1x1xf32>
      %544 = vector.extract %543[0, 0, 0] : f32 from vector<1x1x1xf32>
      %545 = vector.shape_cast %539 : vector<16x128xf32> to vector<1x16x128xf32>
      %cst_133 = arith.constant dense<0.000000e+00> : vector<1xf32>
      %546 = vector.multi_reduction <add>, %545, %cst_133 [1, 2] : vector<1x16x128xf32> to vector<1xf32>
      %547 = vector.shape_cast %546 : vector<1xf32> to vector<1x1x1xf32>
      %548 = vector.extract %547[0, 0, 0] : f32 from vector<1x1x1xf32>
      %549 = arith.subf %538, %536 : vector<16x128xf32>
      %550 = arith.mulf %539, %549 : vector<16x128xf32>
      %551 = vector.shape_cast %550 : vector<16x128xf32> to vector<1x16x128xf32>
      %cst_134 = arith.constant dense<0.000000e+00> : vector<1xf32>
      %552 = vector.multi_reduction <add>, %551, %cst_134 [1, 2] : vector<1x16x128xf32> to vector<1xf32>
      %553 = vector.shape_cast %552 : vector<1xf32> to vector<1x1x1xf32>
      %554 = vector.extract %553[0, 0, 0] : f32 from vector<1x1x1xf32>
      %555 = arith.divf %554, %548 : f32
      %556 = math.log %544 : f32
      %557 = math.log %548 : f32
      %558 = arith.subf %556, %557 : f32
      %559 = arith.addf %555, %558 : f32
      %cst_135 = arith.constant 1.000000e+00 : f32
      %560 = arith.mulf %559, %cst_135 : f32
      scf.yield %524, %560 : f32, f32
    } else {
      %cst_117 = arith.constant 0.000000e+00 : f32
      %cst_118 = arith.constant 0.000000e+00 : f32
      scf.yield %cst_117, %cst_118 : f32, f32
    }
    %290 = arith.addf %255, %289#0 : f32
    %291 = arith.addf %256, %289#1 : f32
    %292 = arith.addf %257, %285 : f32
    %c9_i32 = arith.constant 9 : i32
    %293 = vector.broadcast %c9_i32 : i32 to vector<16x128xi32>
    %294 = arith.cmpi eq, %1, %293 : vector<16x128xi32>
    %295 = arith.extui %294 : vector<16x128xi1> to vector<16x128xi32>
    %296 = arith.sitofp %295 : vector<16x128xi32> to vector<16x128xf32>
    %c1_i32_69 = arith.constant 1 : i32
    %297 = tpu.dynamic_rotate %296 by %c1_i32_69 dim 0 : vector<16x128xf32>, i32 -> vector<16x128xf32>
    %298 = arith.select %5, %297, %12 : vector<16x128xi1>, vector<16x128xf32>
    %c15_i32_70 = arith.constant 15 : i32
    %299 = tpu.dynamic_rotate %296 by %c15_i32_70 dim 0 : vector<16x128xf32>, i32 -> vector<16x128xf32>
    %300 = arith.select %7, %299, %12 : vector<16x128xi1>, vector<16x128xf32>
    %c1_i32_71 = arith.constant 1 : i32
    %301 = tpu.dynamic_rotate %296 by %c1_i32_71 dim 1 : vector<16x128xf32>, i32 -> vector<16x128xf32>
    %302 = arith.select %9, %301, %12 : vector<16x128xi1>, vector<16x128xf32>
    %c127_i32_72 = arith.constant 127 : i32
    %303 = tpu.dynamic_rotate %296 by %c127_i32_72 dim 1 : vector<16x128xf32>, i32 -> vector<16x128xf32>
    %304 = arith.select %11, %303, %12 : vector<16x128xi1>, vector<16x128xf32>
    %305 = arith.maximumf %296, %298 : vector<16x128xf32>
    %306 = arith.maximumf %300, %302 : vector<16x128xf32>
    %307 = arith.maximumf %305, %306 : vector<16x128xf32>
    %308 = arith.maximumf %307, %304 : vector<16x128xf32>
    %309 = arith.minimumf %296, %298 : vector<16x128xf32>
    %310 = arith.minimumf %300, %302 : vector<16x128xf32>
    %311 = arith.minimumf %309, %310 : vector<16x128xf32>
    %312 = arith.minimumf %311, %304 : vector<16x128xf32>
    %313 = arith.subf %308, %312 : vector<16x128xf32>
    %cst_73 = arith.constant 1.000000e+00 : f32
    %314 = vector.broadcast %cst_73 : f32 to vector<16x128xf32>
    %315 = arith.subf %314, %313 : vector<16x128xf32>
    %316 = arith.mulf %296, %315 : vector<16x128xf32>
    %317 = vector.shape_cast %313 : vector<16x128xf32> to vector<1x16x128xf32>
    %cst_74 = arith.constant dense<0.000000e+00> : vector<1xf32>
    %318 = vector.multi_reduction <add>, %317, %cst_74 [1, 2] : vector<1x16x128xf32> to vector<1xf32>
    %319 = vector.shape_cast %318 : vector<1xf32> to vector<1x1x1xf32>
    %320 = vector.extract %319[0, 0, 0] : f32 from vector<1x1x1xf32>
    %cst_75 = arith.constant 0.000000e+00 : f32
    %321 = arith.cmpf ogt, %320, %cst_75 : f32
    %322 = arith.extui %321 : i1 to i32
    %c0_i32_76 = arith.constant 0 : i32
    %323 = arith.cmpi ne, %322, %c0_i32_76 : i32
    %324:2 = scf.if %323 -> (f32, f32) {
      %c0_117 = arith.constant 0 : index
      %c9 = arith.constant 9 : index
      %c0_118 = arith.constant 0 : index
      %c0_119 = arith.constant 0 : index
      %485 = vector.load %arg3[%c0_117, %c9, %c0_118, %c0_119] : memref<1x14x16x128xf32, #tpu.memory_space<vmem>>, vector<1x1x16x128xf32>
      %486 = vector.shape_cast %485 : vector<1x1x16x128xf32> to vector<16x128xf32>
      %c0_120 = arith.constant 0 : index
      %c9_121 = arith.constant 9 : index
      %c0_122 = arith.constant 0 : index
      %c0_123 = arith.constant 0 : index
      %487 = vector.load %arg4[%c0_120, %c9_121, %c0_122, %c0_123] : memref<1x14x16x128xf32, #tpu.memory_space<vmem>>, vector<1x1x16x128xf32>
      %488 = vector.shape_cast %487 : vector<1x1x16x128xf32> to vector<16x128xf32>
      %489 = arith.mulf %486, %313 : vector<16x128xf32>
      %490 = arith.mulf %488, %313 : vector<16x128xf32>
      %491 = vector.shape_cast %489 : vector<16x128xf32> to vector<1x16x128xf32>
      %cst_124 = arith.constant dense<0xFF800000> : vector<1xf32>
      %492 = vector.multi_reduction <maximumf>, %491, %cst_124 [1, 2] : vector<1x16x128xf32> to vector<1xf32>
      %493 = vector.shape_cast %492 : vector<1xf32> to vector<1x1x1xf32>
      %494 = vector.extract %493[0, 0, 0] : f32 from vector<1x1x1xf32>
      %495 = vector.shape_cast %490 : vector<16x128xf32> to vector<1x16x128xf32>
      %cst_125 = arith.constant dense<0xFF800000> : vector<1xf32>
      %496 = vector.multi_reduction <maximumf>, %495, %cst_125 [1, 2] : vector<1x16x128xf32> to vector<1xf32>
      %497 = vector.shape_cast %496 : vector<1xf32> to vector<1x1x1xf32>
      %498 = vector.extract %497[0, 0, 0] : f32 from vector<1x1x1xf32>
      %499 = vector.broadcast %494 : f32 to vector<16x128xf32>
      %500 = arith.subf %489, %499 : vector<16x128xf32>
      %501 = vector.broadcast %498 : f32 to vector<16x128xf32>
      %502 = arith.subf %490, %501 : vector<16x128xf32>
      %503 = math.exp %502 : vector<16x128xf32>
      %504 = math.exp %500 : vector<16x128xf32>
      %505 = vector.shape_cast %504 : vector<16x128xf32> to vector<1x16x128xf32>
      %cst_126 = arith.constant dense<0.000000e+00> : vector<1xf32>
      %506 = vector.multi_reduction <add>, %505, %cst_126 [1, 2] : vector<1x16x128xf32> to vector<1xf32>
      %507 = vector.shape_cast %506 : vector<1xf32> to vector<1x1x1xf32>
      %508 = vector.extract %507[0, 0, 0] : f32 from vector<1x1x1xf32>
      %509 = vector.shape_cast %503 : vector<16x128xf32> to vector<1x16x128xf32>
      %cst_127 = arith.constant dense<0.000000e+00> : vector<1xf32>
      %510 = vector.multi_reduction <add>, %509, %cst_127 [1, 2] : vector<1x16x128xf32> to vector<1xf32>
      %511 = vector.shape_cast %510 : vector<1xf32> to vector<1x1x1xf32>
      %512 = vector.extract %511[0, 0, 0] : f32 from vector<1x1x1xf32>
      %513 = arith.subf %502, %500 : vector<16x128xf32>
      %514 = arith.mulf %503, %513 : vector<16x128xf32>
      %515 = vector.shape_cast %514 : vector<16x128xf32> to vector<1x16x128xf32>
      %cst_128 = arith.constant dense<0.000000e+00> : vector<1xf32>
      %516 = vector.multi_reduction <add>, %515, %cst_128 [1, 2] : vector<1x16x128xf32> to vector<1xf32>
      %517 = vector.shape_cast %516 : vector<1xf32> to vector<1x1x1xf32>
      %518 = vector.extract %517[0, 0, 0] : f32 from vector<1x1x1xf32>
      %519 = arith.divf %518, %512 : f32
      %520 = math.log %508 : f32
      %521 = math.log %512 : f32
      %522 = arith.subf %520, %521 : f32
      %523 = arith.addf %519, %522 : f32
      %cst_129 = arith.constant 1.000000e+00 : f32
      %524 = arith.mulf %523, %cst_129 : f32
      %525 = arith.mulf %486, %316 : vector<16x128xf32>
      %526 = arith.mulf %488, %316 : vector<16x128xf32>
      %527 = vector.shape_cast %525 : vector<16x128xf32> to vector<1x16x128xf32>
      %cst_130 = arith.constant dense<0xFF800000> : vector<1xf32>
      %528 = vector.multi_reduction <maximumf>, %527, %cst_130 [1, 2] : vector<1x16x128xf32> to vector<1xf32>
      %529 = vector.shape_cast %528 : vector<1xf32> to vector<1x1x1xf32>
      %530 = vector.extract %529[0, 0, 0] : f32 from vector<1x1x1xf32>
      %531 = vector.shape_cast %526 : vector<16x128xf32> to vector<1x16x128xf32>
      %cst_131 = arith.constant dense<0xFF800000> : vector<1xf32>
      %532 = vector.multi_reduction <maximumf>, %531, %cst_131 [1, 2] : vector<1x16x128xf32> to vector<1xf32>
      %533 = vector.shape_cast %532 : vector<1xf32> to vector<1x1x1xf32>
      %534 = vector.extract %533[0, 0, 0] : f32 from vector<1x1x1xf32>
      %535 = vector.broadcast %530 : f32 to vector<16x128xf32>
      %536 = arith.subf %525, %535 : vector<16x128xf32>
      %537 = vector.broadcast %534 : f32 to vector<16x128xf32>
      %538 = arith.subf %526, %537 : vector<16x128xf32>
      %539 = math.exp %538 : vector<16x128xf32>
      %540 = math.exp %536 : vector<16x128xf32>
      %541 = vector.shape_cast %540 : vector<16x128xf32> to vector<1x16x128xf32>
      %cst_132 = arith.constant dense<0.000000e+00> : vector<1xf32>
      %542 = vector.multi_reduction <add>, %541, %cst_132 [1, 2] : vector<1x16x128xf32> to vector<1xf32>
      %543 = vector.shape_cast %542 : vector<1xf32> to vector<1x1x1xf32>
      %544 = vector.extract %543[0, 0, 0] : f32 from vector<1x1x1xf32>
      %545 = vector.shape_cast %539 : vector<16x128xf32> to vector<1x16x128xf32>
      %cst_133 = arith.constant dense<0.000000e+00> : vector<1xf32>
      %546 = vector.multi_reduction <add>, %545, %cst_133 [1, 2] : vector<1x16x128xf32> to vector<1xf32>
      %547 = vector.shape_cast %546 : vector<1xf32> to vector<1x1x1xf32>
      %548 = vector.extract %547[0, 0, 0] : f32 from vector<1x1x1xf32>
      %549 = arith.subf %538, %536 : vector<16x128xf32>
      %550 = arith.mulf %539, %549 : vector<16x128xf32>
      %551 = vector.shape_cast %550 : vector<16x128xf32> to vector<1x16x128xf32>
      %cst_134 = arith.constant dense<0.000000e+00> : vector<1xf32>
      %552 = vector.multi_reduction <add>, %551, %cst_134 [1, 2] : vector<1x16x128xf32> to vector<1xf32>
      %553 = vector.shape_cast %552 : vector<1xf32> to vector<1x1x1xf32>
      %554 = vector.extract %553[0, 0, 0] : f32 from vector<1x1x1xf32>
      %555 = arith.divf %554, %548 : f32
      %556 = math.log %544 : f32
      %557 = math.log %548 : f32
      %558 = arith.subf %556, %557 : f32
      %559 = arith.addf %555, %558 : f32
      %cst_135 = arith.constant 1.000000e+00 : f32
      %560 = arith.mulf %559, %cst_135 : f32
      scf.yield %524, %560 : f32, f32
    } else {
      %cst_117 = arith.constant 0.000000e+00 : f32
      %cst_118 = arith.constant 0.000000e+00 : f32
      scf.yield %cst_117, %cst_118 : f32, f32
    }
    %325 = arith.addf %290, %324#0 : f32
    %326 = arith.addf %291, %324#1 : f32
    %327 = arith.addf %292, %320 : f32
    %c10_i32 = arith.constant 10 : i32
    %328 = vector.broadcast %c10_i32 : i32 to vector<16x128xi32>
    %329 = arith.cmpi eq, %1, %328 : vector<16x128xi32>
    %330 = arith.extui %329 : vector<16x128xi1> to vector<16x128xi32>
    %331 = arith.sitofp %330 : vector<16x128xi32> to vector<16x128xf32>
    %c1_i32_77 = arith.constant 1 : i32
    %332 = tpu.dynamic_rotate %331 by %c1_i32_77 dim 0 : vector<16x128xf32>, i32 -> vector<16x128xf32>
    %333 = arith.select %5, %332, %12 : vector<16x128xi1>, vector<16x128xf32>
    %c15_i32_78 = arith.constant 15 : i32
    %334 = tpu.dynamic_rotate %331 by %c15_i32_78 dim 0 : vector<16x128xf32>, i32 -> vector<16x128xf32>
    %335 = arith.select %7, %334, %12 : vector<16x128xi1>, vector<16x128xf32>
    %c1_i32_79 = arith.constant 1 : i32
    %336 = tpu.dynamic_rotate %331 by %c1_i32_79 dim 1 : vector<16x128xf32>, i32 -> vector<16x128xf32>
    %337 = arith.select %9, %336, %12 : vector<16x128xi1>, vector<16x128xf32>
    %c127_i32_80 = arith.constant 127 : i32
    %338 = tpu.dynamic_rotate %331 by %c127_i32_80 dim 1 : vector<16x128xf32>, i32 -> vector<16x128xf32>
    %339 = arith.select %11, %338, %12 : vector<16x128xi1>, vector<16x128xf32>
    %340 = arith.maximumf %331, %333 : vector<16x128xf32>
    %341 = arith.maximumf %335, %337 : vector<16x128xf32>
    %342 = arith.maximumf %340, %341 : vector<16x128xf32>
    %343 = arith.maximumf %342, %339 : vector<16x128xf32>
    %344 = arith.minimumf %331, %333 : vector<16x128xf32>
    %345 = arith.minimumf %335, %337 : vector<16x128xf32>
    %346 = arith.minimumf %344, %345 : vector<16x128xf32>
    %347 = arith.minimumf %346, %339 : vector<16x128xf32>
    %348 = arith.subf %343, %347 : vector<16x128xf32>
    %cst_81 = arith.constant 1.000000e+00 : f32
    %349 = vector.broadcast %cst_81 : f32 to vector<16x128xf32>
    %350 = arith.subf %349, %348 : vector<16x128xf32>
    %351 = arith.mulf %331, %350 : vector<16x128xf32>
    %352 = vector.shape_cast %348 : vector<16x128xf32> to vector<1x16x128xf32>
    %cst_82 = arith.constant dense<0.000000e+00> : vector<1xf32>
    %353 = vector.multi_reduction <add>, %352, %cst_82 [1, 2] : vector<1x16x128xf32> to vector<1xf32>
    %354 = vector.shape_cast %353 : vector<1xf32> to vector<1x1x1xf32>
    %355 = vector.extract %354[0, 0, 0] : f32 from vector<1x1x1xf32>
    %cst_83 = arith.constant 0.000000e+00 : f32
    %356 = arith.cmpf ogt, %355, %cst_83 : f32
    %357 = arith.extui %356 : i1 to i32
    %c0_i32_84 = arith.constant 0 : i32
    %358 = arith.cmpi ne, %357, %c0_i32_84 : i32
    %359:2 = scf.if %358 -> (f32, f32) {
      %c0_117 = arith.constant 0 : index
      %c10 = arith.constant 10 : index
      %c0_118 = arith.constant 0 : index
      %c0_119 = arith.constant 0 : index
      %485 = vector.load %arg3[%c0_117, %c10, %c0_118, %c0_119] : memref<1x14x16x128xf32, #tpu.memory_space<vmem>>, vector<1x1x16x128xf32>
      %486 = vector.shape_cast %485 : vector<1x1x16x128xf32> to vector<16x128xf32>
      %c0_120 = arith.constant 0 : index
      %c10_121 = arith.constant 10 : index
      %c0_122 = arith.constant 0 : index
      %c0_123 = arith.constant 0 : index
      %487 = vector.load %arg4[%c0_120, %c10_121, %c0_122, %c0_123] : memref<1x14x16x128xf32, #tpu.memory_space<vmem>>, vector<1x1x16x128xf32>
      %488 = vector.shape_cast %487 : vector<1x1x16x128xf32> to vector<16x128xf32>
      %489 = arith.mulf %486, %348 : vector<16x128xf32>
      %490 = arith.mulf %488, %348 : vector<16x128xf32>
      %491 = vector.shape_cast %489 : vector<16x128xf32> to vector<1x16x128xf32>
      %cst_124 = arith.constant dense<0xFF800000> : vector<1xf32>
      %492 = vector.multi_reduction <maximumf>, %491, %cst_124 [1, 2] : vector<1x16x128xf32> to vector<1xf32>
      %493 = vector.shape_cast %492 : vector<1xf32> to vector<1x1x1xf32>
      %494 = vector.extract %493[0, 0, 0] : f32 from vector<1x1x1xf32>
      %495 = vector.shape_cast %490 : vector<16x128xf32> to vector<1x16x128xf32>
      %cst_125 = arith.constant dense<0xFF800000> : vector<1xf32>
      %496 = vector.multi_reduction <maximumf>, %495, %cst_125 [1, 2] : vector<1x16x128xf32> to vector<1xf32>
      %497 = vector.shape_cast %496 : vector<1xf32> to vector<1x1x1xf32>
      %498 = vector.extract %497[0, 0, 0] : f32 from vector<1x1x1xf32>
      %499 = vector.broadcast %494 : f32 to vector<16x128xf32>
      %500 = arith.subf %489, %499 : vector<16x128xf32>
      %501 = vector.broadcast %498 : f32 to vector<16x128xf32>
      %502 = arith.subf %490, %501 : vector<16x128xf32>
      %503 = math.exp %502 : vector<16x128xf32>
      %504 = math.exp %500 : vector<16x128xf32>
      %505 = vector.shape_cast %504 : vector<16x128xf32> to vector<1x16x128xf32>
      %cst_126 = arith.constant dense<0.000000e+00> : vector<1xf32>
      %506 = vector.multi_reduction <add>, %505, %cst_126 [1, 2] : vector<1x16x128xf32> to vector<1xf32>
      %507 = vector.shape_cast %506 : vector<1xf32> to vector<1x1x1xf32>
      %508 = vector.extract %507[0, 0, 0] : f32 from vector<1x1x1xf32>
      %509 = vector.shape_cast %503 : vector<16x128xf32> to vector<1x16x128xf32>
      %cst_127 = arith.constant dense<0.000000e+00> : vector<1xf32>
      %510 = vector.multi_reduction <add>, %509, %cst_127 [1, 2] : vector<1x16x128xf32> to vector<1xf32>
      %511 = vector.shape_cast %510 : vector<1xf32> to vector<1x1x1xf32>
      %512 = vector.extract %511[0, 0, 0] : f32 from vector<1x1x1xf32>
      %513 = arith.subf %502, %500 : vector<16x128xf32>
      %514 = arith.mulf %503, %513 : vector<16x128xf32>
      %515 = vector.shape_cast %514 : vector<16x128xf32> to vector<1x16x128xf32>
      %cst_128 = arith.constant dense<0.000000e+00> : vector<1xf32>
      %516 = vector.multi_reduction <add>, %515, %cst_128 [1, 2] : vector<1x16x128xf32> to vector<1xf32>
      %517 = vector.shape_cast %516 : vector<1xf32> to vector<1x1x1xf32>
      %518 = vector.extract %517[0, 0, 0] : f32 from vector<1x1x1xf32>
      %519 = arith.divf %518, %512 : f32
      %520 = math.log %508 : f32
      %521 = math.log %512 : f32
      %522 = arith.subf %520, %521 : f32
      %523 = arith.addf %519, %522 : f32
      %cst_129 = arith.constant 1.000000e+00 : f32
      %524 = arith.mulf %523, %cst_129 : f32
      %525 = arith.mulf %486, %351 : vector<16x128xf32>
      %526 = arith.mulf %488, %351 : vector<16x128xf32>
      %527 = vector.shape_cast %525 : vector<16x128xf32> to vector<1x16x128xf32>
      %cst_130 = arith.constant dense<0xFF800000> : vector<1xf32>
      %528 = vector.multi_reduction <maximumf>, %527, %cst_130 [1, 2] : vector<1x16x128xf32> to vector<1xf32>
      %529 = vector.shape_cast %528 : vector<1xf32> to vector<1x1x1xf32>
      %530 = vector.extract %529[0, 0, 0] : f32 from vector<1x1x1xf32>
      %531 = vector.shape_cast %526 : vector<16x128xf32> to vector<1x16x128xf32>
      %cst_131 = arith.constant dense<0xFF800000> : vector<1xf32>
      %532 = vector.multi_reduction <maximumf>, %531, %cst_131 [1, 2] : vector<1x16x128xf32> to vector<1xf32>
      %533 = vector.shape_cast %532 : vector<1xf32> to vector<1x1x1xf32>
      %534 = vector.extract %533[0, 0, 0] : f32 from vector<1x1x1xf32>
      %535 = vector.broadcast %530 : f32 to vector<16x128xf32>
      %536 = arith.subf %525, %535 : vector<16x128xf32>
      %537 = vector.broadcast %534 : f32 to vector<16x128xf32>
      %538 = arith.subf %526, %537 : vector<16x128xf32>
      %539 = math.exp %538 : vector<16x128xf32>
      %540 = math.exp %536 : vector<16x128xf32>
      %541 = vector.shape_cast %540 : vector<16x128xf32> to vector<1x16x128xf32>
      %cst_132 = arith.constant dense<0.000000e+00> : vector<1xf32>
      %542 = vector.multi_reduction <add>, %541, %cst_132 [1, 2] : vector<1x16x128xf32> to vector<1xf32>
      %543 = vector.shape_cast %542 : vector<1xf32> to vector<1x1x1xf32>
      %544 = vector.extract %543[0, 0, 0] : f32 from vector<1x1x1xf32>
      %545 = vector.shape_cast %539 : vector<16x128xf32> to vector<1x16x128xf32>
      %cst_133 = arith.constant dense<0.000000e+00> : vector<1xf32>
      %546 = vector.multi_reduction <add>, %545, %cst_133 [1, 2] : vector<1x16x128xf32> to vector<1xf32>
      %547 = vector.shape_cast %546 : vector<1xf32> to vector<1x1x1xf32>
      %548 = vector.extract %547[0, 0, 0] : f32 from vector<1x1x1xf32>
      %549 = arith.subf %538, %536 : vector<16x128xf32>
      %550 = arith.mulf %539, %549 : vector<16x128xf32>
      %551 = vector.shape_cast %550 : vector<16x128xf32> to vector<1x16x128xf32>
      %cst_134 = arith.constant dense<0.000000e+00> : vector<1xf32>
      %552 = vector.multi_reduction <add>, %551, %cst_134 [1, 2] : vector<1x16x128xf32> to vector<1xf32>
      %553 = vector.shape_cast %552 : vector<1xf32> to vector<1x1x1xf32>
      %554 = vector.extract %553[0, 0, 0] : f32 from vector<1x1x1xf32>
      %555 = arith.divf %554, %548 : f32
      %556 = math.log %544 : f32
      %557 = math.log %548 : f32
      %558 = arith.subf %556, %557 : f32
      %559 = arith.addf %555, %558 : f32
      %cst_135 = arith.constant 1.000000e+00 : f32
      %560 = arith.mulf %559, %cst_135 : f32
      scf.yield %524, %560 : f32, f32
    } else {
      %cst_117 = arith.constant 0.000000e+00 : f32
      %cst_118 = arith.constant 0.000000e+00 : f32
      scf.yield %cst_117, %cst_118 : f32, f32
    }
    %360 = arith.addf %325, %359#0 : f32
    %361 = arith.addf %326, %359#1 : f32
    %362 = arith.addf %327, %355 : f32
    %c11_i32 = arith.constant 11 : i32
    %363 = vector.broadcast %c11_i32 : i32 to vector<16x128xi32>
    %364 = arith.cmpi eq, %1, %363 : vector<16x128xi32>
    %365 = arith.extui %364 : vector<16x128xi1> to vector<16x128xi32>
    %366 = arith.sitofp %365 : vector<16x128xi32> to vector<16x128xf32>
    %c1_i32_85 = arith.constant 1 : i32
    %367 = tpu.dynamic_rotate %366 by %c1_i32_85 dim 0 : vector<16x128xf32>, i32 -> vector<16x128xf32>
    %368 = arith.select %5, %367, %12 : vector<16x128xi1>, vector<16x128xf32>
    %c15_i32_86 = arith.constant 15 : i32
    %369 = tpu.dynamic_rotate %366 by %c15_i32_86 dim 0 : vector<16x128xf32>, i32 -> vector<16x128xf32>
    %370 = arith.select %7, %369, %12 : vector<16x128xi1>, vector<16x128xf32>
    %c1_i32_87 = arith.constant 1 : i32
    %371 = tpu.dynamic_rotate %366 by %c1_i32_87 dim 1 : vector<16x128xf32>, i32 -> vector<16x128xf32>
    %372 = arith.select %9, %371, %12 : vector<16x128xi1>, vector<16x128xf32>
    %c127_i32_88 = arith.constant 127 : i32
    %373 = tpu.dynamic_rotate %366 by %c127_i32_88 dim 1 : vector<16x128xf32>, i32 -> vector<16x128xf32>
    %374 = arith.select %11, %373, %12 : vector<16x128xi1>, vector<16x128xf32>
    %375 = arith.maximumf %366, %368 : vector<16x128xf32>
    %376 = arith.maximumf %370, %372 : vector<16x128xf32>
    %377 = arith.maximumf %375, %376 : vector<16x128xf32>
    %378 = arith.maximumf %377, %374 : vector<16x128xf32>
    %379 = arith.minimumf %366, %368 : vector<16x128xf32>
    %380 = arith.minimumf %370, %372 : vector<16x128xf32>
    %381 = arith.minimumf %379, %380 : vector<16x128xf32>
    %382 = arith.minimumf %381, %374 : vector<16x128xf32>
    %383 = arith.subf %378, %382 : vector<16x128xf32>
    %cst_89 = arith.constant 1.000000e+00 : f32
    %384 = vector.broadcast %cst_89 : f32 to vector<16x128xf32>
    %385 = arith.subf %384, %383 : vector<16x128xf32>
    %386 = arith.mulf %366, %385 : vector<16x128xf32>
    %387 = vector.shape_cast %383 : vector<16x128xf32> to vector<1x16x128xf32>
    %cst_90 = arith.constant dense<0.000000e+00> : vector<1xf32>
    %388 = vector.multi_reduction <add>, %387, %cst_90 [1, 2] : vector<1x16x128xf32> to vector<1xf32>
    %389 = vector.shape_cast %388 : vector<1xf32> to vector<1x1x1xf32>
    %390 = vector.extract %389[0, 0, 0] : f32 from vector<1x1x1xf32>
    %cst_91 = arith.constant 0.000000e+00 : f32
    %391 = arith.cmpf ogt, %390, %cst_91 : f32
    %392 = arith.extui %391 : i1 to i32
    %c0_i32_92 = arith.constant 0 : i32
    %393 = arith.cmpi ne, %392, %c0_i32_92 : i32
    %394:2 = scf.if %393 -> (f32, f32) {
      %c0_117 = arith.constant 0 : index
      %c11 = arith.constant 11 : index
      %c0_118 = arith.constant 0 : index
      %c0_119 = arith.constant 0 : index
      %485 = vector.load %arg3[%c0_117, %c11, %c0_118, %c0_119] : memref<1x14x16x128xf32, #tpu.memory_space<vmem>>, vector<1x1x16x128xf32>
      %486 = vector.shape_cast %485 : vector<1x1x16x128xf32> to vector<16x128xf32>
      %c0_120 = arith.constant 0 : index
      %c11_121 = arith.constant 11 : index
      %c0_122 = arith.constant 0 : index
      %c0_123 = arith.constant 0 : index
      %487 = vector.load %arg4[%c0_120, %c11_121, %c0_122, %c0_123] : memref<1x14x16x128xf32, #tpu.memory_space<vmem>>, vector<1x1x16x128xf32>
      %488 = vector.shape_cast %487 : vector<1x1x16x128xf32> to vector<16x128xf32>
      %489 = arith.mulf %486, %383 : vector<16x128xf32>
      %490 = arith.mulf %488, %383 : vector<16x128xf32>
      %491 = vector.shape_cast %489 : vector<16x128xf32> to vector<1x16x128xf32>
      %cst_124 = arith.constant dense<0xFF800000> : vector<1xf32>
      %492 = vector.multi_reduction <maximumf>, %491, %cst_124 [1, 2] : vector<1x16x128xf32> to vector<1xf32>
      %493 = vector.shape_cast %492 : vector<1xf32> to vector<1x1x1xf32>
      %494 = vector.extract %493[0, 0, 0] : f32 from vector<1x1x1xf32>
      %495 = vector.shape_cast %490 : vector<16x128xf32> to vector<1x16x128xf32>
      %cst_125 = arith.constant dense<0xFF800000> : vector<1xf32>
      %496 = vector.multi_reduction <maximumf>, %495, %cst_125 [1, 2] : vector<1x16x128xf32> to vector<1xf32>
      %497 = vector.shape_cast %496 : vector<1xf32> to vector<1x1x1xf32>
      %498 = vector.extract %497[0, 0, 0] : f32 from vector<1x1x1xf32>
      %499 = vector.broadcast %494 : f32 to vector<16x128xf32>
      %500 = arith.subf %489, %499 : vector<16x128xf32>
      %501 = vector.broadcast %498 : f32 to vector<16x128xf32>
      %502 = arith.subf %490, %501 : vector<16x128xf32>
      %503 = math.exp %502 : vector<16x128xf32>
      %504 = math.exp %500 : vector<16x128xf32>
      %505 = vector.shape_cast %504 : vector<16x128xf32> to vector<1x16x128xf32>
      %cst_126 = arith.constant dense<0.000000e+00> : vector<1xf32>
      %506 = vector.multi_reduction <add>, %505, %cst_126 [1, 2] : vector<1x16x128xf32> to vector<1xf32>
      %507 = vector.shape_cast %506 : vector<1xf32> to vector<1x1x1xf32>
      %508 = vector.extract %507[0, 0, 0] : f32 from vector<1x1x1xf32>
      %509 = vector.shape_cast %503 : vector<16x128xf32> to vector<1x16x128xf32>
      %cst_127 = arith.constant dense<0.000000e+00> : vector<1xf32>
      %510 = vector.multi_reduction <add>, %509, %cst_127 [1, 2] : vector<1x16x128xf32> to vector<1xf32>
      %511 = vector.shape_cast %510 : vector<1xf32> to vector<1x1x1xf32>
      %512 = vector.extract %511[0, 0, 0] : f32 from vector<1x1x1xf32>
      %513 = arith.subf %502, %500 : vector<16x128xf32>
      %514 = arith.mulf %503, %513 : vector<16x128xf32>
      %515 = vector.shape_cast %514 : vector<16x128xf32> to vector<1x16x128xf32>
      %cst_128 = arith.constant dense<0.000000e+00> : vector<1xf32>
      %516 = vector.multi_reduction <add>, %515, %cst_128 [1, 2] : vector<1x16x128xf32> to vector<1xf32>
      %517 = vector.shape_cast %516 : vector<1xf32> to vector<1x1x1xf32>
      %518 = vector.extract %517[0, 0, 0] : f32 from vector<1x1x1xf32>
      %519 = arith.divf %518, %512 : f32
      %520 = math.log %508 : f32
      %521 = math.log %512 : f32
      %522 = arith.subf %520, %521 : f32
      %523 = arith.addf %519, %522 : f32
      %cst_129 = arith.constant 1.000000e+00 : f32
      %524 = arith.mulf %523, %cst_129 : f32
      %525 = arith.mulf %486, %386 : vector<16x128xf32>
      %526 = arith.mulf %488, %386 : vector<16x128xf32>
      %527 = vector.shape_cast %525 : vector<16x128xf32> to vector<1x16x128xf32>
      %cst_130 = arith.constant dense<0xFF800000> : vector<1xf32>
      %528 = vector.multi_reduction <maximumf>, %527, %cst_130 [1, 2] : vector<1x16x128xf32> to vector<1xf32>
      %529 = vector.shape_cast %528 : vector<1xf32> to vector<1x1x1xf32>
      %530 = vector.extract %529[0, 0, 0] : f32 from vector<1x1x1xf32>
      %531 = vector.shape_cast %526 : vector<16x128xf32> to vector<1x16x128xf32>
      %cst_131 = arith.constant dense<0xFF800000> : vector<1xf32>
      %532 = vector.multi_reduction <maximumf>, %531, %cst_131 [1, 2] : vector<1x16x128xf32> to vector<1xf32>
      %533 = vector.shape_cast %532 : vector<1xf32> to vector<1x1x1xf32>
      %534 = vector.extract %533[0, 0, 0] : f32 from vector<1x1x1xf32>
      %535 = vector.broadcast %530 : f32 to vector<16x128xf32>
      %536 = arith.subf %525, %535 : vector<16x128xf32>
      %537 = vector.broadcast %534 : f32 to vector<16x128xf32>
      %538 = arith.subf %526, %537 : vector<16x128xf32>
      %539 = math.exp %538 : vector<16x128xf32>
      %540 = math.exp %536 : vector<16x128xf32>
      %541 = vector.shape_cast %540 : vector<16x128xf32> to vector<1x16x128xf32>
      %cst_132 = arith.constant dense<0.000000e+00> : vector<1xf32>
      %542 = vector.multi_reduction <add>, %541, %cst_132 [1, 2] : vector<1x16x128xf32> to vector<1xf32>
      %543 = vector.shape_cast %542 : vector<1xf32> to vector<1x1x1xf32>
      %544 = vector.extract %543[0, 0, 0] : f32 from vector<1x1x1xf32>
      %545 = vector.shape_cast %539 : vector<16x128xf32> to vector<1x16x128xf32>
      %cst_133 = arith.constant dense<0.000000e+00> : vector<1xf32>
      %546 = vector.multi_reduction <add>, %545, %cst_133 [1, 2] : vector<1x16x128xf32> to vector<1xf32>
      %547 = vector.shape_cast %546 : vector<1xf32> to vector<1x1x1xf32>
      %548 = vector.extract %547[0, 0, 0] : f32 from vector<1x1x1xf32>
      %549 = arith.subf %538, %536 : vector<16x128xf32>
      %550 = arith.mulf %539, %549 : vector<16x128xf32>
      %551 = vector.shape_cast %550 : vector<16x128xf32> to vector<1x16x128xf32>
      %cst_134 = arith.constant dense<0.000000e+00> : vector<1xf32>
      %552 = vector.multi_reduction <add>, %551, %cst_134 [1, 2] : vector<1x16x128xf32> to vector<1xf32>
      %553 = vector.shape_cast %552 : vector<1xf32> to vector<1x1x1xf32>
      %554 = vector.extract %553[0, 0, 0] : f32 from vector<1x1x1xf32>
      %555 = arith.divf %554, %548 : f32
      %556 = math.log %544 : f32
      %557 = math.log %548 : f32
      %558 = arith.subf %556, %557 : f32
      %559 = arith.addf %555, %558 : f32
      %cst_135 = arith.constant 1.000000e+00 : f32
      %560 = arith.mulf %559, %cst_135 : f32
      scf.yield %524, %560 : f32, f32
    } else {
      %cst_117 = arith.constant 0.000000e+00 : f32
      %cst_118 = arith.constant 0.000000e+00 : f32
      scf.yield %cst_117, %cst_118 : f32, f32
    }
    %395 = arith.addf %360, %394#0 : f32
    %396 = arith.addf %361, %394#1 : f32
    %397 = arith.addf %362, %390 : f32
    %c12_i32 = arith.constant 12 : i32
    %398 = vector.broadcast %c12_i32 : i32 to vector<16x128xi32>
    %399 = arith.cmpi eq, %1, %398 : vector<16x128xi32>
    %400 = arith.extui %399 : vector<16x128xi1> to vector<16x128xi32>
    %401 = arith.sitofp %400 : vector<16x128xi32> to vector<16x128xf32>
    %c1_i32_93 = arith.constant 1 : i32
    %402 = tpu.dynamic_rotate %401 by %c1_i32_93 dim 0 : vector<16x128xf32>, i32 -> vector<16x128xf32>
    %403 = arith.select %5, %402, %12 : vector<16x128xi1>, vector<16x128xf32>
    %c15_i32_94 = arith.constant 15 : i32
    %404 = tpu.dynamic_rotate %401 by %c15_i32_94 dim 0 : vector<16x128xf32>, i32 -> vector<16x128xf32>
    %405 = arith.select %7, %404, %12 : vector<16x128xi1>, vector<16x128xf32>
    %c1_i32_95 = arith.constant 1 : i32
    %406 = tpu.dynamic_rotate %401 by %c1_i32_95 dim 1 : vector<16x128xf32>, i32 -> vector<16x128xf32>
    %407 = arith.select %9, %406, %12 : vector<16x128xi1>, vector<16x128xf32>
    %c127_i32_96 = arith.constant 127 : i32
    %408 = tpu.dynamic_rotate %401 by %c127_i32_96 dim 1 : vector<16x128xf32>, i32 -> vector<16x128xf32>
    %409 = arith.select %11, %408, %12 : vector<16x128xi1>, vector<16x128xf32>
    %410 = arith.maximumf %401, %403 : vector<16x128xf32>
    %411 = arith.maximumf %405, %407 : vector<16x128xf32>
    %412 = arith.maximumf %410, %411 : vector<16x128xf32>
    %413 = arith.maximumf %412, %409 : vector<16x128xf32>
    %414 = arith.minimumf %401, %403 : vector<16x128xf32>
    %415 = arith.minimumf %405, %407 : vector<16x128xf32>
    %416 = arith.minimumf %414, %415 : vector<16x128xf32>
    %417 = arith.minimumf %416, %409 : vector<16x128xf32>
    %418 = arith.subf %413, %417 : vector<16x128xf32>
    %cst_97 = arith.constant 1.000000e+00 : f32
    %419 = vector.broadcast %cst_97 : f32 to vector<16x128xf32>
    %420 = arith.subf %419, %418 : vector<16x128xf32>
    %421 = arith.mulf %401, %420 : vector<16x128xf32>
    %422 = vector.shape_cast %418 : vector<16x128xf32> to vector<1x16x128xf32>
    %cst_98 = arith.constant dense<0.000000e+00> : vector<1xf32>
    %423 = vector.multi_reduction <add>, %422, %cst_98 [1, 2] : vector<1x16x128xf32> to vector<1xf32>
    %424 = vector.shape_cast %423 : vector<1xf32> to vector<1x1x1xf32>
    %425 = vector.extract %424[0, 0, 0] : f32 from vector<1x1x1xf32>
    %cst_99 = arith.constant 0.000000e+00 : f32
    %426 = arith.cmpf ogt, %425, %cst_99 : f32
    %427 = arith.extui %426 : i1 to i32
    %c0_i32_100 = arith.constant 0 : i32
    %428 = arith.cmpi ne, %427, %c0_i32_100 : i32
    %429:2 = scf.if %428 -> (f32, f32) {
      %c0_117 = arith.constant 0 : index
      %c12 = arith.constant 12 : index
      %c0_118 = arith.constant 0 : index
      %c0_119 = arith.constant 0 : index
      %485 = vector.load %arg3[%c0_117, %c12, %c0_118, %c0_119] : memref<1x14x16x128xf32, #tpu.memory_space<vmem>>, vector<1x1x16x128xf32>
      %486 = vector.shape_cast %485 : vector<1x1x16x128xf32> to vector<16x128xf32>
      %c0_120 = arith.constant 0 : index
      %c12_121 = arith.constant 12 : index
      %c0_122 = arith.constant 0 : index
      %c0_123 = arith.constant 0 : index
      %487 = vector.load %arg4[%c0_120, %c12_121, %c0_122, %c0_123] : memref<1x14x16x128xf32, #tpu.memory_space<vmem>>, vector<1x1x16x128xf32>
      %488 = vector.shape_cast %487 : vector<1x1x16x128xf32> to vector<16x128xf32>
      %489 = arith.mulf %486, %418 : vector<16x128xf32>
      %490 = arith.mulf %488, %418 : vector<16x128xf32>
      %491 = vector.shape_cast %489 : vector<16x128xf32> to vector<1x16x128xf32>
      %cst_124 = arith.constant dense<0xFF800000> : vector<1xf32>
      %492 = vector.multi_reduction <maximumf>, %491, %cst_124 [1, 2] : vector<1x16x128xf32> to vector<1xf32>
      %493 = vector.shape_cast %492 : vector<1xf32> to vector<1x1x1xf32>
      %494 = vector.extract %493[0, 0, 0] : f32 from vector<1x1x1xf32>
      %495 = vector.shape_cast %490 : vector<16x128xf32> to vector<1x16x128xf32>
      %cst_125 = arith.constant dense<0xFF800000> : vector<1xf32>
      %496 = vector.multi_reduction <maximumf>, %495, %cst_125 [1, 2] : vector<1x16x128xf32> to vector<1xf32>
      %497 = vector.shape_cast %496 : vector<1xf32> to vector<1x1x1xf32>
      %498 = vector.extract %497[0, 0, 0] : f32 from vector<1x1x1xf32>
      %499 = vector.broadcast %494 : f32 to vector<16x128xf32>
      %500 = arith.subf %489, %499 : vector<16x128xf32>
      %501 = vector.broadcast %498 : f32 to vector<16x128xf32>
      %502 = arith.subf %490, %501 : vector<16x128xf32>
      %503 = math.exp %502 : vector<16x128xf32>
      %504 = math.exp %500 : vector<16x128xf32>
      %505 = vector.shape_cast %504 : vector<16x128xf32> to vector<1x16x128xf32>
      %cst_126 = arith.constant dense<0.000000e+00> : vector<1xf32>
      %506 = vector.multi_reduction <add>, %505, %cst_126 [1, 2] : vector<1x16x128xf32> to vector<1xf32>
      %507 = vector.shape_cast %506 : vector<1xf32> to vector<1x1x1xf32>
      %508 = vector.extract %507[0, 0, 0] : f32 from vector<1x1x1xf32>
      %509 = vector.shape_cast %503 : vector<16x128xf32> to vector<1x16x128xf32>
      %cst_127 = arith.constant dense<0.000000e+00> : vector<1xf32>
      %510 = vector.multi_reduction <add>, %509, %cst_127 [1, 2] : vector<1x16x128xf32> to vector<1xf32>
      %511 = vector.shape_cast %510 : vector<1xf32> to vector<1x1x1xf32>
      %512 = vector.extract %511[0, 0, 0] : f32 from vector<1x1x1xf32>
      %513 = arith.subf %502, %500 : vector<16x128xf32>
      %514 = arith.mulf %503, %513 : vector<16x128xf32>
      %515 = vector.shape_cast %514 : vector<16x128xf32> to vector<1x16x128xf32>
      %cst_128 = arith.constant dense<0.000000e+00> : vector<1xf32>
      %516 = vector.multi_reduction <add>, %515, %cst_128 [1, 2] : vector<1x16x128xf32> to vector<1xf32>
      %517 = vector.shape_cast %516 : vector<1xf32> to vector<1x1x1xf32>
      %518 = vector.extract %517[0, 0, 0] : f32 from vector<1x1x1xf32>
      %519 = arith.divf %518, %512 : f32
      %520 = math.log %508 : f32
      %521 = math.log %512 : f32
      %522 = arith.subf %520, %521 : f32
      %523 = arith.addf %519, %522 : f32
      %cst_129 = arith.constant 1.000000e+00 : f32
      %524 = arith.mulf %523, %cst_129 : f32
      %525 = arith.mulf %486, %421 : vector<16x128xf32>
      %526 = arith.mulf %488, %421 : vector<16x128xf32>
      %527 = vector.shape_cast %525 : vector<16x128xf32> to vector<1x16x128xf32>
      %cst_130 = arith.constant dense<0xFF800000> : vector<1xf32>
      %528 = vector.multi_reduction <maximumf>, %527, %cst_130 [1, 2] : vector<1x16x128xf32> to vector<1xf32>
      %529 = vector.shape_cast %528 : vector<1xf32> to vector<1x1x1xf32>
      %530 = vector.extract %529[0, 0, 0] : f32 from vector<1x1x1xf32>
      %531 = vector.shape_cast %526 : vector<16x128xf32> to vector<1x16x128xf32>
      %cst_131 = arith.constant dense<0xFF800000> : vector<1xf32>
      %532 = vector.multi_reduction <maximumf>, %531, %cst_131 [1, 2] : vector<1x16x128xf32> to vector<1xf32>
      %533 = vector.shape_cast %532 : vector<1xf32> to vector<1x1x1xf32>
      %534 = vector.extract %533[0, 0, 0] : f32 from vector<1x1x1xf32>
      %535 = vector.broadcast %530 : f32 to vector<16x128xf32>
      %536 = arith.subf %525, %535 : vector<16x128xf32>
      %537 = vector.broadcast %534 : f32 to vector<16x128xf32>
      %538 = arith.subf %526, %537 : vector<16x128xf32>
      %539 = math.exp %538 : vector<16x128xf32>
      %540 = math.exp %536 : vector<16x128xf32>
      %541 = vector.shape_cast %540 : vector<16x128xf32> to vector<1x16x128xf32>
      %cst_132 = arith.constant dense<0.000000e+00> : vector<1xf32>
      %542 = vector.multi_reduction <add>, %541, %cst_132 [1, 2] : vector<1x16x128xf32> to vector<1xf32>
      %543 = vector.shape_cast %542 : vector<1xf32> to vector<1x1x1xf32>
      %544 = vector.extract %543[0, 0, 0] : f32 from vector<1x1x1xf32>
      %545 = vector.shape_cast %539 : vector<16x128xf32> to vector<1x16x128xf32>
      %cst_133 = arith.constant dense<0.000000e+00> : vector<1xf32>
      %546 = vector.multi_reduction <add>, %545, %cst_133 [1, 2] : vector<1x16x128xf32> to vector<1xf32>
      %547 = vector.shape_cast %546 : vector<1xf32> to vector<1x1x1xf32>
      %548 = vector.extract %547[0, 0, 0] : f32 from vector<1x1x1xf32>
      %549 = arith.subf %538, %536 : vector<16x128xf32>
      %550 = arith.mulf %539, %549 : vector<16x128xf32>
      %551 = vector.shape_cast %550 : vector<16x128xf32> to vector<1x16x128xf32>
      %cst_134 = arith.constant dense<0.000000e+00> : vector<1xf32>
      %552 = vector.multi_reduction <add>, %551, %cst_134 [1, 2] : vector<1x16x128xf32> to vector<1xf32>
      %553 = vector.shape_cast %552 : vector<1xf32> to vector<1x1x1xf32>
      %554 = vector.extract %553[0, 0, 0] : f32 from vector<1x1x1xf32>
      %555 = arith.divf %554, %548 : f32
      %556 = math.log %544 : f32
      %557 = math.log %548 : f32
      %558 = arith.subf %556, %557 : f32
      %559 = arith.addf %555, %558 : f32
      %cst_135 = arith.constant 1.000000e+00 : f32
      %560 = arith.mulf %559, %cst_135 : f32
      scf.yield %524, %560 : f32, f32
    } else {
      %cst_117 = arith.constant 0.000000e+00 : f32
      %cst_118 = arith.constant 0.000000e+00 : f32
      scf.yield %cst_117, %cst_118 : f32, f32
    }
    %430 = arith.addf %395, %429#0 : f32
    %431 = arith.addf %396, %429#1 : f32
    %432 = arith.addf %397, %425 : f32
    %c13_i32 = arith.constant 13 : i32
    %433 = vector.broadcast %c13_i32 : i32 to vector<16x128xi32>
    %434 = arith.cmpi eq, %1, %433 : vector<16x128xi32>
    %435 = arith.extui %434 : vector<16x128xi1> to vector<16x128xi32>
    %436 = arith.sitofp %435 : vector<16x128xi32> to vector<16x128xf32>
    %c1_i32_101 = arith.constant 1 : i32
    %437 = tpu.dynamic_rotate %436 by %c1_i32_101 dim 0 : vector<16x128xf32>, i32 -> vector<16x128xf32>
    %438 = arith.select %5, %437, %12 : vector<16x128xi1>, vector<16x128xf32>
    %c15_i32_102 = arith.constant 15 : i32
    %439 = tpu.dynamic_rotate %436 by %c15_i32_102 dim 0 : vector<16x128xf32>, i32 -> vector<16x128xf32>
    %440 = arith.select %7, %439, %12 : vector<16x128xi1>, vector<16x128xf32>
    %c1_i32_103 = arith.constant 1 : i32
    %441 = tpu.dynamic_rotate %436 by %c1_i32_103 dim 1 : vector<16x128xf32>, i32 -> vector<16x128xf32>
    %442 = arith.select %9, %441, %12 : vector<16x128xi1>, vector<16x128xf32>
    %c127_i32_104 = arith.constant 127 : i32
    %443 = tpu.dynamic_rotate %436 by %c127_i32_104 dim 1 : vector<16x128xf32>, i32 -> vector<16x128xf32>
    %444 = arith.select %11, %443, %12 : vector<16x128xi1>, vector<16x128xf32>
    %445 = arith.maximumf %436, %438 : vector<16x128xf32>
    %446 = arith.maximumf %440, %442 : vector<16x128xf32>
    %447 = arith.maximumf %445, %446 : vector<16x128xf32>
    %448 = arith.maximumf %447, %444 : vector<16x128xf32>
    %449 = arith.minimumf %436, %438 : vector<16x128xf32>
    %450 = arith.minimumf %440, %442 : vector<16x128xf32>
    %451 = arith.minimumf %449, %450 : vector<16x128xf32>
    %452 = arith.minimumf %451, %444 : vector<16x128xf32>
    %453 = arith.subf %448, %452 : vector<16x128xf32>
    %cst_105 = arith.constant 1.000000e+00 : f32
    %454 = vector.broadcast %cst_105 : f32 to vector<16x128xf32>
    %455 = arith.subf %454, %453 : vector<16x128xf32>
    %456 = arith.mulf %436, %455 : vector<16x128xf32>
    %457 = vector.shape_cast %453 : vector<16x128xf32> to vector<1x16x128xf32>
    %cst_106 = arith.constant dense<0.000000e+00> : vector<1xf32>
    %458 = vector.multi_reduction <add>, %457, %cst_106 [1, 2] : vector<1x16x128xf32> to vector<1xf32>
    %459 = vector.shape_cast %458 : vector<1xf32> to vector<1x1x1xf32>
    %460 = vector.extract %459[0, 0, 0] : f32 from vector<1x1x1xf32>
    %cst_107 = arith.constant 0.000000e+00 : f32
    %461 = arith.cmpf ogt, %460, %cst_107 : f32
    %462 = arith.extui %461 : i1 to i32
    %c0_i32_108 = arith.constant 0 : i32
    %463 = arith.cmpi ne, %462, %c0_i32_108 : i32
    %464:2 = scf.if %463 -> (f32, f32) {
      %c0_117 = arith.constant 0 : index
      %c13 = arith.constant 13 : index
      %c0_118 = arith.constant 0 : index
      %c0_119 = arith.constant 0 : index
      %485 = vector.load %arg3[%c0_117, %c13, %c0_118, %c0_119] : memref<1x14x16x128xf32, #tpu.memory_space<vmem>>, vector<1x1x16x128xf32>
      %486 = vector.shape_cast %485 : vector<1x1x16x128xf32> to vector<16x128xf32>
      %c0_120 = arith.constant 0 : index
      %c13_121 = arith.constant 13 : index
      %c0_122 = arith.constant 0 : index
      %c0_123 = arith.constant 0 : index
      %487 = vector.load %arg4[%c0_120, %c13_121, %c0_122, %c0_123] : memref<1x14x16x128xf32, #tpu.memory_space<vmem>>, vector<1x1x16x128xf32>
      %488 = vector.shape_cast %487 : vector<1x1x16x128xf32> to vector<16x128xf32>
      %489 = arith.mulf %486, %453 : vector<16x128xf32>
      %490 = arith.mulf %488, %453 : vector<16x128xf32>
      %491 = vector.shape_cast %489 : vector<16x128xf32> to vector<1x16x128xf32>
      %cst_124 = arith.constant dense<0xFF800000> : vector<1xf32>
      %492 = vector.multi_reduction <maximumf>, %491, %cst_124 [1, 2] : vector<1x16x128xf32> to vector<1xf32>
      %493 = vector.shape_cast %492 : vector<1xf32> to vector<1x1x1xf32>
      %494 = vector.extract %493[0, 0, 0] : f32 from vector<1x1x1xf32>
      %495 = vector.shape_cast %490 : vector<16x128xf32> to vector<1x16x128xf32>
      %cst_125 = arith.constant dense<0xFF800000> : vector<1xf32>
      %496 = vector.multi_reduction <maximumf>, %495, %cst_125 [1, 2] : vector<1x16x128xf32> to vector<1xf32>
      %497 = vector.shape_cast %496 : vector<1xf32> to vector<1x1x1xf32>
      %498 = vector.extract %497[0, 0, 0] : f32 from vector<1x1x1xf32>
      %499 = vector.broadcast %494 : f32 to vector<16x128xf32>
      %500 = arith.subf %489, %499 : vector<16x128xf32>
      %501 = vector.broadcast %498 : f32 to vector<16x128xf32>
      %502 = arith.subf %490, %501 : vector<16x128xf32>
      %503 = math.exp %502 : vector<16x128xf32>
      %504 = math.exp %500 : vector<16x128xf32>
      %505 = vector.shape_cast %504 : vector<16x128xf32> to vector<1x16x128xf32>
      %cst_126 = arith.constant dense<0.000000e+00> : vector<1xf32>
      %506 = vector.multi_reduction <add>, %505, %cst_126 [1, 2] : vector<1x16x128xf32> to vector<1xf32>
      %507 = vector.shape_cast %506 : vector<1xf32> to vector<1x1x1xf32>
      %508 = vector.extract %507[0, 0, 0] : f32 from vector<1x1x1xf32>
      %509 = vector.shape_cast %503 : vector<16x128xf32> to vector<1x16x128xf32>
      %cst_127 = arith.constant dense<0.000000e+00> : vector<1xf32>
      %510 = vector.multi_reduction <add>, %509, %cst_127 [1, 2] : vector<1x16x128xf32> to vector<1xf32>
      %511 = vector.shape_cast %510 : vector<1xf32> to vector<1x1x1xf32>
      %512 = vector.extract %511[0, 0, 0] : f32 from vector<1x1x1xf32>
      %513 = arith.subf %502, %500 : vector<16x128xf32>
      %514 = arith.mulf %503, %513 : vector<16x128xf32>
      %515 = vector.shape_cast %514 : vector<16x128xf32> to vector<1x16x128xf32>
      %cst_128 = arith.constant dense<0.000000e+00> : vector<1xf32>
      %516 = vector.multi_reduction <add>, %515, %cst_128 [1, 2] : vector<1x16x128xf32> to vector<1xf32>
      %517 = vector.shape_cast %516 : vector<1xf32> to vector<1x1x1xf32>
      %518 = vector.extract %517[0, 0, 0] : f32 from vector<1x1x1xf32>
      %519 = arith.divf %518, %512 : f32
      %520 = math.log %508 : f32
      %521 = math.log %512 : f32
      %522 = arith.subf %520, %521 : f32
      %523 = arith.addf %519, %522 : f32
      %cst_129 = arith.constant 1.000000e+00 : f32
      %524 = arith.mulf %523, %cst_129 : f32
      %525 = arith.mulf %486, %456 : vector<16x128xf32>
      %526 = arith.mulf %488, %456 : vector<16x128xf32>
      %527 = vector.shape_cast %525 : vector<16x128xf32> to vector<1x16x128xf32>
      %cst_130 = arith.constant dense<0xFF800000> : vector<1xf32>
      %528 = vector.multi_reduction <maximumf>, %527, %cst_130 [1, 2] : vector<1x16x128xf32> to vector<1xf32>
      %529 = vector.shape_cast %528 : vector<1xf32> to vector<1x1x1xf32>
      %530 = vector.extract %529[0, 0, 0] : f32 from vector<1x1x1xf32>
      %531 = vector.shape_cast %526 : vector<16x128xf32> to vector<1x16x128xf32>
      %cst_131 = arith.constant dense<0xFF800000> : vector<1xf32>
      %532 = vector.multi_reduction <maximumf>, %531, %cst_131 [1, 2] : vector<1x16x128xf32> to vector<1xf32>
      %533 = vector.shape_cast %532 : vector<1xf32> to vector<1x1x1xf32>
      %534 = vector.extract %533[0, 0, 0] : f32 from vector<1x1x1xf32>
      %535 = vector.broadcast %530 : f32 to vector<16x128xf32>
      %536 = arith.subf %525, %535 : vector<16x128xf32>
      %537 = vector.broadcast %534 : f32 to vector<16x128xf32>
      %538 = arith.subf %526, %537 : vector<16x128xf32>
      %539 = math.exp %538 : vector<16x128xf32>
      %540 = math.exp %536 : vector<16x128xf32>
      %541 = vector.shape_cast %540 : vector<16x128xf32> to vector<1x16x128xf32>
      %cst_132 = arith.constant dense<0.000000e+00> : vector<1xf32>
      %542 = vector.multi_reduction <add>, %541, %cst_132 [1, 2] : vector<1x16x128xf32> to vector<1xf32>
      %543 = vector.shape_cast %542 : vector<1xf32> to vector<1x1x1xf32>
      %544 = vector.extract %543[0, 0, 0] : f32 from vector<1x1x1xf32>
      %545 = vector.shape_cast %539 : vector<16x128xf32> to vector<1x16x128xf32>
      %cst_133 = arith.constant dense<0.000000e+00> : vector<1xf32>
      %546 = vector.multi_reduction <add>, %545, %cst_133 [1, 2] : vector<1x16x128xf32> to vector<1xf32>
      %547 = vector.shape_cast %546 : vector<1xf32> to vector<1x1x1xf32>
      %548 = vector.extract %547[0, 0, 0] : f32 from vector<1x1x1xf32>
      %549 = arith.subf %538, %536 : vector<16x128xf32>
      %550 = arith.mulf %539, %549 : vector<16x128xf32>
      %551 = vector.shape_cast %550 : vector<16x128xf32> to vector<1x16x128xf32>
      %cst_134 = arith.constant dense<0.000000e+00> : vector<1xf32>
      %552 = vector.multi_reduction <add>, %551, %cst_134 [1, 2] : vector<1x16x128xf32> to vector<1xf32>
      %553 = vector.shape_cast %552 : vector<1xf32> to vector<1x1x1xf32>
      %554 = vector.extract %553[0, 0, 0] : f32 from vector<1x1x1xf32>
      %555 = arith.divf %554, %548 : f32
      %556 = math.log %544 : f32
      %557 = math.log %548 : f32
      %558 = arith.subf %556, %557 : f32
      %559 = arith.addf %555, %558 : f32
      %cst_135 = arith.constant 1.000000e+00 : f32
      %560 = arith.mulf %559, %cst_135 : f32
      scf.yield %524, %560 : f32, f32
    } else {
      %cst_117 = arith.constant 0.000000e+00 : f32
      %cst_118 = arith.constant 0.000000e+00 : f32
      scf.yield %cst_117, %cst_118 : f32, f32
    }
    %465 = arith.addf %430, %464#0 : f32
    %466 = arith.addf %431, %464#1 : f32
    %467 = arith.addf %432, %460 : f32
    %468 = tpu.iota {dimensions = array<i32: 0>} : vector<8x128xi32>
    %c0_i32_109 = arith.constant 0 : i32
    %469 = vector.broadcast %c0_i32_109 : i32 to vector<8x128xi32>
    %470 = arith.cmpi eq, %468, %469 : vector<8x128xi32>
    %c1_i32_110 = arith.constant 1 : i32
    %471 = vector.broadcast %c1_i32_110 : i32 to vector<8x128xi32>
    %472 = arith.cmpi eq, %468, %471 : vector<8x128xi32>
    %c2_i32_111 = arith.constant 2 : i32
    %473 = vector.broadcast %c2_i32_111 : i32 to vector<8x128xi32>
    %474 = arith.cmpi eq, %468, %473 : vector<8x128xi32>
    %cst_112 = arith.constant 0.000000e+00 : f32
    %475 = vector.broadcast %467 : f32 to vector<8x128xf32>
    %476 = vector.broadcast %cst_112 : f32 to vector<8x128xf32>
    %477 = arith.select %474, %475, %476 : vector<8x128xi1>, vector<8x128xf32>
    %478 = vector.broadcast %466 : f32 to vector<8x128xf32>
    %479 = arith.select %472, %478, %477 : vector<8x128xi1>, vector<8x128xf32>
    %480 = vector.broadcast %465 : f32 to vector<8x128xf32>
    %481 = arith.select %470, %480, %479 : vector<8x128xi1>, vector<8x128xf32>
    %c0_113 = arith.constant 0 : index
    %c0_114 = arith.constant 0 : index
    %c0_115 = arith.constant 0 : index
    %c0_116 = arith.constant 0 : index
    %482 = vector.load %arg5[%c0_113, %c0_114, %c0_115, %c0_116] : memref<1x1x8x128xf32, #tpu.memory_space<vmem>>, vector<1x1x8x128xf32>
    %483 = vector.shape_cast %482 : vector<1x1x8x128xf32> to vector<8x128xf32>
    %484 = vector.shape_cast %481 : vector<8x128xf32> to vector<1x1x8x128xf32>
    tpu.vector_store %arg5[%c0_113, %c0_114, %c0_115, %c0_116], %484 {strides = array<i32>} : memref<1x1x8x128xf32, #tpu.memory_space<vmem>>, vector<1x1x8x128xf32>,
    return
  }
  func.func @transform_0(%arg0: i32, %arg1: i32) -> (i32, i32, i32, i32) {
    %c0_i32 = arith.constant 0 : i32
    %c0_i32_0 = arith.constant 0 : i32
    %c0_i32_1 = arith.constant 0 : i32
    %c0_i32_2 = arith.constant 0 : i32
    return %arg0, %c0_i32, %c0_i32_0, %c0_i32_1 : i32, i32, i32, i32
  }
  func.func @transform_1(%arg0: i32, %arg1: i32) -> (i32, i32, i32, i32) {
    %c0_i32 = arith.constant 0 : i32
    %c0_i32_0 = arith.constant 0 : i32
    %c0_i32_1 = arith.constant 0 : i32
    return %arg0, %arg1, %c0_i32, %c0_i32_0 : i32, i32, i32, i32
  }
  func.func @transform_2(%arg0: i32, %arg1: i32) -> (i32, i32, i32, i32) {
    %c0_i32 = arith.constant 0 : i32
    %c0_i32_0 = arith.constant 0 : i32
    %c0_i32_1 = arith.constant 0 : i32
    return %arg0, %arg1, %c0_i32, %c0_i32_0 : i32, i32, i32, i32
  }
  func.func @transform_3(%arg0: i32, %arg1: i32) -> (i32, i32, i32, i32) {
    %c0_i32 = arith.constant 0 : i32
    %c0_i32_0 = arith.constant 0 : i32
    %c0_i32_1 = arith.constant 0 : i32
    return %arg0, %arg1, %c0_i32, %c0_i32_0 : i32, i32, i32, i32
  }
}

</mosaic_0001>

<llo_original>
// kernel: tpu_custom_call.1
$region0: #{tpu_custom_call.1}
  #allocation0 [shape = 'u32[]', space=smem, size = 0x4, offset = 0x4, fixed_abs, tag = 'smem constant byte address 0x4 - core index']
  #allocation1 [shape = 'u32[144,128]{1,0:T(1,128)}', space=vmem, size = 0x12000, scoped, tag = 'internal scratch']
  %s0 = inlined_call_operand.hbm [shape: s32[2,1,16,128], index: 0, kind: input, shape index: {}]
  %s1 = inlined_call_operand.hbm [shape: f32[2,14,16,128], index: 1, kind: input, shape index: {}]
  %s2 = inlined_call_operand.hbm [shape: f32[2,14,16,128], index: 2, kind: input, shape index: {}]
  %s3 = inlined_call_operand.hbm [shape: f32[2,1,8,128], index: 3, kind: output, shape index: {}]
  %s4 = sld [smem:[#allocation0]]
  $region161: #{tpu_custom_call.1} parent=0
    _
  %s6 = ssub.s32 1, %s4
  %s7 = scalar_select 0, %s6, %s4
  $region1: #{tpu_custom_call.1} parent=0
    #allocation2 [shape = 'u8[16384]{0}', space=vmem, size = 0x4000, scoped, tag = 'input window, operand 0']
    #allocation3 [shape = 's32[2]{0}', space=sflag, size = 0x8, scoped, tag = 'scoped memory for tpu_custom_call.1']
    #allocation4 [shape = 's32[2]{0}', space=sflag, size = 0x8, scoped, tag = 'scoped memory for tpu_custom_call.1']
    #allocation5 [shape = 'u8[229376]{0}', space=vmem, size = 0x38000, scoped, tag = 'input window, operand 1']
    #allocation6 [shape = 's32[2]{0}', space=sflag, size = 0x8, scoped, tag = 'scoped memory for tpu_custom_call.1']
    #allocation7 [shape = 'u8[229376]{0}', space=vmem, size = 0x38000, scoped, tag = 'input window, operand 2']
    #allocation8 [shape = 'u8[8192]{0}', space=vmem, size = 0x2000, scoped, tag = 'output window, operand 0']
    %8 = vsyncpa [#allocation3], 0
    %s9 = scalar_lea.sflag [#allocation3], 1
    %10 = vsyncpa %s9, 0
    %11 = vsyncpa [#allocation6], 0
    %s12 = scalar_lea.sflag [#allocation6], 1
    %13 = vsyncpa %s12, 0
    %14 = vsyncpa [#allocation4], 0
    %s15 = scalar_lea.sflag [#allocation4], 1
    %16 = vsyncpa %s15, 0
    loop: start=0, step=1, limit=4
    $region2: #{tpu_custom_call.1} parent=1 // loop_pre_header
      _
    $region3: #{tpu_custom_call.1} parent=1 // loop_header
      %s18 = sphi 0, %s22
      %p19 = scmp.ge.s32.totalorder %s18, 4
      %s25 = sphi 0, %s37
      %s26 = sphi 0, %s33
      %s27 = sphi 0, %s25
      %s28 = sphi 0, %s26
      %s29 = sphi 0, %s27
      %s30 = sphi 0, %s28
      %s40 = sphi 0, %s42
      %s43 = sphi 0, %s40
      %s44 = sphi 0, %s43
      %s60 = sphi 0, %s44
      %s68 = sphi 0, %s70
      %s71 = sphi 0, %s68
      %s72 = sphi 0, %s71
      %s88 = sphi 0, %s72
      %s96 = sphi 0, %s98
      %s99 = sphi 0, %s96
      %s100 = sphi 0, %s99
      %s116 = sphi 0, %s100
      %s124 = sphi 0, %s126
      %s127 = sphi 0, %s124
      %s128 = sphi 0, %s127
      %s144 = sphi 0, %s128
    $region4: #{tpu_custom_call.1} parent=1 // loop_header_branch
      %21 = sbr.rel (%p19) target = $region8
    $region5: #{tpu_custom_call.1} parent=1 // loop_body
      %s23 = ssub.s32 %s18, 1
      %s24 = ssub.s32 %s18, 2
      %s31 = sadd.s32 1, %s26
      %p32 = scmp.ge.s32.totalorder %s31, 1
      %s33 = scalar_select %p32, 0, %s31
      %s34 = sadd.s32 1, %s25
      %s35 = scalar_select %p32, %s34, %s25
      %p36 = scmp.ge.s32.totalorder %s35, 2
      %s37 = scalar_select %p36, 0, %s35
      %s38 = ssub.s32 %s25, %s37
      %p39 = scmp.eq.s32.totalorder %s38, 0
      %s41 = sadd.s32 %s40, 1
      %s42 = scalar_select %p39, %s40, %s41
      %p45 = pneg %p39
      %p46 = scmp.eq.s32.totalorder %s18, 1
      %p47 = por %p45, %p46
      %p48 = scmp.ne.s32.totalorder %s40, %s43
      %p49 = scmp.eq.s32.totalorder %s18, 0
      %p50 = por %p48, %p49
      %p51 = scmp.ne.s32.totalorder %s40, %s43
      %p52 = scmp.eq.s32.totalorder %s23, 1
      %p53 = por %p51, %p52
      %p54 = scmp.ne.s32.totalorder %s43, %s44
      %p55 = scmp.eq.s32.totalorder %s23, 0
      %p56 = por %p54, %p55
      %p57 = scmp.ne.s32.totalorder %s43, %s44
      %p58 = scmp.eq.s32.totalorder %s24, 1
      %p59 = por %p57, %p58
      %p61 = scmp.ne.s32.totalorder %s44, %s60
      %p62 = scmp.eq.s32.totalorder %s24, 0
      %p63 = por %p61, %p62
      %s64 = ssub.s32 %s25, %s37
      %s65 = ssub.s32 %s26, %s33
      %s66 = sor.u32 %s64, %s65
      %p67 = scmp.eq.s32.totalorder %s66, 0
      %s69 = sadd.s32 %s68, 1
      %s70 = scalar_select %p67, %s68, %s69
      %p73 = pneg %p67
      %p74 = scmp.eq.s32.totalorder %s18, 1
      %p75 = por %p73, %p74
      %p76 = scmp.ne.s32.totalorder %s68, %s71
      %p77 = scmp.eq.s32.totalorder %s18, 0
      %p78 = por %p76, %p77
      %p79 = scmp.ne.s32.totalorder %s68, %s71
      %p80 = scmp.eq.s32.totalorder %s23, 1
      %p81 = por %p79, %p80
      %p82 = scmp.ne.s32.totalorder %s71, %s72
      %p83 = scmp.eq.s32.totalorder %s23, 0
      %p84 = por %p82, %p83
      %p85 = scmp.ne.s32.totalorder %s71, %s72
      %p86 = scmp.eq.s32.totalorder %s24, 1
      %p87 = por %p85, %p86
      %p89 = scmp.ne.s32.totalorder %s72, %s88
      %p90 = scmp.eq.s32.totalorder %s24, 0
      %p91 = por %p89, %p90
      %s92 = ssub.s32 %s25, %s37
      %s93 = ssub.s32 %s26, %s33
      %s94 = sor.u32 %s92, %s93
      %p95 = scmp.eq.s32.totalorder %s94, 0
      %s97 = sadd.s32 %s96, 1
      %s98 = scalar_select %p95, %s96, %s97
      %p101 = pneg %p95
      %p102 = scmp.eq.s32.totalorder %s18, 1
      %p103 = por %p101, %p102
      %p104 = scmp.ne.s32.totalorder %s96, %s99
      %p105 = scmp.eq.s32.totalorder %s18, 0
      %p106 = por %p104, %p105
      %p107 = scmp.ne.s32.totalorder %s96, %s99
      %p108 = scmp.eq.s32.totalorder %s23, 1
      %p109 = por %p107, %p108
      %p110 = scmp.ne.s32.totalorder %s99, %s100
      %p111 = scmp.eq.s32.totalorder %s23, 0
      %p112 = por %p110, %p111
      %p113 = scmp.ne.s32.totalorder %s99, %s100
      %p114 = scmp.eq.s32.totalorder %s24, 1
      %p115 = por %p113, %p114
      %p117 = scmp.ne.s32.totalorder %s100, %s116
      %p118 = scmp.eq.s32.totalorder %s24, 0
      %p119 = por %p117, %p118
      %s120 = ssub.s32 %s25, %s37
      %s121 = ssub.s32 %s26, %s33
      %s122 = sor.u32 %s120, %s121
      %p123 = scmp.eq.s32.totalorder %s122, 0
      %s125 = sadd.s32 %s124, 1
      %s126 = scalar_select %p123, %s124, %s125
      %p129 = pneg %p123
      %p130 = scmp.eq.s32.totalorder %s18, 1
      %p131 = por %p129, %p130
      %p132 = scmp.ne.s32.totalorder %s124, %s127
      %p133 = scmp.eq.s32.totalorder %s18, 0
      %p134 = por %p132, %p133
      %p135 = scmp.ne.s32.totalorder %s124, %s127
      %p136 = scmp.eq.s32.totalorder %s23, 1
      %p137 = por %p135, %p136
      %p138 = scmp.ne.s32.totalorder %s127, %s128
      %p139 = scmp.eq.s32.totalorder %s23, 0
      %p140 = por %p138, %p139
      %p141 = scmp.ne.s32.totalorder %s127, %s128
      %p142 = scmp.eq.s32.totalorder %s24, 1
      %p143 = por %p141, %p142
      %p145 = scmp.ne.s32.totalorder %s128, %s144
      %p146 = scmp.eq.s32.totalorder %s24, 0
      %p147 = por %p145, %p146
      %p148 = scmp.le.s32.totalorder 1, %s18
      %p149 = scmp.lt.s32.totalorder %s18, 3
      %p150 = pnand %p148, %p149
      %p151 = pneg %p150
      // Predicated region
      $region9: #{tpu_custom_call.1} parent=5 // pred_check
        _
      $region10: #{tpu_custom_call.1} parent=5 // pred_check_branch
        %153 = sbr.rel (%p150) target = $region12
      $region11: #{tpu_custom_call.1} parent=5 // pred_region
        %s154 = ssub.s32 %s18, 1
      $region12: #{tpu_custom_call.1} parent=5 // pred_fallthru
        _
      %p155 = scmp.lt.s32.totalorder %s18, 2
      // Predicated region
      $region13: #{tpu_custom_call.1} parent=5 // pred_check
        %p156 = pneg %p155
      $region14: #{tpu_custom_call.1} parent=5 // pred_check_branch
        %158 = sbr.rel (%p156) target = $region16
      $region15: #{tpu_custom_call.1} parent=5 // pred_region
        // Predicated region
        $region17: #{tpu_custom_call.1} parent=15 // pred_check
          %p159 = pneg %p50
        $region18: #{tpu_custom_call.1} parent=15 // pred_check_branch
          %161 = sbr.rel (%p159) target = $region20
        $region19: #{tpu_custom_call.1} parent=15 // pred_region
          %s162 = sand.u32 %s40, 1
          %s163 = scalar_lea.sflag [#allocation3], %s162
          %s164 = sand.u32 %s40, 1
          %s165 = smul.addr %s164, 16
          %s166 = scalar_lea.vmem [#allocation2], %s165
          %s168 = ssub.s32 256, 256
          %169 = vsyncadd %s163, %s168
          %s170 = smul.addr %s25, 2
          %s171 = smul.addr %s170, 128
          %s172 = scalar_lea.hbm %s0, %s171
          %s173 = sshll.u32 %s166, 4
          %s174 = int_to_ptr.vmem [resolvable:$true] %s173
          %179 = dma.hbm_to_vmem [thread:$0]  %s172, 256, %s174, %s163, 128, 128, 8
        $region20: #{tpu_custom_call.1} parent=15 // pred_fallthru
          _
        // Predicated region
        $region21: #{tpu_custom_call.1} parent=15 // pred_check
          %p180 = pneg %p78
        $region22: #{tpu_custom_call.1} parent=15 // pred_check_branch
          %182 = sbr.rel (%p180) target = $region24
        $region23: #{tpu_custom_call.1} parent=15 // pred_region
          %s183 = sand.u32 %s18, 1
          %s184 = scalar_lea.sflag [#allocation6], %s183
          %s185 = sand.u32 %s68, 1
          %s186 = smul.addr %s185, 224
          %s187 = scalar_lea.vmem [#allocation5], %s186
          %s188 = smul.u32 14, %s26
          %s190 = ssub.s32 3584, 3584
          %191 = vsyncadd %s184, %s190
          %s192 = smul.addr %s188, 2
          %s193 = smul.addr %s25, 28
          %s194 = sadd.s32 %s192, %s193
          %s195 = smul.addr %s194, 128
          %s196 = scalar_lea.hbm %s1, %s195
          %s197 = sshll.u32 %s187, 4
          %s198 = int_to_ptr.vmem [resolvable:$true] %s197
          %203 = dma.hbm_to_vmem [thread:$0]  %s196, 3584, %s198, %s184, 128, 128, 8
        $region24: #{tpu_custom_call.1} parent=15 // pred_fallthru
          _
        // Predicated region
        $region25: #{tpu_custom_call.1} parent=15 // pred_check
          %p204 = pneg %p106
        $region26: #{tpu_custom_call.1} parent=15 // pred_check_branch
          %206 = sbr.rel (%p204) target = $region28
        $region27: #{tpu_custom_call.1} parent=15 // pred_region
          %s207 = sand.u32 %s18, 1
          %s208 = scalar_lea.sflag [#allocation6], %s207
          %s209 = sand.u32 %s96, 1
          %s210 = smul.addr %s209, 224
          %s211 = scalar_lea.vmem [#allocation7], %s210
          %s212 = smul.u32 14, %s26
          %s214 = ssub.s32 3584, 3584
          %215 = vsyncadd %s208, %s214
          %s216 = smul.addr %s212, 2
          %s217 = smul.addr %s25, 28
          %s218 = sadd.s32 %s216, %s217
          %s219 = smul.addr %s218, 128
          %s220 = scalar_lea.hbm %s2, %s219
          %s221 = sshll.u32 %s211, 4
          %s222 = int_to_ptr.vmem [resolvable:$true] %s221
          %227 = dma.hbm_to_vmem [thread:$0]  %s220, 3584, %s222, %s208, 128, 128, 8
        $region28: #{tpu_custom_call.1} parent=15 // pred_fallthru
          _
      $region16: #{tpu_custom_call.1} parent=5 // pred_fallthru
        _
      %p228 = scmp.le.s32.totalorder 1, %s18
      %p229 = scmp.lt.s32.totalorder %s18, 3
      %p230 = pnand %p228, %p229
      %p231 = pneg %p230
      // Predicated region
      $region29: #{tpu_custom_call.1} parent=5 // pred_check
        _
      $region30: #{tpu_custom_call.1} parent=5 // pred_check_branch
        %233 = sbr.rel (%p230) target = $region32
      $region31: #{tpu_custom_call.1} parent=5 // pred_region
        %s234 = ssub.s32 %s18, 1
        %s235 = sand.u32 %s43, 1
        %s236 = scalar_lea.sflag [#allocation3], %s235
        %s237 = sand.u32 %s43, 1
        %s238 = smul.addr %s237, 16
        %s239 = scalar_lea.vmem [#allocation2], %s238
        // Predicated region
        $region33: #{tpu_custom_call.1} parent=31 // pred_check
          %p240 = pneg %p56
        $region34: #{tpu_custom_call.1} parent=31 // pred_check_branch
          %242 = sbr.rel (%p240) target = $region36
        $region35: #{tpu_custom_call.1} parent=31 // pred_region
          %243 = dma.done %s236, 256
        $region36: #{tpu_custom_call.1} parent=31 // pred_fallthru
          _
        %s244 = sand.u32 %s23, 1
        %s245 = scalar_lea.sflag [#allocation6], %s244
        %s246 = sand.u32 %s71, 1
        %s247 = smul.addr %s246, 224
        %s248 = scalar_lea.vmem [#allocation5], %s247
        // Predicated region
        $region37: #{tpu_custom_call.1} parent=31 // pred_check
          %p249 = pneg %p84
        $region38: #{tpu_custom_call.1} parent=31 // pred_check_branch
          %251 = sbr.rel (%p249) target = $region40
        $region39: #{tpu_custom_call.1} parent=31 // pred_region
          %252 = dma.done %s245, 3584
        $region40: #{tpu_custom_call.1} parent=31 // pred_fallthru
          _
        %s253 = sand.u32 %s23, 1
        %s254 = scalar_lea.sflag [#allocation6], %s253
        %s255 = sand.u32 %s99, 1
        %s256 = smul.addr %s255, 224
        %s257 = scalar_lea.vmem [#allocation7], %s256
        // Predicated region
        $region41: #{tpu_custom_call.1} parent=31 // pred_check
          %p258 = pneg %p112
        $region42: #{tpu_custom_call.1} parent=31 // pred_check_branch
          %260 = sbr.rel (%p258) target = $region44
        $region43: #{tpu_custom_call.1} parent=31 // pred_region
          %261 = dma.done %s254, 3584
        $region44: #{tpu_custom_call.1} parent=31 // pred_fallthru
          _
        %s262 = sand.u32 %s43, 1
        %s263 = scalar_lea.sflag [#allocation3], %s262
        %s264 = sand.u32 %s43, 1
        %s265 = smul.addr %s264, 16
        %s266 = scalar_lea.vmem [#allocation2], %s265
        %p267 = pneg %p56
        %p268 = pneg %p53
        %s269 = sand.u32 %s23, 1
        %s270 = scalar_lea.sflag [#allocation6], %s269
        %s271 = sand.u32 %s71, 1
        %s272 = smul.addr %s271, 224
        %s273 = scalar_lea.vmem [#allocation5], %s272
        %p274 = pneg %p84
        %p275 = pneg %p81
        %s276 = sand.u32 %s23, 1
        %s277 = scalar_lea.sflag [#allocation6], %s276
        %s278 = sand.u32 %s99, 1
        %s279 = smul.addr %s278, 224
        %s280 = scalar_lea.vmem [#allocation7], %s279
        %p281 = pneg %p112
        %p282 = pneg %p109
        %p283 = pneg %p140
        %p284 = pneg %p137
        %s285 = sand.u32 %s127, 1
        %s286 = scalar_lea.sflag [#allocation4], %s285
        %s287 = sand.u32 %s127, 1
        %s288 = smul.addr %s287, 8
        %s289 = scalar_lea.vmem [#allocation8], %s288
        %s290 = smul.u32 14, %s28
        %s291 = smul.u32 14, %s28
        %v292 = vld [vmem:[%s239] sm:$0xff]
        %v293 = vld [vmem:[%s239 + $0x8] sm:$0xff]
        %v294 = vlaneseq
        %v295 = vshrl.u32 %v294, 7
        %v296 = vadd.s32 %v295, 8
        %v297 = vlaneseq
        %v298 = vand.u32 %v297, 127
        %vm299 = vcmp.ge.s32.totalorder %v295, 1
        %vm300 = vcmp.ge.s32.totalorder %v296, 1
        %vm301 = vcmp.le.s32.totalorder %v295, 14
        %vm302 = vcmp.le.s32.totalorder %v296, 14
        %vm303 = vcmp.ge.s32.totalorder %v298, 1
        %vm304 = vcmp.le.s32.totalorder %v298, 126
        %vm305 = vcmp.eq.s32.totalorder %v292, 1
        %vm306 = vcmp.eq.s32.totalorder %v293, 1
        %v307 = vsel %vm305, 1, 0
        %v308 = vsel %vm306, 1, 0
        %v309 = vcvt.s32.f32 %v307
        %v310 = vcvt.s32.f32 %v308
        %v311 = vrot.slane %v309, 7
        %v312 = vrot.slane %v310, 7
        %vm313 = vcmp.lt.s32.totalorder %v295, 1
        %v314 = vsel %vm313, %v311, %v312
        %v315 = vsel %vm313, %v312, %v311
        %v316 = vsel %vm299, %v315, 0.0
        %v317 = vsel %vm300, %v314, 0.0
        %v318 = vrot.slane %v309, 1
        %v319 = vrot.slane %v310, 1
        %vm320 = vcmp.lt.s32.totalorder %v295, 7
        %v321 = vsel %vm320, %v318, %v319
        %v322 = vsel %vm320, %v319, %v318
        %v323 = vsel %vm301, %v321, 0.0
        %v324 = vsel %vm302, %v322, 0.0
        %325 = vrot.lane.b32.xlu0 %v309, 1
        %v326 = vpop.permute.xlu0 %325
        %327 = vrot.lane.b32.xlu0 %v310, 1
        %v328 = vpop.permute.xlu0 %327
        %v329 = vsel %vm303, %v326, 0.0
        %v330 = vsel %vm303, %v328, 0.0
        %331 = vrot.lane.b32.xlu0 %v309, 127
        %v332 = vpop.permute.xlu0 %331
        %333 = vrot.lane.b32.xlu0 %v310, 127
        %v334 = vpop.permute.xlu0 %333
        %v335 = vsel %vm304, %v332, 0.0
        %v336 = vsel %vm304, %v334, 0.0
        %v337 = vmax.f32 %v309, %v316
        %v338 = vmax.f32 %v310, %v317
        %v339 = vmax.f32 %v323, %v329
        %v340 = vmax.f32 %v324, %v330
        %v341 = vmax.f32 %v337, %v339
        %v342 = vmax.f32 %v338, %v340
        %v343 = vmax.f32 %v341, %v335
        %v344 = vmax.f32 %v342, %v336
        %v345 = vmin.f32 %v309, %v316
        %v346 = vmin.f32 %v310, %v317
        %v347 = vmin.f32 %v323, %v329
        %v348 = vmin.f32 %v324, %v330
        %v349 = vmin.f32 %v345, %v347
        %v350 = vmin.f32 %v346, %v348
        %v351 = vmin.f32 %v349, %v335
        %v352 = vmin.f32 %v350, %v336
        %v353 = vsub.f32 %v343, %v351
        %v354 = vsub.f32 %v344, %v352
        %v355 = vsub.f32 1.0, %v353
        %v356 = vsub.f32 1.0, %v354
        %v357 = vmul.f32 %v309, %v355
        %v358 = vmul.f32 %v310, %v356
        %v359 = vadd.f32 %v353, %v354
        %360 = vadd.xlane.f32.xlu0 %v359
        %v361 = vpop.xlane.xlu0 %360
        %v362 = vrot.slane %v361, 4
        %v363 = vadd.f32 %v361, %v362
        %v364 = vrot.slane %v363, 2
        %v365 = vadd.f32 %v363, %v364
        %v366 = vrot.slane %v365, 1
        %v367 = vadd.f32 %v365, %v366
        %s368 = vtos %v367
        %p369 = scmp.gt.f32.partialorder %s368, 0.0
        // Predicated region
        $region45: #{tpu_custom_call.1} parent=31 // pred_check
          %p370 = pneg %p369
        $region46: #{tpu_custom_call.1} parent=31 // pred_check_branch
          %372 = sbr.rel (%p370) target = $region48
        $region47: #{tpu_custom_call.1} parent=31 // pred_region
          %s373 = scalar_lea.vmem %s248, 16 [#allocation5]
          %v374 = vld [vmem:[%s373] sm:$0xff]
          %v375 = vld [vmem:[%s373 + $0x8] sm:$0xff]
          %s376 = scalar_lea.vmem %s257, 16 [#allocation7]
          %v377 = vld [vmem:[%s376] sm:$0xff]
          %v378 = vld [vmem:[%s376 + $0x8] sm:$0xff]
          %v379 = vmul.f32 %v374, %v353
          %v380 = vmul.f32 %v375, %v354
          %v381 = vmul.f32 %v377, %v353
          %v382 = vmul.f32 %v378, %v354
          %v383 = vmax.f32 %v379, %v380
          %384 = vmax.xlane.f32.xlu0 %v383
          %v385 = vpop.xlane.xlu0 %384
          %v386 = vrot.slane %v385, 4
          %v387 = vmax.f32 %v385, %v386
          %v388 = vrot.slane %v387, 2
          %v389 = vmax.f32 %v387, %v388
          %v390 = vrot.slane %v389, 1
          %v391 = vmax.f32 %v389, %v390
          %s392 = vtos %v391
          %v393 = vmax.f32 %v381, %v382
          %394 = vmax.xlane.f32.xlu0 %v393
          %v395 = vpop.xlane.xlu0 %394
          %v396 = vrot.slane %v395, 4
          %v397 = vmax.f32 %v395, %v396
          %v398 = vrot.slane %v397, 2
          %v399 = vmax.f32 %v397, %v398
          %v400 = vrot.slane %v399, 1
          %v401 = vmax.f32 %v399, %v400
          %s402 = vtos %v401
          %v403 = vstv %s392
          %v404 = vsub.f32 %v379, %v403
          %v405 = vsub.f32 %v380, %v403
          %v406 = vstv %s402
          %v407 = vsub.f32 %v381, %v406
          %v408 = vsub.f32 %v382, %v406
          %v409 = vmul.f32 %v407, 1.442695
          %v410 = vpow.pop %v409
          %v411 = vmul.f32 %v408, 1.442695
          %v412 = vpow.pop %v411
          %v413 = vmul.f32 %v404, 1.442695
          %v414 = vpow.pop %v413
          %v415 = vmul.f32 %v405, 1.442695
          %v416 = vpow.pop %v415
          %v417 = vadd.f32 %v414, %v416
          %418 = vadd.xlane.f32.xlu0 %v417
          %v419 = vpop.xlane.xlu0 %418
          %v420 = vrot.slane %v419, 4
          %v421 = vadd.f32 %v419, %v420
          %v422 = vrot.slane %v421, 2
          %v423 = vadd.f32 %v421, %v422
          %v424 = vrot.slane %v423, 1
          %v425 = vadd.f32 %v423, %v424
          %s426 = vtos %v425
          %v427 = vadd.f32 %v410, %v412
          %428 = vadd.xlane.f32.xlu0 %v427
          %v429 = vpop.xlane.xlu0 %428
          %v430 = vrot.slane %v429, 4
          %v431 = vadd.f32 %v429, %v430
          %v432 = vrot.slane %v431, 2
          %v433 = vadd.f32 %v431, %v432
          %v434 = vrot.slane %v433, 1
          %v435 = vadd.f32 %v433, %v434
          %s436 = vtos %v435
          %v437 = vsub.f32 %v407, %v404
          %v438 = vsub.f32 %v408, %v405
          %v439 = vmul.f32 %v410, %v437
          %v440 = vmul.f32 %v412, %v438
          %v441 = vadd.f32 %v439, %v440
          %442 = vadd.xlane.f32.xlu0 %v441
          %v443 = vpop.xlane.xlu0 %442
          %v444 = vrot.slane %v443, 4
          %v445 = vadd.f32 %v443, %v444
          %v446 = vrot.slane %v445, 2
          %v447 = vadd.f32 %v445, %v446
          %v448 = vrot.slane %v447, 1
          %v449 = vadd.f32 %v447, %v448
          %s450 = vtos %v449
          %v451 = vstv %s436
          %v452 = vrcp.pop %v451
          %s453 = vtos %v452
          %s454 = smul.f32 %s450, %s453
          %v455 = vstv %s426
          %v456 = vlog2.pop %v455
          %v457 = vmul.f32 %v456, 0.6931472
          %s458 = vtos %v457
          %v459 = vstv %s436
          %v460 = vlog2.pop %v459
          %v461 = vmul.f32 %v460, 0.6931472
          %s462 = vtos %v461
          %s463 = ssub.f32 %s458, %s462
          %s464 = sadd.f32 %s454, %s463
          %v465 = vmul.f32 %v374, %v357
          %v466 = vmul.f32 %v375, %v358
          %v467 = vmul.f32 %v377, %v357
          %v468 = vmul.f32 %v378, %v358
          %v469 = vmax.f32 %v465, %v466
          %470 = vmax.xlane.f32.xlu0 %v469
          %v471 = vpop.xlane.xlu0 %470
          %v472 = vrot.slane %v471, 4
          %v473 = vmax.f32 %v471, %v472
          %v474 = vrot.slane %v473, 2
          %v475 = vmax.f32 %v473, %v474
          %v476 = vrot.slane %v475, 1
          %v477 = vmax.f32 %v475, %v476
          %s478 = vtos %v477
          %v479 = vmax.f32 %v467, %v468
          %480 = vmax.xlane.f32.xlu0 %v479
          %v481 = vpop.xlane.xlu0 %480
          %v482 = vrot.slane %v481, 4
          %v483 = vmax.f32 %v481, %v482
          %v484 = vrot.slane %v483, 2
          %v485 = vmax.f32 %v483, %v484
          %v486 = vrot.slane %v485, 1
          %v487 = vmax.f32 %v485, %v486
          %s488 = vtos %v487
          %v489 = vstv %s478
          %v490 = vsub.f32 %v465, %v489
          %v491 = vsub.f32 %v466, %v489
          %v492 = vstv %s488
          %v493 = vsub.f32 %v467, %v492
          %v494 = vsub.f32 %v468, %v492
          %v495 = vmul.f32 %v493, 1.442695
          %v496 = vpow.pop %v495
          %v497 = vmul.f32 %v494, 1.442695
          %v498 = vpow.pop %v497
          %v499 = vmul.f32 %v490, 1.442695
          %v500 = vpow.pop %v499
          %v501 = vmul.f32 %v491, 1.442695
          %v502 = vpow.pop %v501
          %v503 = vadd.f32 %v500, %v502
          %504 = vadd.xlane.f32.xlu0 %v503
          %v505 = vpop.xlane.xlu0 %504
          %v506 = vrot.slane %v505, 4
          %v507 = vadd.f32 %v505, %v506
          %v508 = vrot.slane %v507, 2
          %v509 = vadd.f32 %v507, %v508
          %v510 = vrot.slane %v509, 1
          %v511 = vadd.f32 %v509, %v510
          %s512 = vtos %v511
          %v513 = vadd.f32 %v496, %v498
          %514 = vadd.xlane.f32.xlu0 %v513
          %v515 = vpop.xlane.xlu0 %514
          %v516 = vrot.slane %v515, 4
          %v517 = vadd.f32 %v515, %v516
          %v518 = vrot.slane %v517, 2
          %v519 = vadd.f32 %v517, %v518
          %v520 = vrot.slane %v519, 1
          %v521 = vadd.f32 %v519, %v520
          %s522 = vtos %v521
          %v523 = vsub.f32 %v493, %v490
          %v524 = vsub.f32 %v494, %v491
          %v525 = vmul.f32 %v496, %v523
          %v526 = vmul.f32 %v498, %v524
          %v527 = vadd.f32 %v525, %v526
          %528 = vadd.xlane.f32.xlu0 %v527
          %v529 = vpop.xlane.xlu0 %528
          %v530 = vrot.slane %v529, 4
          %v531 = vadd.f32 %v529, %v530
          %v532 = vrot.slane %v531, 2
          %v533 = vadd.f32 %v531, %v532
          %v534 = vrot.slane %v533, 1
          %v535 = vadd.f32 %v533, %v534
          %s536 = vtos %v535
          %v537 = vstv %s522
          %v538 = vrcp.pop %v537
          %s539 = vtos %v538
          %s540 = smul.f32 %s536, %s539
          %v541 = vstv %s512
          %v542 = vlog2.pop %v541
          %v543 = vmul.f32 %v542, 0.6931472
          %s544 = vtos %v543
          %v545 = vstv %s522
          %v546 = vlog2.pop %v545
          %v547 = vmul.f32 %v546, 0.6931472
          %s548 = vtos %v547
          %s549 = ssub.f32 %s544, %s548
          %s550 = sadd.f32 %s540, %s549
        $region48: #{tpu_custom_call.1} parent=31 // pred_fallthru
          %s551 = sphi 0, %s464
          %s552 = sphi 0, %s550
        %p553 = pneg %p369
        // Predicated region
        $region49: #{tpu_custom_call.1} parent=31 // pred_check
          _
        $region50: #{tpu_custom_call.1} parent=31 // pred_check_branch
          %555 = sbr.rel (%p369) target = $region52
        $region51: #{tpu_custom_call.1} parent=31 // pred_region
          _
        $region52: #{tpu_custom_call.1} parent=31 // pred_fallthru
          %s556 = sphi %s551, 0.0
          %s557 = sphi %s552, 0.0
        %s558 = sadd.f32 %s556, 0.0
        %s559 = sadd.f32 %s557, 0.0
        %s560 = sadd.f32 %s368, 0.0
        %vm561 = vcmp.eq.s32.totalorder %v292, 2
        %vm562 = vcmp.eq.s32.totalorder %v293, 2
        %v563 = vsel %vm561, 1, 0
        %v564 = vsel %vm562, 1, 0
        %v565 = vcvt.s32.f32 %v563
        %v566 = vcvt.s32.f32 %v564
        %v567 = vrot.slane %v565, 7
        %v568 = vrot.slane %v566, 7
        %v569 = vsel %vm313, %v567, %v568
        %v570 = vsel %vm313, %v568, %v567
        %v571 = vsel %vm299, %v570, 0.0
        %v572 = vsel %vm300, %v569, 0.0
        %v573 = vrot.slane %v565, 1
        %v574 = vrot.slane %v566, 1
        %v575 = vsel %vm320, %v573, %v574
        %v576 = vsel %vm320, %v574, %v573
        %v577 = vsel %vm301, %v575, 0.0
        %v578 = vsel %vm302, %v576, 0.0
        %579 = vrot.lane.b32.xlu0 %v565, 1
        %v580 = vpop.permute.xlu0 %579
        %581 = vrot.lane.b32.xlu0 %v566, 1
        %v582 = vpop.permute.xlu0 %581
        %v583 = vsel %vm303, %v580, 0.0
        %v584 = vsel %vm303, %v582, 0.0
        %585 = vrot.lane.b32.xlu0 %v565, 127
        %v586 = vpop.permute.xlu0 %585
        %587 = vrot.lane.b32.xlu0 %v566, 127
        %v588 = vpop.permute.xlu0 %587
        %v589 = vsel %vm304, %v586, 0.0
        %v590 = vsel %vm304, %v588, 0.0
        %v591 = vmax.f32 %v565, %v571
        %v592 = vmax.f32 %v566, %v572
        %v593 = vmax.f32 %v577, %v583
        %v594 = vmax.f32 %v578, %v584
        %v595 = vmax.f32 %v591, %v593
        %v596 = vmax.f32 %v592, %v594
        %v597 = vmax.f32 %v595, %v589
        %v598 = vmax.f32 %v596, %v590
        %v599 = vmin.f32 %v565, %v571
        %v600 = vmin.f32 %v566, %v572
        %v601 = vmin.f32 %v577, %v583
        %v602 = vmin.f32 %v578, %v584
        %v603 = vmin.f32 %v599, %v601
        %v604 = vmin.f32 %v600, %v602
        %v605 = vmin.f32 %v603, %v589
        %v606 = vmin.f32 %v604, %v590
        %v607 = vsub.f32 %v597, %v605
        %v608 = vsub.f32 %v598, %v606
        %v609 = vsub.f32 1.0, %v607
        %v610 = vsub.f32 1.0, %v608
        %v611 = vmul.f32 %v565, %v609
        %v612 = vmul.f32 %v566, %v610
        %v613 = vadd.f32 %v607, %v608
        %614 = vadd.xlane.f32.xlu0 %v613
        %v615 = vpop.xlane.xlu0 %614
        %v616 = vrot.slane %v615, 4
        %v617 = vadd.f32 %v615, %v616
        %v618 = vrot.slane %v617, 2
        %v619 = vadd.f32 %v617, %v618
        %v620 = vrot.slane %v619, 1
        %v621 = vadd.f32 %v619, %v620
        %s622 = vtos %v621
        %p623 = scmp.gt.f32.partialorder %s622, 0.0
        // Predicated region
        $region53: #{tpu_custom_call.1} parent=31 // pred_check
          %p624 = pneg %p623
        $region54: #{tpu_custom_call.1} parent=31 // pred_check_branch
          %626 = sbr.rel (%p624) target = $region56
        $region55: #{tpu_custom_call.1} parent=31 // pred_region
          %s627 = scalar_lea.vmem %s248, 32 [#allocation5]
          %v628 = vld [vmem:[%s627] sm:$0xff]
          %v629 = vld [vmem:[%s627 + $0x8] sm:$0xff]
          %s630 = scalar_lea.vmem %s257, 32 [#allocation7]
          %v631 = vld [vmem:[%s630] sm:$0xff]
          %v632 = vld [vmem:[%s630 + $0x8] sm:$0xff]
          %v633 = vmul.f32 %v628, %v607
          %v634 = vmul.f32 %v629, %v608
          %v635 = vmul.f32 %v631, %v607
          %v636 = vmul.f32 %v632, %v608
          %v637 = vmax.f32 %v633, %v634
          %638 = vmax.xlane.f32.xlu0 %v637
          %v639 = vpop.xlane.xlu0 %638
          %v640 = vrot.slane %v639, 4
          %v641 = vmax.f32 %v639, %v640
          %v642 = vrot.slane %v641, 2
          %v643 = vmax.f32 %v641, %v642
          %v644 = vrot.slane %v643, 1
          %v645 = vmax.f32 %v643, %v644
          %s646 = vtos %v645
          %v647 = vmax.f32 %v635, %v636
          %648 = vmax.xlane.f32.xlu0 %v647
          %v649 = vpop.xlane.xlu0 %648
          %v650 = vrot.slane %v649, 4
          %v651 = vmax.f32 %v649, %v650
          %v652 = vrot.slane %v651, 2
          %v653 = vmax.f32 %v651, %v652
          %v654 = vrot.slane %v653, 1
          %v655 = vmax.f32 %v653, %v654
          %s656 = vtos %v655
          %v657 = vstv %s646
          %v658 = vsub.f32 %v633, %v657
          %v659 = vsub.f32 %v634, %v657
          %v660 = vstv %s656
          %v661 = vsub.f32 %v635, %v660
          %v662 = vsub.f32 %v636, %v660
          %v663 = vmul.f32 %v661, 1.442695
          %v664 = vpow.pop %v663
          %v665 = vmul.f32 %v662, 1.442695
          %v666 = vpow.pop %v665
          %v667 = vmul.f32 %v658, 1.442695
          %v668 = vpow.pop %v667
          %v669 = vmul.f32 %v659, 1.442695
          %v670 = vpow.pop %v669
          %v671 = vadd.f32 %v668, %v670
          %672 = vadd.xlane.f32.xlu0 %v671
          %v673 = vpop.xlane.xlu0 %672
          %v674 = vrot.slane %v673, 4
          %v675 = vadd.f32 %v673, %v674
          %v676 = vrot.slane %v675, 2
          %v677 = vadd.f32 %v675, %v676
          %v678 = vrot.slane %v677, 1
          %v679 = vadd.f32 %v677, %v678
          %s680 = vtos %v679
          %v681 = vadd.f32 %v664, %v666
          %682 = vadd.xlane.f32.xlu0 %v681
          %v683 = vpop.xlane.xlu0 %682
          %v684 = vrot.slane %v683, 4
          %v685 = vadd.f32 %v683, %v684
          %v686 = vrot.slane %v685, 2
          %v687 = vadd.f32 %v685, %v686
          %v688 = vrot.slane %v687, 1
          %v689 = vadd.f32 %v687, %v688
          %s690 = vtos %v689
          %v691 = vsub.f32 %v661, %v658
          %v692 = vsub.f32 %v662, %v659
          %v693 = vmul.f32 %v664, %v691
          %v694 = vmul.f32 %v666, %v692
          %v695 = vadd.f32 %v693, %v694
          %696 = vadd.xlane.f32.xlu0 %v695
          %v697 = vpop.xlane.xlu0 %696
          %v698 = vrot.slane %v697, 4
          %v699 = vadd.f32 %v697, %v698
          %v700 = vrot.slane %v699, 2
          %v701 = vadd.f32 %v699, %v700
          %v702 = vrot.slane %v701, 1
          %v703 = vadd.f32 %v701, %v702
          %s704 = vtos %v703
          %v705 = vstv %s690
          %v706 = vrcp.pop %v705
          %s707 = vtos %v706
          %s708 = smul.f32 %s704, %s707
          %v709 = vstv %s680
          %v710 = vlog2.pop %v709
          %v711 = vmul.f32 %v710, 0.6931472
          %s712 = vtos %v711
          %v713 = vstv %s690
          %v714 = vlog2.pop %v713
          %v715 = vmul.f32 %v714, 0.6931472
          %s716 = vtos %v715
          %s717 = ssub.f32 %s712, %s716
          %s718 = sadd.f32 %s708, %s717
          %v719 = vmul.f32 %v628, %v611
          %v720 = vmul.f32 %v629, %v612
          %v721 = vmul.f32 %v631, %v611
          %v722 = vmul.f32 %v632, %v612
          %v723 = vmax.f32 %v719, %v720
          %724 = vmax.xlane.f32.xlu0 %v723
          %v725 = vpop.xlane.xlu0 %724
          %v726 = vrot.slane %v725, 4
          %v727 = vmax.f32 %v725, %v726
          %v728 = vrot.slane %v727, 2
          %v729 = vmax.f32 %v727, %v728
          %v730 = vrot.slane %v729, 1
          %v731 = vmax.f32 %v729, %v730
          %s732 = vtos %v731
          %v733 = vmax.f32 %v721, %v722
          %734 = vmax.xlane.f32.xlu0 %v733
          %v735 = vpop.xlane.xlu0 %734
          %v736 = vrot.slane %v735, 4
          %v737 = vmax.f32 %v735, %v736
          %v738 = vrot.slane %v737, 2
          %v739 = vmax.f32 %v737, %v738
          %v740 = vrot.slane %v739, 1
          %v741 = vmax.f32 %v739, %v740
          %s742 = vtos %v741
          %v743 = vstv %s732
          %v744 = vsub.f32 %v719, %v743
          %v745 = vsub.f32 %v720, %v743
          %v746 = vstv %s742
          %v747 = vsub.f32 %v721, %v746
          %v748 = vsub.f32 %v722, %v746
          %v749 = vmul.f32 %v747, 1.442695
          %v750 = vpow.pop %v749
          %v751 = vmul.f32 %v748, 1.442695
          %v752 = vpow.pop %v751
          %v753 = vmul.f32 %v744, 1.442695
          %v754 = vpow.pop %v753
          %v755 = vmul.f32 %v745, 1.442695
          %v756 = vpow.pop %v755
          %v757 = vadd.f32 %v754, %v756
          %758 = vadd.xlane.f32.xlu0 %v757
          %v759 = vpop.xlane.xlu0 %758
          %v760 = vrot.slane %v759, 4
          %v761 = vadd.f32 %v759, %v760
          %v762 = vrot.slane %v761, 2
          %v763 = vadd.f32 %v761, %v762
          %v764 = vrot.slane %v763, 1
          %v765 = vadd.f32 %v763, %v764
          %s766 = vtos %v765
          %v767 = vadd.f32 %v750, %v752
          %768 = vadd.xlane.f32.xlu0 %v767
          %v769 = vpop.xlane.xlu0 %768
          %v770 = vrot.slane %v769, 4
          %v771 = vadd.f32 %v769, %v770
          %v772 = vrot.slane %v771, 2
          %v773 = vadd.f32 %v771, %v772
          %v774 = vrot.slane %v773, 1
          %v775 = vadd.f32 %v773, %v774
          %s776 = vtos %v775
          %v777 = vsub.f32 %v747, %v744
          %v778 = vsub.f32 %v748, %v745
          %v779 = vmul.f32 %v750, %v777
          %v780 = vmul.f32 %v752, %v778
          %v781 = vadd.f32 %v779, %v780
          %782 = vadd.xlane.f32.xlu0 %v781
          %v783 = vpop.xlane.xlu0 %782
          %v784 = vrot.slane %v783, 4
          %v785 = vadd.f32 %v783, %v784
          %v786 = vrot.slane %v785, 2
          %v787 = vadd.f32 %v785, %v786
          %v788 = vrot.slane %v787, 1
          %v789 = vadd.f32 %v787, %v788
          %s790 = vtos %v789
          %v791 = vstv %s776
          %v792 = vrcp.pop %v791
          %s793 = vtos %v792
          %s794 = smul.f32 %s790, %s793
          %v795 = vstv %s766
          %v796 = vlog2.pop %v795
          %v797 = vmul.f32 %v796, 0.6931472
          %s798 = vtos %v797
          %v799 = vstv %s776
          %v800 = vlog2.pop %v799
          %v801 = vmul.f32 %v800, 0.6931472
          %s802 = vtos %v801
          %s803 = ssub.f32 %s798, %s802
          %s804 = sadd.f32 %s794, %s803
        $region56: #{tpu_custom_call.1} parent=31 // pred_fallthru
          %s805 = sphi 0, %s718
          %s806 = sphi 0, %s804
        %p807 = pneg %p623
        // Predicated region
        $region57: #{tpu_custom_call.1} parent=31 // pred_check
          _
        $region58: #{tpu_custom_call.1} parent=31 // pred_check_branch
          %809 = sbr.rel (%p623) target = $region60
        $region59: #{tpu_custom_call.1} parent=31 // pred_region
          _
        $region60: #{tpu_custom_call.1} parent=31 // pred_fallthru
          %s810 = sphi %s805, 0.0
          %s811 = sphi %s806, 0.0
        %s812 = sadd.f32 %s558, %s810
        %s813 = sadd.f32 %s559, %s811
        %s814 = sadd.f32 %s560, %s622
        %vm815 = vcmp.eq.s32.totalorder %v292, 3
        %vm816 = vcmp.eq.s32.totalorder %v293, 3
        %v817 = vsel %vm815, 1, 0
        %v818 = vsel %vm816, 1, 0
        %v819 = vcvt.s32.f32 %v817
        %v820 = vcvt.s32.f32 %v818
        %v821 = vrot.slane %v819, 7
        %v822 = vrot.slane %v820, 7
        %v823 = vsel %vm313, %v821, %v822
        %v824 = vsel %vm313, %v822, %v821
        %v825 = vsel %vm299, %v824, 0.0
        %v826 = vsel %vm300, %v823, 0.0
        %v827 = vrot.slane %v819, 1
        %v828 = vrot.slane %v820, 1
        %v829 = vsel %vm320, %v827, %v828
        %v830 = vsel %vm320, %v828, %v827
        %v831 = vsel %vm301, %v829, 0.0
        %v832 = vsel %vm302, %v830, 0.0
        %833 = vrot.lane.b32.xlu0 %v819, 1
        %v834 = vpop.permute.xlu0 %833
        %835 = vrot.lane.b32.xlu0 %v820, 1
        %v836 = vpop.permute.xlu0 %835
        %v837 = vsel %vm303, %v834, 0.0
        %v838 = vsel %vm303, %v836, 0.0
        %839 = vrot.lane.b32.xlu0 %v819, 127
        %v840 = vpop.permute.xlu0 %839
        %841 = vrot.lane.b32.xlu0 %v820, 127
        %v842 = vpop.permute.xlu0 %841
        %v843 = vsel %vm304, %v840, 0.0
        %v844 = vsel %vm304, %v842, 0.0
        %v845 = vmax.f32 %v819, %v825
        %v846 = vmax.f32 %v820, %v826
        %v847 = vmax.f32 %v831, %v837
        %v848 = vmax.f32 %v832, %v838
        %v849 = vmax.f32 %v845, %v847
        %v850 = vmax.f32 %v846, %v848
        %v851 = vmax.f32 %v849, %v843
        %v852 = vmax.f32 %v850, %v844
        %v853 = vmin.f32 %v819, %v825
        %v854 = vmin.f32 %v820, %v826
        %v855 = vmin.f32 %v831, %v837
        %v856 = vmin.f32 %v832, %v838
        %v857 = vmin.f32 %v853, %v855
        %v858 = vmin.f32 %v854, %v856
        %v859 = vmin.f32 %v857, %v843
        %v860 = vmin.f32 %v858, %v844
        %v861 = vsub.f32 %v851, %v859
        %v862 = vsub.f32 %v852, %v860
        %v863 = vsub.f32 1.0, %v861
        %v864 = vsub.f32 1.0, %v862
        %v865 = vmul.f32 %v819, %v863
        %v866 = vmul.f32 %v820, %v864
        %v867 = vadd.f32 %v861, %v862
        %868 = vadd.xlane.f32.xlu0 %v867
        %v869 = vpop.xlane.xlu0 %868
        %v870 = vrot.slane %v869, 4
        %v871 = vadd.f32 %v869, %v870
        %v872 = vrot.slane %v871, 2
        %v873 = vadd.f32 %v871, %v872
        %v874 = vrot.slane %v873, 1
        %v875 = vadd.f32 %v873, %v874
        %s876 = vtos %v875
        %p877 = scmp.gt.f32.partialorder %s876, 0.0
        // Predicated region
        $region61: #{tpu_custom_call.1} parent=31 // pred_check
          %p878 = pneg %p877
        $region62: #{tpu_custom_call.1} parent=31 // pred_check_branch
          %880 = sbr.rel (%p878) target = $region64
        $region63: #{tpu_custom_call.1} parent=31 // pred_region
          %s881 = scalar_lea.vmem %s248, 48 [#allocation5]
          %v882 = vld [vmem:[%s881] sm:$0xff]
          %v883 = vld [vmem:[%s881 + $0x8] sm:$0xff]
          %s884 = scalar_lea.vmem %s257, 48 [#allocation7]
          %v885 = vld [vmem:[%s884] sm:$0xff]
          %v886 = vld [vmem:[%s884 + $0x8] sm:$0xff]
          %v887 = vmul.f32 %v882, %v861
          %v888 = vmul.f32 %v883, %v862
          %v889 = vmul.f32 %v885, %v861
          %v890 = vmul.f32 %v886, %v862
          %v891 = vmax.f32 %v887, %v888
          %892 = vmax.xlane.f32.xlu0 %v891
          %v893 = vpop.xlane.xlu0 %892
          %v894 = vrot.slane %v893, 4
          %v895 = vmax.f32 %v893, %v894
          %v896 = vrot.slane %v895, 2
          %v897 = vmax.f32 %v895, %v896
          %v898 = vrot.slane %v897, 1
          %v899 = vmax.f32 %v897, %v898
          %s900 = vtos %v899
          %v901 = vmax.f32 %v889, %v890
          %902 = vmax.xlane.f32.xlu0 %v901
          %v903 = vpop.xlane.xlu0 %902
          %v904 = vrot.slane %v903, 4
          %v905 = vmax.f32 %v903, %v904
          %v906 = vrot.slane %v905, 2
          %v907 = vmax.f32 %v905, %v906
          %v908 = vrot.slane %v907, 1
          %v909 = vmax.f32 %v907, %v908
          %s910 = vtos %v909
          %v911 = vstv %s900
          %v912 = vsub.f32 %v887, %v911
          %v913 = vsub.f32 %v888, %v911
          %v914 = vstv %s910
          %v915 = vsub.f32 %v889, %v914
          %v916 = vsub.f32 %v890, %v914
          %v917 = vmul.f32 %v915, 1.442695
          %v918 = vpow.pop %v917
          %v919 = vmul.f32 %v916, 1.442695
          %v920 = vpow.pop %v919
          %v921 = vmul.f32 %v912, 1.442695
          %v922 = vpow.pop %v921
          %v923 = vmul.f32 %v913, 1.442695
          %v924 = vpow.pop %v923
          %v925 = vadd.f32 %v922, %v924
          %926 = vadd.xlane.f32.xlu0 %v925
          %v927 = vpop.xlane.xlu0 %926
          %v928 = vrot.slane %v927, 4
          %v929 = vadd.f32 %v927, %v928
          %v930 = vrot.slane %v929, 2
          %v931 = vadd.f32 %v929, %v930
          %v932 = vrot.slane %v931, 1
          %v933 = vadd.f32 %v931, %v932
          %s934 = vtos %v933
          %v935 = vadd.f32 %v918, %v920
          %936 = vadd.xlane.f32.xlu0 %v935
          %v937 = vpop.xlane.xlu0 %936
          %v938 = vrot.slane %v937, 4
          %v939 = vadd.f32 %v937, %v938
          %v940 = vrot.slane %v939, 2
          %v941 = vadd.f32 %v939, %v940
          %v942 = vrot.slane %v941, 1
          %v943 = vadd.f32 %v941, %v942
          %s944 = vtos %v943
          %v945 = vsub.f32 %v915, %v912
          %v946 = vsub.f32 %v916, %v913
          %v947 = vmul.f32 %v918, %v945
          %v948 = vmul.f32 %v920, %v946
          %v949 = vadd.f32 %v947, %v948
          %950 = vadd.xlane.f32.xlu0 %v949
          %v951 = vpop.xlane.xlu0 %950
          %v952 = vrot.slane %v951, 4
          %v953 = vadd.f32 %v951, %v952
          %v954 = vrot.slane %v953, 2
          %v955 = vadd.f32 %v953, %v954
          %v956 = vrot.slane %v955, 1
          %v957 = vadd.f32 %v955, %v956
          %s958 = vtos %v957
          %v959 = vstv %s944
          %v960 = vrcp.pop %v959
          %s961 = vtos %v960
          %s962 = smul.f32 %s958, %s961
          %v963 = vstv %s934
          %v964 = vlog2.pop %v963
          %v965 = vmul.f32 %v964, 0.6931472
          %s966 = vtos %v965
          %v967 = vstv %s944
          %v968 = vlog2.pop %v967
          %v969 = vmul.f32 %v968, 0.6931472
          %s970 = vtos %v969
          %s971 = ssub.f32 %s966, %s970
          %s972 = sadd.f32 %s962, %s971
          %v973 = vmul.f32 %v882, %v865
          %v974 = vmul.f32 %v883, %v866
          %v975 = vmul.f32 %v885, %v865
          %v976 = vmul.f32 %v886, %v866
          %v977 = vmax.f32 %v973, %v974
          %978 = vmax.xlane.f32.xlu0 %v977
          %v979 = vpop.xlane.xlu0 %978
          %v980 = vrot.slane %v979, 4
          %v981 = vmax.f32 %v979, %v980
          %v982 = vrot.slane %v981, 2
          %v983 = vmax.f32 %v981, %v982
          %v984 = vrot.slane %v983, 1
          %v985 = vmax.f32 %v983, %v984
          %s986 = vtos %v985
          %v987 = vmax.f32 %v975, %v976
          %988 = vmax.xlane.f32.xlu0 %v987
          %v989 = vpop.xlane.xlu0 %988
          %v990 = vrot.slane %v989, 4
          %v991 = vmax.f32 %v989, %v990
          %v992 = vrot.slane %v991, 2
          %v993 = vmax.f32 %v991, %v992
          %v994 = vrot.slane %v993, 1
          %v995 = vmax.f32 %v993, %v994
          %s996 = vtos %v995
          %v997 = vstv %s986
          %v998 = vsub.f32 %v973, %v997
          %v999 = vsub.f32 %v974, %v997
          %v1000 = vstv %s996
          %v1001 = vsub.f32 %v975, %v1000
          %v1002 = vsub.f32 %v976, %v1000
          %v1003 = vmul.f32 %v1001, 1.442695
          %v1004 = vpow.pop %v1003
          %v1005 = vmul.f32 %v1002, 1.442695
          %v1006 = vpow.pop %v1005
          %v1007 = vmul.f32 %v998, 1.442695
          %v1008 = vpow.pop %v1007
          %v1009 = vmul.f32 %v999, 1.442695
          %v1010 = vpow.pop %v1009
          %v1011 = vadd.f32 %v1008, %v1010
          %1012 = vadd.xlane.f32.xlu0 %v1011
          %v1013 = vpop.xlane.xlu0 %1012
          %v1014 = vrot.slane %v1013, 4
          %v1015 = vadd.f32 %v1013, %v1014
          %v1016 = vrot.slane %v1015, 2
          %v1017 = vadd.f32 %v1015, %v1016
          %v1018 = vrot.slane %v1017, 1
          %v1019 = vadd.f32 %v1017, %v1018
          %s1020 = vtos %v1019
          %v1021 = vadd.f32 %v1004, %v1006
          %1022 = vadd.xlane.f32.xlu0 %v1021
          %v1023 = vpop.xlane.xlu0 %1022
          %v1024 = vrot.slane %v1023, 4
          %v1025 = vadd.f32 %v1023, %v1024
          %v1026 = vrot.slane %v1025, 2
          %v1027 = vadd.f32 %v1025, %v1026
          %v1028 = vrot.slane %v1027, 1
          %v1029 = vadd.f32 %v1027, %v1028
          %s1030 = vtos %v1029
          %v1031 = vsub.f32 %v1001, %v998
          %v1032 = vsub.f32 %v1002, %v999
          %v1033 = vmul.f32 %v1004, %v1031
          %v1034 = vmul.f32 %v1006, %v1032
          %v1035 = vadd.f32 %v1033, %v1034
          %1036 = vadd.xlane.f32.xlu0 %v1035
          %v1037 = vpop.xlane.xlu0 %1036
          %v1038 = vrot.slane %v1037, 4
          %v1039 = vadd.f32 %v1037, %v1038
          %v1040 = vrot.slane %v1039, 2
          %v1041 = vadd.f32 %v1039, %v1040
          %v1042 = vrot.slane %v1041, 1
          %v1043 = vadd.f32 %v1041, %v1042
          %s1044 = vtos %v1043
          %v1045 = vstv %s1030
          %v1046 = vrcp.pop %v1045
          %s1047 = vtos %v1046
          %s1048 = smul.f32 %s1044, %s1047
          %v1049 = vstv %s1020
          %v1050 = vlog2.pop %v1049
          %v1051 = vmul.f32 %v1050, 0.6931472
          %s1052 = vtos %v1051
          %v1053 = vstv %s1030
          %v1054 = vlog2.pop %v1053
          %v1055 = vmul.f32 %v1054, 0.6931472
          %s1056 = vtos %v1055
          %s1057 = ssub.f32 %s1052, %s1056
          %s1058 = sadd.f32 %s1048, %s1057
        $region64: #{tpu_custom_call.1} parent=31 // pred_fallthru
          %s1059 = sphi 0, %s972
          %s1060 = sphi 0, %s1058
        %p1061 = pneg %p877
        // Predicated region
        $region65: #{tpu_custom_call.1} parent=31 // pred_check
          _
        $region66: #{tpu_custom_call.1} parent=31 // pred_check_branch
          %1063 = sbr.rel (%p877) target = $region68
        $region67: #{tpu_custom_call.1} parent=31 // pred_region
          _
        $region68: #{tpu_custom_call.1} parent=31 // pred_fallthru
          %s1064 = sphi %s1059, 0.0
          %s1065 = sphi %s1060, 0.0
        %s1066 = sadd.f32 %s812, %s1064
        %s1067 = sadd.f32 %s813, %s1065
        %s1068 = sadd.f32 %s814, %s876
        %vm1069 = vcmp.eq.s32.totalorder %v292, 4
        %vm1070 = vcmp.eq.s32.totalorder %v293, 4
        %v1071 = vsel %vm1069, 1, 0
        %v1072 = vsel %vm1070, 1, 0
        %v1073 = vcvt.s32.f32 %v1071
        %v1074 = vcvt.s32.f32 %v1072
        %v1075 = vrot.slane %v1073, 7
        %v1076 = vrot.slane %v1074, 7
        %v1077 = vsel %vm313, %v1075, %v1076
        %v1078 = vsel %vm313, %v1076, %v1075
        %v1079 = vsel %vm299, %v1078, 0.0
        %v1080 = vsel %vm300, %v1077, 0.0
        %v1081 = vrot.slane %v1073, 1
        %v1082 = vrot.slane %v1074, 1
        %v1083 = vsel %vm320, %v1081, %v1082
        %v1084 = vsel %vm320, %v1082, %v1081
        %v1085 = vsel %vm301, %v1083, 0.0
        %v1086 = vsel %vm302, %v1084, 0.0
        %1087 = vrot.lane.b32.xlu0 %v1073, 1
        %v1088 = vpop.permute.xlu0 %1087
        %1089 = vrot.lane.b32.xlu0 %v1074, 1
        %v1090 = vpop.permute.xlu0 %1089
        %v1091 = vsel %vm303, %v1088, 0.0
        %v1092 = vsel %vm303, %v1090, 0.0
        %1093 = vrot.lane.b32.xlu0 %v1073, 127
        %v1094 = vpop.permute.xlu0 %1093
        %1095 = vrot.lane.b32.xlu0 %v1074, 127
        %v1096 = vpop.permute.xlu0 %1095
        %v1097 = vsel %vm304, %v1094, 0.0
        %v1098 = vsel %vm304, %v1096, 0.0
        %v1099 = vmax.f32 %v1073, %v1079
        %v1100 = vmax.f32 %v1074, %v1080
        %v1101 = vmax.f32 %v1085, %v1091
        %v1102 = vmax.f32 %v1086, %v1092
        %v1103 = vmax.f32 %v1099, %v1101
        %v1104 = vmax.f32 %v1100, %v1102
        %v1105 = vmax.f32 %v1103, %v1097
        %v1106 = vmax.f32 %v1104, %v1098
        %v1107 = vmin.f32 %v1073, %v1079
        %v1108 = vmin.f32 %v1074, %v1080
        %v1109 = vmin.f32 %v1085, %v1091
        %v1110 = vmin.f32 %v1086, %v1092
        %v1111 = vmin.f32 %v1107, %v1109
        %v1112 = vmin.f32 %v1108, %v1110
        %v1113 = vmin.f32 %v1111, %v1097
        %v1114 = vmin.f32 %v1112, %v1098
        %v1115 = vsub.f32 %v1105, %v1113
        %v1116 = vsub.f32 %v1106, %v1114
        %v1117 = vsub.f32 1.0, %v1115
        %v1118 = vsub.f32 1.0, %v1116
        %v1119 = vmul.f32 %v1073, %v1117
        %v1120 = vmul.f32 %v1074, %v1118
        %v1121 = vadd.f32 %v1115, %v1116
        %1122 = vadd.xlane.f32.xlu0 %v1121
        %v1123 = vpop.xlane.xlu0 %1122
        %v1124 = vrot.slane %v1123, 4
        %v1125 = vadd.f32 %v1123, %v1124
        %v1126 = vrot.slane %v1125, 2
        %v1127 = vadd.f32 %v1125, %v1126
        %v1128 = vrot.slane %v1127, 1
        %v1129 = vadd.f32 %v1127, %v1128
        %s1130 = vtos %v1129
        %p1131 = scmp.gt.f32.partialorder %s1130, 0.0
        // Predicated region
        $region69: #{tpu_custom_call.1} parent=31 // pred_check
          %p1132 = pneg %p1131
        $region70: #{tpu_custom_call.1} parent=31 // pred_check_branch
          %1134 = sbr.rel (%p1132) target = $region72
        $region71: #{tpu_custom_call.1} parent=31 // pred_region
          %s1135 = scalar_lea.vmem %s248, 64 [#allocation5]
          %v1136 = vld [vmem:[%s1135] sm:$0xff]
          %v1137 = vld [vmem:[%s1135 + $0x8] sm:$0xff]
          %s1138 = scalar_lea.vmem %s257, 64 [#allocation7]
          %v1139 = vld [vmem:[%s1138] sm:$0xff]
          %v1140 = vld [vmem:[%s1138 + $0x8] sm:$0xff]
          %v1141 = vmul.f32 %v1136, %v1115
          %v1142 = vmul.f32 %v1137, %v1116
          %v1143 = vmul.f32 %v1139, %v1115
          %v1144 = vmul.f32 %v1140, %v1116
          %v1145 = vmax.f32 %v1141, %v1142
          %1146 = vmax.xlane.f32.xlu0 %v1145
          %v1147 = vpop.xlane.xlu0 %1146
          %v1148 = vrot.slane %v1147, 4
          %v1149 = vmax.f32 %v1147, %v1148
          %v1150 = vrot.slane %v1149, 2
          %v1151 = vmax.f32 %v1149, %v1150
          %v1152 = vrot.slane %v1151, 1
          %v1153 = vmax.f32 %v1151, %v1152
          %s1154 = vtos %v1153
          %v1155 = vmax.f32 %v1143, %v1144
          %1156 = vmax.xlane.f32.xlu0 %v1155
          %v1157 = vpop.xlane.xlu0 %1156
          %v1158 = vrot.slane %v1157, 4
          %v1159 = vmax.f32 %v1157, %v1158
          %v1160 = vrot.slane %v1159, 2
          %v1161 = vmax.f32 %v1159, %v1160
          %v1162 = vrot.slane %v1161, 1
          %v1163 = vmax.f32 %v1161, %v1162
          %s1164 = vtos %v1163
          %v1165 = vstv %s1154
          %v1166 = vsub.f32 %v1141, %v1165
          %v1167 = vsub.f32 %v1142, %v1165
          %v1168 = vstv %s1164
          %v1169 = vsub.f32 %v1143, %v1168
          %v1170 = vsub.f32 %v1144, %v1168
          %v1171 = vmul.f32 %v1169, 1.442695
          %v1172 = vpow.pop %v1171
          %v1173 = vmul.f32 %v1170, 1.442695
          %v1174 = vpow.pop %v1173
          %v1175 = vmul.f32 %v1166, 1.442695
          %v1176 = vpow.pop %v1175
          %v1177 = vmul.f32 %v1167, 1.442695
          %v1178 = vpow.pop %v1177
          %v1179 = vadd.f32 %v1176, %v1178
          %1180 = vadd.xlane.f32.xlu0 %v1179
          %v1181 = vpop.xlane.xlu0 %1180
          %v1182 = vrot.slane %v1181, 4
          %v1183 = vadd.f32 %v1181, %v1182
          %v1184 = vrot.slane %v1183, 2
          %v1185 = vadd.f32 %v1183, %v1184
          %v1186 = vrot.slane %v1185, 1
          %v1187 = vadd.f32 %v1185, %v1186
          %s1188 = vtos %v1187
          %v1189 = vadd.f32 %v1172, %v1174
          %1190 = vadd.xlane.f32.xlu0 %v1189
          %v1191 = vpop.xlane.xlu0 %1190
          %v1192 = vrot.slane %v1191, 4
          %v1193 = vadd.f32 %v1191, %v1192
          %v1194 = vrot.slane %v1193, 2
          %v1195 = vadd.f32 %v1193, %v1194
          %v1196 = vrot.slane %v1195, 1
          %v1197 = vadd.f32 %v1195, %v1196
          %s1198 = vtos %v1197
          %v1199 = vsub.f32 %v1169, %v1166
          %v1200 = vsub.f32 %v1170, %v1167
          %v1201 = vmul.f32 %v1172, %v1199
          %v1202 = vmul.f32 %v1174, %v1200
          %v1203 = vadd.f32 %v1201, %v1202
          %1204 = vadd.xlane.f32.xlu0 %v1203
          %v1205 = vpop.xlane.xlu0 %1204
          %v1206 = vrot.slane %v1205, 4
          %v1207 = vadd.f32 %v1205, %v1206
          %v1208 = vrot.slane %v1207, 2
          %v1209 = vadd.f32 %v1207, %v1208
          %v1210 = vrot.slane %v1209, 1
          %v1211 = vadd.f32 %v1209, %v1210
          %s1212 = vtos %v1211
          %v1213 = vstv %s1198
          %v1214 = vrcp.pop %v1213
          %s1215 = vtos %v1214
          %s1216 = smul.f32 %s1212, %s1215
          %v1217 = vstv %s1188
          %v1218 = vlog2.pop %v1217
          %v1219 = vmul.f32 %v1218, 0.6931472
          %s1220 = vtos %v1219
          %v1221 = vstv %s1198
          %v1222 = vlog2.pop %v1221
          %v1223 = vmul.f32 %v1222, 0.6931472
          %s1224 = vtos %v1223
          %s1225 = ssub.f32 %s1220, %s1224
          %s1226 = sadd.f32 %s1216, %s1225
          %v1227 = vmul.f32 %v1136, %v1119
          %v1228 = vmul.f32 %v1137, %v1120
          %v1229 = vmul.f32 %v1139, %v1119
          %v1230 = vmul.f32 %v1140, %v1120
          %v1231 = vmax.f32 %v1227, %v1228
          %1232 = vmax.xlane.f32.xlu0 %v1231
          %v1233 = vpop.xlane.xlu0 %1232
          %v1234 = vrot.slane %v1233, 4
          %v1235 = vmax.f32 %v1233, %v1234
          %v1236 = vrot.slane %v1235, 2
          %v1237 = vmax.f32 %v1235, %v1236
          %v1238 = vrot.slane %v1237, 1
          %v1239 = vmax.f32 %v1237, %v1238
          %s1240 = vtos %v1239
          %v1241 = vmax.f32 %v1229, %v1230
          %1242 = vmax.xlane.f32.xlu0 %v1241
          %v1243 = vpop.xlane.xlu0 %1242
          %v1244 = vrot.slane %v1243, 4
          %v1245 = vmax.f32 %v1243, %v1244
          %v1246 = vrot.slane %v1245, 2
          %v1247 = vmax.f32 %v1245, %v1246
          %v1248 = vrot.slane %v1247, 1
          %v1249 = vmax.f32 %v1247, %v1248
          %s1250 = vtos %v1249
          %v1251 = vstv %s1240
          %v1252 = vsub.f32 %v1227, %v1251
          %v1253 = vsub.f32 %v1228, %v1251
          %v1254 = vstv %s1250
          %v1255 = vsub.f32 %v1229, %v1254
          %v1256 = vsub.f32 %v1230, %v1254
          %v1257 = vmul.f32 %v1255, 1.442695
          %v1258 = vpow.pop %v1257
          %v1259 = vmul.f32 %v1256, 1.442695
          %v1260 = vpow.pop %v1259
          %v1261 = vmul.f32 %v1252, 1.442695
          %v1262 = vpow.pop %v1261
          %v1263 = vmul.f32 %v1253, 1.442695
          %v1264 = vpow.pop %v1263
          %v1265 = vadd.f32 %v1262, %v1264
          %1266 = vadd.xlane.f32.xlu0 %v1265
          %v1267 = vpop.xlane.xlu0 %1266
          %v1268 = vrot.slane %v1267, 4
          %v1269 = vadd.f32 %v1267, %v1268
          %v1270 = vrot.slane %v1269, 2
          %v1271 = vadd.f32 %v1269, %v1270
          %v1272 = vrot.slane %v1271, 1
          %v1273 = vadd.f32 %v1271, %v1272
          %s1274 = vtos %v1273
          %v1275 = vadd.f32 %v1258, %v1260
          %1276 = vadd.xlane.f32.xlu0 %v1275
          %v1277 = vpop.xlane.xlu0 %1276
          %v1278 = vrot.slane %v1277, 4
          %v1279 = vadd.f32 %v1277, %v1278
          %v1280 = vrot.slane %v1279, 2
          %v1281 = vadd.f32 %v1279, %v1280
          %v1282 = vrot.slane %v1281, 1
          %v1283 = vadd.f32 %v1281, %v1282
          %s1284 = vtos %v1283
          %v1285 = vsub.f32 %v1255, %v1252
          %v1286 = vsub.f32 %v1256, %v1253
          %v1287 = vmul.f32 %v1258, %v1285
          %v1288 = vmul.f32 %v1260, %v1286
          %v1289 = vadd.f32 %v1287, %v1288
          %1290 = vadd.xlane.f32.xlu0 %v1289
          %v1291 = vpop.xlane.xlu0 %1290
          %v1292 = vrot.slane %v1291, 4
          %v1293 = vadd.f32 %v1291, %v1292
          %v1294 = vrot.slane %v1293, 2
          %v1295 = vadd.f32 %v1293, %v1294
          %v1296 = vrot.slane %v1295, 1
          %v1297 = vadd.f32 %v1295, %v1296
          %s1298 = vtos %v1297
          %v1299 = vstv %s1284
          %v1300 = vrcp.pop %v1299
          %s1301 = vtos %v1300
          %s1302 = smul.f32 %s1298, %s1301
          %v1303 = vstv %s1274
          %v1304 = vlog2.pop %v1303
          %v1305 = vmul.f32 %v1304, 0.6931472
          %s1306 = vtos %v1305
          %v1307 = vstv %s1284
          %v1308 = vlog2.pop %v1307
          %v1309 = vmul.f32 %v1308, 0.6931472
          %s1310 = vtos %v1309
          %s1311 = ssub.f32 %s1306, %s1310
          %s1312 = sadd.f32 %s1302, %s1311
        $region72: #{tpu_custom_call.1} parent=31 // pred_fallthru
          %s1313 = sphi 0, %s1226
          %s1314 = sphi 0, %s1312
        %p1315 = pneg %p1131
        // Predicated region
        $region73: #{tpu_custom_call.1} parent=31 // pred_check
          _
        $region74: #{tpu_custom_call.1} parent=31 // pred_check_branch
          %1317 = sbr.rel (%p1131) target = $region76
        $region75: #{tpu_custom_call.1} parent=31 // pred_region
          _
        $region76: #{tpu_custom_call.1} parent=31 // pred_fallthru
          %s1318 = sphi %s1313, 0.0
          %s1319 = sphi %s1314, 0.0
        %s1320 = sadd.f32 %s1066, %s1318
        %s1321 = sadd.f32 %s1067, %s1319
        %s1322 = sadd.f32 %s1068, %s1130
        %vm1323 = vcmp.eq.s32.totalorder %v292, 5
        %vm1324 = vcmp.eq.s32.totalorder %v293, 5
        %v1325 = vsel %vm1323, 1, 0
        %v1326 = vsel %vm1324, 1, 0
        %v1327 = vcvt.s32.f32 %v1325
        %v1328 = vcvt.s32.f32 %v1326
        %v1329 = vrot.slane %v1327, 7
        %v1330 = vrot.slane %v1328, 7
        %v1331 = vsel %vm313, %v1329, %v1330
        %v1332 = vsel %vm313, %v1330, %v1329
        %v1333 = vsel %vm299, %v1332, 0.0
        %v1334 = vsel %vm300, %v1331, 0.0
        %v1335 = vrot.slane %v1327, 1
        %v1336 = vrot.slane %v1328, 1
        %v1337 = vsel %vm320, %v1335, %v1336
        %v1338 = vsel %vm320, %v1336, %v1335
        %v1339 = vsel %vm301, %v1337, 0.0
        %v1340 = vsel %vm302, %v1338, 0.0
        %1341 = vrot.lane.b32.xlu0 %v1327, 1
        %v1342 = vpop.permute.xlu0 %1341
        %1343 = vrot.lane.b32.xlu0 %v1328, 1
        %v1344 = vpop.permute.xlu0 %1343
        %v1345 = vsel %vm303, %v1342, 0.0
        %v1346 = vsel %vm303, %v1344, 0.0
        %1347 = vrot.lane.b32.xlu0 %v1327, 127
        %v1348 = vpop.permute.xlu0 %1347
        %1349 = vrot.lane.b32.xlu0 %v1328, 127
        %v1350 = vpop.permute.xlu0 %1349
        %v1351 = vsel %vm304, %v1348, 0.0
        %v1352 = vsel %vm304, %v1350, 0.0
        %v1353 = vmax.f32 %v1327, %v1333
        %v1354 = vmax.f32 %v1328, %v1334
        %v1355 = vmax.f32 %v1339, %v1345
        %v1356 = vmax.f32 %v1340, %v1346
        %v1357 = vmax.f32 %v1353, %v1355
        %v1358 = vmax.f32 %v1354, %v1356
        %v1359 = vmax.f32 %v1357, %v1351
        %v1360 = vmax.f32 %v1358, %v1352
        %v1361 = vmin.f32 %v1327, %v1333
        %v1362 = vmin.f32 %v1328, %v1334
        %v1363 = vmin.f32 %v1339, %v1345
        %v1364 = vmin.f32 %v1340, %v1346
        %v1365 = vmin.f32 %v1361, %v1363
        %v1366 = vmin.f32 %v1362, %v1364
        %v1367 = vmin.f32 %v1365, %v1351
        %v1368 = vmin.f32 %v1366, %v1352
        %v1369 = vsub.f32 %v1359, %v1367
        %v1370 = vsub.f32 %v1360, %v1368
        %v1371 = vsub.f32 1.0, %v1369
        %v1372 = vsub.f32 1.0, %v1370
        %v1373 = vmul.f32 %v1327, %v1371
        %v1374 = vmul.f32 %v1328, %v1372
        %v1375 = vadd.f32 %v1369, %v1370
        %1376 = vadd.xlane.f32.xlu0 %v1375
        %v1377 = vpop.xlane.xlu0 %1376
        %v1378 = vrot.slane %v1377, 4
        %v1379 = vadd.f32 %v1377, %v1378
        %v1380 = vrot.slane %v1379, 2
        %v1381 = vadd.f32 %v1379, %v1380
        %v1382 = vrot.slane %v1381, 1
        %v1383 = vadd.f32 %v1381, %v1382
        %s1384 = vtos %v1383
        %p1385 = scmp.gt.f32.partialorder %s1384, 0.0
        // Predicated region
        $region77: #{tpu_custom_call.1} parent=31 // pred_check
          %p1386 = pneg %p1385
        $region78: #{tpu_custom_call.1} parent=31 // pred_check_branch
          %1388 = sbr.rel (%p1386) target = $region80
        $region79: #{tpu_custom_call.1} parent=31 // pred_region
          %s1389 = scalar_lea.vmem %s248, 80 [#allocation5]
          %v1390 = vld [vmem:[%s1389] sm:$0xff]
          %v1391 = vld [vmem:[%s1389 + $0x8] sm:$0xff]
          %s1392 = scalar_lea.vmem %s257, 80 [#allocation7]
          %v1393 = vld [vmem:[%s1392] sm:$0xff]
          %v1394 = vld [vmem:[%s1392 + $0x8] sm:$0xff]
          %v1395 = vmul.f32 %v1390, %v1369
          %v1396 = vmul.f32 %v1391, %v1370
          %v1397 = vmul.f32 %v1393, %v1369
          %v1398 = vmul.f32 %v1394, %v1370
          %v1399 = vmax.f32 %v1395, %v1396
          %1400 = vmax.xlane.f32.xlu0 %v1399
          %v1401 = vpop.xlane.xlu0 %1400
          %v1402 = vrot.slane %v1401, 4
          %v1403 = vmax.f32 %v1401, %v1402
          %v1404 = vrot.slane %v1403, 2
          %v1405 = vmax.f32 %v1403, %v1404
          %v1406 = vrot.slane %v1405, 1
          %v1407 = vmax.f32 %v1405, %v1406
          %s1408 = vtos %v1407
          %v1409 = vmax.f32 %v1397, %v1398
          %1410 = vmax.xlane.f32.xlu0 %v1409
          %v1411 = vpop.xlane.xlu0 %1410
          %v1412 = vrot.slane %v1411, 4
          %v1413 = vmax.f32 %v1411, %v1412
          %v1414 = vrot.slane %v1413, 2
          %v1415 = vmax.f32 %v1413, %v1414
          %v1416 = vrot.slane %v1415, 1
          %v1417 = vmax.f32 %v1415, %v1416
          %s1418 = vtos %v1417
          %v1419 = vstv %s1408
          %v1420 = vsub.f32 %v1395, %v1419
          %v1421 = vsub.f32 %v1396, %v1419
          %v1422 = vstv %s1418
          %v1423 = vsub.f32 %v1397, %v1422
          %v1424 = vsub.f32 %v1398, %v1422
          %v1425 = vmul.f32 %v1423, 1.442695
          %v1426 = vpow.pop %v1425
          %v1427 = vmul.f32 %v1424, 1.442695
          %v1428 = vpow.pop %v1427
          %v1429 = vmul.f32 %v1420, 1.442695
          %v1430 = vpow.pop %v1429
          %v1431 = vmul.f32 %v1421, 1.442695
          %v1432 = vpow.pop %v1431
          %v1433 = vadd.f32 %v1430, %v1432
          %1434 = vadd.xlane.f32.xlu0 %v1433
          %v1435 = vpop.xlane.xlu0 %1434
          %v1436 = vrot.slane %v1435, 4
          %v1437 = vadd.f32 %v1435, %v1436
          %v1438 = vrot.slane %v1437, 2
          %v1439 = vadd.f32 %v1437, %v1438
          %v1440 = vrot.slane %v1439, 1
          %v1441 = vadd.f32 %v1439, %v1440
          %s1442 = vtos %v1441
          %v1443 = vadd.f32 %v1426, %v1428
          %1444 = vadd.xlane.f32.xlu0 %v1443
          %v1445 = vpop.xlane.xlu0 %1444
          %v1446 = vrot.slane %v1445, 4
          %v1447 = vadd.f32 %v1445, %v1446
          %v1448 = vrot.slane %v1447, 2
          %v1449 = vadd.f32 %v1447, %v1448
          %v1450 = vrot.slane %v1449, 1
          %v1451 = vadd.f32 %v1449, %v1450
          %s1452 = vtos %v1451
          %v1453 = vsub.f32 %v1423, %v1420
          %v1454 = vsub.f32 %v1424, %v1421
          %v1455 = vmul.f32 %v1426, %v1453
          %v1456 = vmul.f32 %v1428, %v1454
          %v1457 = vadd.f32 %v1455, %v1456
          %1458 = vadd.xlane.f32.xlu0 %v1457
          %v1459 = vpop.xlane.xlu0 %1458
          %v1460 = vrot.slane %v1459, 4
          %v1461 = vadd.f32 %v1459, %v1460
          %v1462 = vrot.slane %v1461, 2
          %v1463 = vadd.f32 %v1461, %v1462
          %v1464 = vrot.slane %v1463, 1
          %v1465 = vadd.f32 %v1463, %v1464
          %s1466 = vtos %v1465
          %v1467 = vstv %s1452
          %v1468 = vrcp.pop %v1467
          %s1469 = vtos %v1468
          %s1470 = smul.f32 %s1466, %s1469
          %v1471 = vstv %s1442
          %v1472 = vlog2.pop %v1471
          %v1473 = vmul.f32 %v1472, 0.6931472
          %s1474 = vtos %v1473
          %v1475 = vstv %s1452
          %v1476 = vlog2.pop %v1475
          %v1477 = vmul.f32 %v1476, 0.6931472
          %s1478 = vtos %v1477
          %s1479 = ssub.f32 %s1474, %s1478
          %s1480 = sadd.f32 %s1470, %s1479
          %v1481 = vmul.f32 %v1390, %v1373
          %v1482 = vmul.f32 %v1391, %v1374
          %v1483 = vmul.f32 %v1393, %v1373
          %v1484 = vmul.f32 %v1394, %v1374
          %v1485 = vmax.f32 %v1481, %v1482
          %1486 = vmax.xlane.f32.xlu0 %v1485
          %v1487 = vpop.xlane.xlu0 %1486
          %v1488 = vrot.slane %v1487, 4
          %v1489 = vmax.f32 %v1487, %v1488
          %v1490 = vrot.slane %v1489, 2
          %v1491 = vmax.f32 %v1489, %v1490
          %v1492 = vrot.slane %v1491, 1
          %v1493 = vmax.f32 %v1491, %v1492
          %s1494 = vtos %v1493
          %v1495 = vmax.f32 %v1483, %v1484
          %1496 = vmax.xlane.f32.xlu0 %v1495
          %v1497 = vpop.xlane.xlu0 %1496
          %v1498 = vrot.slane %v1497, 4
          %v1499 = vmax.f32 %v1497, %v1498
          %v1500 = vrot.slane %v1499, 2
          %v1501 = vmax.f32 %v1499, %v1500
          %v1502 = vrot.slane %v1501, 1
          %v1503 = vmax.f32 %v1501, %v1502
          %s1504 = vtos %v1503
          %v1505 = vstv %s1494
          %v1506 = vsub.f32 %v1481, %v1505
          %v1507 = vsub.f32 %v1482, %v1505
          %v1508 = vstv %s1504
          %v1509 = vsub.f32 %v1483, %v1508
          %v1510 = vsub.f32 %v1484, %v1508
          %v1511 = vmul.f32 %v1509, 1.442695
          %v1512 = vpow.pop %v1511
          %v1513 = vmul.f32 %v1510, 1.442695
          %v1514 = vpow.pop %v1513
          %v1515 = vmul.f32 %v1506, 1.442695
          %v1516 = vpow.pop %v1515
          %v1517 = vmul.f32 %v1507, 1.442695
          %v1518 = vpow.pop %v1517
          %v1519 = vadd.f32 %v1516, %v1518
          %1520 = vadd.xlane.f32.xlu0 %v1519
          %v1521 = vpop.xlane.xlu0 %1520
          %v1522 = vrot.slane %v1521, 4
          %v1523 = vadd.f32 %v1521, %v1522
          %v1524 = vrot.slane %v1523, 2
          %v1525 = vadd.f32 %v1523, %v1524
          %v1526 = vrot.slane %v1525, 1
          %v1527 = vadd.f32 %v1525, %v1526
          %s1528 = vtos %v1527
          %v1529 = vadd.f32 %v1512, %v1514
          %1530 = vadd.xlane.f32.xlu0 %v1529
          %v1531 = vpop.xlane.xlu0 %1530
          %v1532 = vrot.slane %v1531, 4
          %v1533 = vadd.f32 %v1531, %v1532
          %v1534 = vrot.slane %v1533, 2
          %v1535 = vadd.f32 %v1533, %v1534
          %v1536 = vrot.slane %v1535, 1
          %v1537 = vadd.f32 %v1535, %v1536
          %s1538 = vtos %v1537
          %v1539 = vsub.f32 %v1509, %v1506
          %v1540 = vsub.f32 %v1510, %v1507
          %v1541 = vmul.f32 %v1512, %v1539
          %v1542 = vmul.f32 %v1514, %v1540
          %v1543 = vadd.f32 %v1541, %v1542
          %1544 = vadd.xlane.f32.xlu0 %v1543
          %v1545 = vpop.xlane.xlu0 %1544
          %v1546 = vrot.slane %v1545, 4
          %v1547 = vadd.f32 %v1545, %v1546
          %v1548 = vrot.slane %v1547, 2
          %v1549 = vadd.f32 %v1547, %v1548
          %v1550 = vrot.slane %v1549, 1
          %v1551 = vadd.f32 %v1549, %v1550
          %s1552 = vtos %v1551
          %v1553 = vstv %s1538
          %v1554 = vrcp.pop %v1553
          %s1555 = vtos %v1554
          %s1556 = smul.f32 %s1552, %s1555
          %v1557 = vstv %s1528
          %v1558 = vlog2.pop %v1557
          %v1559 = vmul.f32 %v1558, 0.6931472
          %s1560 = vtos %v1559
          %v1561 = vstv %s1538
          %v1562 = vlog2.pop %v1561
          %v1563 = vmul.f32 %v1562, 0.6931472
          %s1564 = vtos %v1563
          %s1565 = ssub.f32 %s1560, %s1564
          %s1566 = sadd.f32 %s1556, %s1565
        $region80: #{tpu_custom_call.1} parent=31 // pred_fallthru
          %s1567 = sphi 0, %s1480
          %s1568 = sphi 0, %s1566
        %p1569 = pneg %p1385
        // Predicated region
        $region81: #{tpu_custom_call.1} parent=31 // pred_check
          _
        $region82: #{tpu_custom_call.1} parent=31 // pred_check_branch
          %1571 = sbr.rel (%p1385) target = $region84
        $region83: #{tpu_custom_call.1} parent=31 // pred_region
          _
        $region84: #{tpu_custom_call.1} parent=31 // pred_fallthru
          %s1572 = sphi %s1567, 0.0
          %s1573 = sphi %s1568, 0.0
        %s1574 = sadd.f32 %s1320, %s1572
        %s1575 = sadd.f32 %s1321, %s1573
        %s1576 = sadd.f32 %s1322, %s1384
        %vm1577 = vcmp.eq.s32.totalorder %v292, 6
        %vm1578 = vcmp.eq.s32.totalorder %v293, 6
        %v1579 = vsel %vm1577, 1, 0
        %v1580 = vsel %vm1578, 1, 0
        %v1581 = vcvt.s32.f32 %v1579
        %v1582 = vcvt.s32.f32 %v1580
        %v1583 = vrot.slane %v1581, 7
        %v1584 = vrot.slane %v1582, 7
        %v1585 = vsel %vm313, %v1583, %v1584
        %v1586 = vsel %vm313, %v1584, %v1583
        %v1587 = vsel %vm299, %v1586, 0.0
        %v1588 = vsel %vm300, %v1585, 0.0
        %v1589 = vrot.slane %v1581, 1
        %v1590 = vrot.slane %v1582, 1
        %v1591 = vsel %vm320, %v1589, %v1590
        %v1592 = vsel %vm320, %v1590, %v1589
        %v1593 = vsel %vm301, %v1591, 0.0
        %v1594 = vsel %vm302, %v1592, 0.0
        %1595 = vrot.lane.b32.xlu0 %v1581, 1
        %v1596 = vpop.permute.xlu0 %1595
        %1597 = vrot.lane.b32.xlu0 %v1582, 1
        %v1598 = vpop.permute.xlu0 %1597
        %v1599 = vsel %vm303, %v1596, 0.0
        %v1600 = vsel %vm303, %v1598, 0.0
        %1601 = vrot.lane.b32.xlu0 %v1581, 127
        %v1602 = vpop.permute.xlu0 %1601
        %1603 = vrot.lane.b32.xlu0 %v1582, 127
        %v1604 = vpop.permute.xlu0 %1603
        %v1605 = vsel %vm304, %v1602, 0.0
        %v1606 = vsel %vm304, %v1604, 0.0
        %v1607 = vmax.f32 %v1581, %v1587
        %v1608 = vmax.f32 %v1582, %v1588
        %v1609 = vmax.f32 %v1593, %v1599
        %v1610 = vmax.f32 %v1594, %v1600
        %v1611 = vmax.f32 %v1607, %v1609
        %v1612 = vmax.f32 %v1608, %v1610
        %v1613 = vmax.f32 %v1611, %v1605
        %v1614 = vmax.f32 %v1612, %v1606
        %v1615 = vmin.f32 %v1581, %v1587
        %v1616 = vmin.f32 %v1582, %v1588
        %v1617 = vmin.f32 %v1593, %v1599
        %v1618 = vmin.f32 %v1594, %v1600
        %v1619 = vmin.f32 %v1615, %v1617
        %v1620 = vmin.f32 %v1616, %v1618
        %v1621 = vmin.f32 %v1619, %v1605
        %v1622 = vmin.f32 %v1620, %v1606
        %v1623 = vsub.f32 %v1613, %v1621
        %v1624 = vsub.f32 %v1614, %v1622
        %v1625 = vsub.f32 1.0, %v1623
        %v1626 = vsub.f32 1.0, %v1624
        %v1627 = vmul.f32 %v1581, %v1625
        %v1628 = vmul.f32 %v1582, %v1626
        %v1629 = vadd.f32 %v1623, %v1624
        %1630 = vadd.xlane.f32.xlu0 %v1629
        %v1631 = vpop.xlane.xlu0 %1630
        %v1632 = vrot.slane %v1631, 4
        %v1633 = vadd.f32 %v1631, %v1632
        %v1634 = vrot.slane %v1633, 2
        %v1635 = vadd.f32 %v1633, %v1634
        %v1636 = vrot.slane %v1635, 1
        %v1637 = vadd.f32 %v1635, %v1636
        %s1638 = vtos %v1637
        %p1639 = scmp.gt.f32.partialorder %s1638, 0.0
        // Predicated region
        $region85: #{tpu_custom_call.1} parent=31 // pred_check
          %p1640 = pneg %p1639
        $region86: #{tpu_custom_call.1} parent=31 // pred_check_branch
          %1642 = sbr.rel (%p1640) target = $region88
        $region87: #{tpu_custom_call.1} parent=31 // pred_region
          %s1643 = scalar_lea.vmem %s248, 96 [#allocation5]
          %v1644 = vld [vmem:[%s1643] sm:$0xff]
          %v1645 = vld [vmem:[%s1643 + $0x8] sm:$0xff]
          %s1646 = scalar_lea.vmem %s257, 96 [#allocation7]
          %v1647 = vld [vmem:[%s1646] sm:$0xff]
          %v1648 = vld [vmem:[%s1646 + $0x8] sm:$0xff]
          %v1649 = vmul.f32 %v1644, %v1623
          %v1650 = vmul.f32 %v1645, %v1624
          %v1651 = vmul.f32 %v1647, %v1623
          %v1652 = vmul.f32 %v1648, %v1624
          %v1653 = vmax.f32 %v1649, %v1650
          %1654 = vmax.xlane.f32.xlu0 %v1653
          %v1655 = vpop.xlane.xlu0 %1654
          %v1656 = vrot.slane %v1655, 4
          %v1657 = vmax.f32 %v1655, %v1656
          %v1658 = vrot.slane %v1657, 2
          %v1659 = vmax.f32 %v1657, %v1658
          %v1660 = vrot.slane %v1659, 1
          %v1661 = vmax.f32 %v1659, %v1660
          %s1662 = vtos %v1661
          %v1663 = vmax.f32 %v1651, %v1652
          %1664 = vmax.xlane.f32.xlu0 %v1663
          %v1665 = vpop.xlane.xlu0 %1664
          %v1666 = vrot.slane %v1665, 4
          %v1667 = vmax.f32 %v1665, %v1666
          %v1668 = vrot.slane %v1667, 2
          %v1669 = vmax.f32 %v1667, %v1668
          %v1670 = vrot.slane %v1669, 1
          %v1671 = vmax.f32 %v1669, %v1670
          %s1672 = vtos %v1671
          %v1673 = vstv %s1662
          %v1674 = vsub.f32 %v1649, %v1673
          %v1675 = vsub.f32 %v1650, %v1673
          %v1676 = vstv %s1672
          %v1677 = vsub.f32 %v1651, %v1676
          %v1678 = vsub.f32 %v1652, %v1676
          %v1679 = vmul.f32 %v1677, 1.442695
          %v1680 = vpow.pop %v1679
          %v1681 = vmul.f32 %v1678, 1.442695
          %v1682 = vpow.pop %v1681
          %v1683 = vmul.f32 %v1674, 1.442695
          %v1684 = vpow.pop %v1683
          %v1685 = vmul.f32 %v1675, 1.442695
          %v1686 = vpow.pop %v1685
          %v1687 = vadd.f32 %v1684, %v1686
          %1688 = vadd.xlane.f32.xlu0 %v1687
          %v1689 = vpop.xlane.xlu0 %1688
          %v1690 = vrot.slane %v1689, 4
          %v1691 = vadd.f32 %v1689, %v1690
          %v1692 = vrot.slane %v1691, 2
          %v1693 = vadd.f32 %v1691, %v1692
          %v1694 = vrot.slane %v1693, 1
          %v1695 = vadd.f32 %v1693, %v1694
          %s1696 = vtos %v1695
          %v1697 = vadd.f32 %v1680, %v1682
          %1698 = vadd.xlane.f32.xlu0 %v1697
          %v1699 = vpop.xlane.xlu0 %1698
          %v1700 = vrot.slane %v1699, 4
          %v1701 = vadd.f32 %v1699, %v1700
          %v1702 = vrot.slane %v1701, 2
          %v1703 = vadd.f32 %v1701, %v1702
          %v1704 = vrot.slane %v1703, 1
          %v1705 = vadd.f32 %v1703, %v1704
          %s1706 = vtos %v1705
          %v1707 = vsub.f32 %v1677, %v1674
          %v1708 = vsub.f32 %v1678, %v1675
          %v1709 = vmul.f32 %v1680, %v1707
          %v1710 = vmul.f32 %v1682, %v1708
          %v1711 = vadd.f32 %v1709, %v1710
          %1712 = vadd.xlane.f32.xlu0 %v1711
          %v1713 = vpop.xlane.xlu0 %1712
          %v1714 = vrot.slane %v1713, 4
          %v1715 = vadd.f32 %v1713, %v1714
          %v1716 = vrot.slane %v1715, 2
          %v1717 = vadd.f32 %v1715, %v1716
          %v1718 = vrot.slane %v1717, 1
          %v1719 = vadd.f32 %v1717, %v1718
          %s1720 = vtos %v1719
          %v1721 = vstv %s1706
          %v1722 = vrcp.pop %v1721
          %s1723 = vtos %v1722
          %s1724 = smul.f32 %s1720, %s1723
          %v1725 = vstv %s1696
          %v1726 = vlog2.pop %v1725
          %v1727 = vmul.f32 %v1726, 0.6931472
          %s1728 = vtos %v1727
          %v1729 = vstv %s1706
          %v1730 = vlog2.pop %v1729
          %v1731 = vmul.f32 %v1730, 0.6931472
          %s1732 = vtos %v1731
          %s1733 = ssub.f32 %s1728, %s1732
          %s1734 = sadd.f32 %s1724, %s1733
          %v1735 = vmul.f32 %v1644, %v1627
          %v1736 = vmul.f32 %v1645, %v1628
          %v1737 = vmul.f32 %v1647, %v1627
          %v1738 = vmul.f32 %v1648, %v1628
          %v1739 = vmax.f32 %v1735, %v1736
          %1740 = vmax.xlane.f32.xlu0 %v1739
          %v1741 = vpop.xlane.xlu0 %1740
          %v1742 = vrot.slane %v1741, 4
          %v1743 = vmax.f32 %v1741, %v1742
          %v1744 = vrot.slane %v1743, 2
          %v1745 = vmax.f32 %v1743, %v1744
          %v1746 = vrot.slane %v1745, 1
          %v1747 = vmax.f32 %v1745, %v1746
          %s1748 = vtos %v1747
          %v1749 = vmax.f32 %v1737, %v1738
          %1750 = vmax.xlane.f32.xlu0 %v1749
          %v1751 = vpop.xlane.xlu0 %1750
          %v1752 = vrot.slane %v1751, 4
          %v1753 = vmax.f32 %v1751, %v1752
          %v1754 = vrot.slane %v1753, 2
          %v1755 = vmax.f32 %v1753, %v1754
          %v1756 = vrot.slane %v1755, 1
          %v1757 = vmax.f32 %v1755, %v1756
          %s1758 = vtos %v1757
          %v1759 = vstv %s1748
          %v1760 = vsub.f32 %v1735, %v1759
          %v1761 = vsub.f32 %v1736, %v1759
          %v1762 = vstv %s1758
          %v1763 = vsub.f32 %v1737, %v1762
          %v1764 = vsub.f32 %v1738, %v1762
          %v1765 = vmul.f32 %v1763, 1.442695
          %v1766 = vpow.pop %v1765
          %v1767 = vmul.f32 %v1764, 1.442695
          %v1768 = vpow.pop %v1767
          %v1769 = vmul.f32 %v1760, 1.442695
          %v1770 = vpow.pop %v1769
          %v1771 = vmul.f32 %v1761, 1.442695
          %v1772 = vpow.pop %v1771
          %v1773 = vadd.f32 %v1770, %v1772
          %1774 = vadd.xlane.f32.xlu0 %v1773
          %v1775 = vpop.xlane.xlu0 %1774
          %v1776 = vrot.slane %v1775, 4
          %v1777 = vadd.f32 %v1775, %v1776
          %v1778 = vrot.slane %v1777, 2
          %v1779 = vadd.f32 %v1777, %v1778
          %v1780 = vrot.slane %v1779, 1
          %v1781 = vadd.f32 %v1779, %v1780
          %s1782 = vtos %v1781
          %v1783 = vadd.f32 %v1766, %v1768
          %1784 = vadd.xlane.f32.xlu0 %v1783
          %v1785 = vpop.xlane.xlu0 %1784
          %v1786 = vrot.slane %v1785, 4
          %v1787 = vadd.f32 %v1785, %v1786
          %v1788 = vrot.slane %v1787, 2
          %v1789 = vadd.f32 %v1787, %v1788
          %v1790 = vrot.slane %v1789, 1
          %v1791 = vadd.f32 %v1789, %v1790
          %s1792 = vtos %v1791
          %v1793 = vsub.f32 %v1763, %v1760
          %v1794 = vsub.f32 %v1764, %v1761
          %v1795 = vmul.f32 %v1766, %v1793
          %v1796 = vmul.f32 %v1768, %v1794
          %v1797 = vadd.f32 %v1795, %v1796
          %1798 = vadd.xlane.f32.xlu0 %v1797
          %v1799 = vpop.xlane.xlu0 %1798
          %v1800 = vrot.slane %v1799, 4
          %v1801 = vadd.f32 %v1799, %v1800
          %v1802 = vrot.slane %v1801, 2
          %v1803 = vadd.f32 %v1801, %v1802
          %v1804 = vrot.slane %v1803, 1
          %v1805 = vadd.f32 %v1803, %v1804
          %s1806 = vtos %v1805
          %v1807 = vstv %s1792
          %v1808 = vrcp.pop %v1807
          %s1809 = vtos %v1808
          %s1810 = smul.f32 %s1806, %s1809
          %v1811 = vstv %s1782
          %v1812 = vlog2.pop %v1811
          %v1813 = vmul.f32 %v1812, 0.6931472
          %s1814 = vtos %v1813
          %v1815 = vstv %s1792
          %v1816 = vlog2.pop %v1815
          %v1817 = vmul.f32 %v1816, 0.6931472
          %s1818 = vtos %v1817
          %s1819 = ssub.f32 %s1814, %s1818
          %s1820 = sadd.f32 %s1810, %s1819
        $region88: #{tpu_custom_call.1} parent=31 // pred_fallthru
          %s1821 = sphi 0, %s1734
          %s1822 = sphi 0, %s1820
        %p1823 = pneg %p1639
        // Predicated region
        $region89: #{tpu_custom_call.1} parent=31 // pred_check
          _
        $region90: #{tpu_custom_call.1} parent=31 // pred_check_branch
          %1825 = sbr.rel (%p1639) target = $region92
        $region91: #{tpu_custom_call.1} parent=31 // pred_region
          _
        $region92: #{tpu_custom_call.1} parent=31 // pred_fallthru
          %s1826 = sphi %s1821, 0.0
          %s1827 = sphi %s1822, 0.0
        %s1828 = sadd.f32 %s1574, %s1826
        %s1829 = sadd.f32 %s1575, %s1827
        %s1830 = sadd.f32 %s1576, %s1638
        %vm1831 = vcmp.eq.s32.totalorder %v292, 7
        %vm1832 = vcmp.eq.s32.totalorder %v293, 7
        %v1833 = vsel %vm1831, 1, 0
        %v1834 = vsel %vm1832, 1, 0
        %v1835 = vcvt.s32.f32 %v1833
        %v1836 = vcvt.s32.f32 %v1834
        %v1837 = vrot.slane %v1835, 7
        %v1838 = vrot.slane %v1836, 7
        %v1839 = vsel %vm313, %v1837, %v1838
        %v1840 = vsel %vm313, %v1838, %v1837
        %v1841 = vsel %vm299, %v1840, 0.0
        %v1842 = vsel %vm300, %v1839, 0.0
        %v1843 = vrot.slane %v1835, 1
        %v1844 = vrot.slane %v1836, 1
        %v1845 = vsel %vm320, %v1843, %v1844
        %v1846 = vsel %vm320, %v1844, %v1843
        %v1847 = vsel %vm301, %v1845, 0.0
        %v1848 = vsel %vm302, %v1846, 0.0
        %1849 = vrot.lane.b32.xlu0 %v1835, 1
        %v1850 = vpop.permute.xlu0 %1849
        %1851 = vrot.lane.b32.xlu0 %v1836, 1
        %v1852 = vpop.permute.xlu0 %1851
        %v1853 = vsel %vm303, %v1850, 0.0
        %v1854 = vsel %vm303, %v1852, 0.0
        %1855 = vrot.lane.b32.xlu0 %v1835, 127
        %v1856 = vpop.permute.xlu0 %1855
        %1857 = vrot.lane.b32.xlu0 %v1836, 127
        %v1858 = vpop.permute.xlu0 %1857
        %v1859 = vsel %vm304, %v1856, 0.0
        %v1860 = vsel %vm304, %v1858, 0.0
        %v1861 = vmax.f32 %v1835, %v1841
        %v1862 = vmax.f32 %v1836, %v1842
        %v1863 = vmax.f32 %v1847, %v1853
        %v1864 = vmax.f32 %v1848, %v1854
        %v1865 = vmax.f32 %v1861, %v1863
        %v1866 = vmax.f32 %v1862, %v1864
        %v1867 = vmax.f32 %v1865, %v1859
        %v1868 = vmax.f32 %v1866, %v1860
        %v1869 = vmin.f32 %v1835, %v1841
        %v1870 = vmin.f32 %v1836, %v1842
        %v1871 = vmin.f32 %v1847, %v1853
        %v1872 = vmin.f32 %v1848, %v1854
        %v1873 = vmin.f32 %v1869, %v1871
        %v1874 = vmin.f32 %v1870, %v1872
        %v1875 = vmin.f32 %v1873, %v1859
        %v1876 = vmin.f32 %v1874, %v1860
        %v1877 = vsub.f32 %v1867, %v1875
        %v1878 = vsub.f32 %v1868, %v1876
        %v1879 = vsub.f32 1.0, %v1877
        %v1880 = vsub.f32 1.0, %v1878
        %v1881 = vmul.f32 %v1835, %v1879
        %v1882 = vmul.f32 %v1836, %v1880
        %v1883 = vadd.f32 %v1877, %v1878
        %1884 = vadd.xlane.f32.xlu0 %v1883
        %v1885 = vpop.xlane.xlu0 %1884
        %v1886 = vrot.slane %v1885, 4
        %v1887 = vadd.f32 %v1885, %v1886
        %v1888 = vrot.slane %v1887, 2
        %v1889 = vadd.f32 %v1887, %v1888
        %v1890 = vrot.slane %v1889, 1
        %v1891 = vadd.f32 %v1889, %v1890
        %s1892 = vtos %v1891
        %p1893 = scmp.gt.f32.partialorder %s1892, 0.0
        // Predicated region
        $region93: #{tpu_custom_call.1} parent=31 // pred_check
          %p1894 = pneg %p1893
        $region94: #{tpu_custom_call.1} parent=31 // pred_check_branch
          %1896 = sbr.rel (%p1894) target = $region96
        $region95: #{tpu_custom_call.1} parent=31 // pred_region
          %s1897 = scalar_lea.vmem %s248, 112 [#allocation5]
          %v1898 = vld [vmem:[%s1897] sm:$0xff]
          %v1899 = vld [vmem:[%s1897 + $0x8] sm:$0xff]
          %s1900 = scalar_lea.vmem %s257, 112 [#allocation7]
          %v1901 = vld [vmem:[%s1900] sm:$0xff]
          %v1902 = vld [vmem:[%s1900 + $0x8] sm:$0xff]
          %v1903 = vmul.f32 %v1898, %v1877
          %v1904 = vmul.f32 %v1899, %v1878
          %v1905 = vmul.f32 %v1901, %v1877
          %v1906 = vmul.f32 %v1902, %v1878
          %v1907 = vmax.f32 %v1903, %v1904
          %1908 = vmax.xlane.f32.xlu0 %v1907
          %v1909 = vpop.xlane.xlu0 %1908
          %v1910 = vrot.slane %v1909, 4
          %v1911 = vmax.f32 %v1909, %v1910
          %v1912 = vrot.slane %v1911, 2
          %v1913 = vmax.f32 %v1911, %v1912
          %v1914 = vrot.slane %v1913, 1
          %v1915 = vmax.f32 %v1913, %v1914
          %s1916 = vtos %v1915
          %v1917 = vmax.f32 %v1905, %v1906
          %1918 = vmax.xlane.f32.xlu0 %v1917
          %v1919 = vpop.xlane.xlu0 %1918
          %v1920 = vrot.slane %v1919, 4
          %v1921 = vmax.f32 %v1919, %v1920
          %v1922 = vrot.slane %v1921, 2
          %v1923 = vmax.f32 %v1921, %v1922
          %v1924 = vrot.slane %v1923, 1
          %v1925 = vmax.f32 %v1923, %v1924
          %s1926 = vtos %v1925
          %v1927 = vstv %s1916
          %v1928 = vsub.f32 %v1903, %v1927
          %v1929 = vsub.f32 %v1904, %v1927
          %v1930 = vstv %s1926
          %v1931 = vsub.f32 %v1905, %v1930
          %v1932 = vsub.f32 %v1906, %v1930
          %v1933 = vmul.f32 %v1931, 1.442695
          %v1934 = vpow.pop %v1933
          %v1935 = vmul.f32 %v1932, 1.442695
          %v1936 = vpow.pop %v1935
          %v1937 = vmul.f32 %v1928, 1.442695
          %v1938 = vpow.pop %v1937
          %v1939 = vmul.f32 %v1929, 1.442695
          %v1940 = vpow.pop %v1939
          %v1941 = vadd.f32 %v1938, %v1940
          %1942 = vadd.xlane.f32.xlu0 %v1941
          %v1943 = vpop.xlane.xlu0 %1942
          %v1944 = vrot.slane %v1943, 4
          %v1945 = vadd.f32 %v1943, %v1944
          %v1946 = vrot.slane %v1945, 2
          %v1947 = vadd.f32 %v1945, %v1946
          %v1948 = vrot.slane %v1947, 1
          %v1949 = vadd.f32 %v1947, %v1948
          %s1950 = vtos %v1949
          %v1951 = vadd.f32 %v1934, %v1936
          %1952 = vadd.xlane.f32.xlu0 %v1951
          %v1953 = vpop.xlane.xlu0 %1952
          %v1954 = vrot.slane %v1953, 4
          %v1955 = vadd.f32 %v1953, %v1954
          %v1956 = vrot.slane %v1955, 2
          %v1957 = vadd.f32 %v1955, %v1956
          %v1958 = vrot.slane %v1957, 1
          %v1959 = vadd.f32 %v1957, %v1958
          %s1960 = vtos %v1959
          %v1961 = vsub.f32 %v1931, %v1928
          %v1962 = vsub.f32 %v1932, %v1929
          %v1963 = vmul.f32 %v1934, %v1961
          %v1964 = vmul.f32 %v1936, %v1962
          %v1965 = vadd.f32 %v1963, %v1964
          %1966 = vadd.xlane.f32.xlu0 %v1965
          %v1967 = vpop.xlane.xlu0 %1966
          %v1968 = vrot.slane %v1967, 4
          %v1969 = vadd.f32 %v1967, %v1968
          %v1970 = vrot.slane %v1969, 2
          %v1971 = vadd.f32 %v1969, %v1970
          %v1972 = vrot.slane %v1971, 1
          %v1973 = vadd.f32 %v1971, %v1972
          %s1974 = vtos %v1973
          %v1975 = vstv %s1960
          %v1976 = vrcp.pop %v1975
          %s1977 = vtos %v1976
          %s1978 = smul.f32 %s1974, %s1977
          %v1979 = vstv %s1950
          %v1980 = vlog2.pop %v1979
          %v1981 = vmul.f32 %v1980, 0.6931472
          %s1982 = vtos %v1981
          %v1983 = vstv %s1960
          %v1984 = vlog2.pop %v1983
          %v1985 = vmul.f32 %v1984, 0.6931472
          %s1986 = vtos %v1985
          %s1987 = ssub.f32 %s1982, %s1986
          %s1988 = sadd.f32 %s1978, %s1987
          %v1989 = vmul.f32 %v1898, %v1881
          %v1990 = vmul.f32 %v1899, %v1882
          %v1991 = vmul.f32 %v1901, %v1881
          %v1992 = vmul.f32 %v1902, %v1882
          %v1993 = vmax.f32 %v1989, %v1990
          %1994 = vmax.xlane.f32.xlu0 %v1993
          %v1995 = vpop.xlane.xlu0 %1994
          %v1996 = vrot.slane %v1995, 4
          %v1997 = vmax.f32 %v1995, %v1996
          %v1998 = vrot.slane %v1997, 2
          %v1999 = vmax.f32 %v1997, %v1998
          %v2000 = vrot.slane %v1999, 1
          %v2001 = vmax.f32 %v1999, %v2000
          %s2002 = vtos %v2001
          %v2003 = vmax.f32 %v1991, %v1992
          %2004 = vmax.xlane.f32.xlu0 %v2003
          %v2005 = vpop.xlane.xlu0 %2004
          %v2006 = vrot.slane %v2005, 4
          %v2007 = vmax.f32 %v2005, %v2006
          %v2008 = vrot.slane %v2007, 2
          %v2009 = vmax.f32 %v2007, %v2008
          %v2010 = vrot.slane %v2009, 1
          %v2011 = vmax.f32 %v2009, %v2010
          %s2012 = vtos %v2011
          %v2013 = vstv %s2002
          %v2014 = vsub.f32 %v1989, %v2013
          %v2015 = vsub.f32 %v1990, %v2013
          %v2016 = vstv %s2012
          %v2017 = vsub.f32 %v1991, %v2016
          %v2018 = vsub.f32 %v1992, %v2016
          %v2019 = vmul.f32 %v2017, 1.442695
          %v2020 = vpow.pop %v2019
          %v2021 = vmul.f32 %v2018, 1.442695
          %v2022 = vpow.pop %v2021
          %v2023 = vmul.f32 %v2014, 1.442695
          %v2024 = vpow.pop %v2023
          %v2025 = vmul.f32 %v2015, 1.442695
          %v2026 = vpow.pop %v2025
          %v2027 = vadd.f32 %v2024, %v2026
          %2028 = vadd.xlane.f32.xlu0 %v2027
          %v2029 = vpop.xlane.xlu0 %2028
          %v2030 = vrot.slane %v2029, 4
          %v2031 = vadd.f32 %v2029, %v2030
          %v2032 = vrot.slane %v2031, 2
          %v2033 = vadd.f32 %v2031, %v2032
          %v2034 = vrot.slane %v2033, 1
          %v2035 = vadd.f32 %v2033, %v2034
          %s2036 = vtos %v2035
          %v2037 = vadd.f32 %v2020, %v2022
          %2038 = vadd.xlane.f32.xlu0 %v2037
          %v2039 = vpop.xlane.xlu0 %2038
          %v2040 = vrot.slane %v2039, 4
          %v2041 = vadd.f32 %v2039, %v2040
          %v2042 = vrot.slane %v2041, 2
          %v2043 = vadd.f32 %v2041, %v2042
          %v2044 = vrot.slane %v2043, 1
          %v2045 = vadd.f32 %v2043, %v2044
          %s2046 = vtos %v2045
          %v2047 = vsub.f32 %v2017, %v2014
          %v2048 = vsub.f32 %v2018, %v2015
          %v2049 = vmul.f32 %v2020, %v2047
          %v2050 = vmul.f32 %v2022, %v2048
          %v2051 = vadd.f32 %v2049, %v2050
          %2052 = vadd.xlane.f32.xlu0 %v2051
          %v2053 = vpop.xlane.xlu0 %2052
          %v2054 = vrot.slane %v2053, 4
          %v2055 = vadd.f32 %v2053, %v2054
          %v2056 = vrot.slane %v2055, 2
          %v2057 = vadd.f32 %v2055, %v2056
          %v2058 = vrot.slane %v2057, 1
          %v2059 = vadd.f32 %v2057, %v2058
          %s2060 = vtos %v2059
          %v2061 = vstv %s2046
          %v2062 = vrcp.pop %v2061
          %s2063 = vtos %v2062
          %s2064 = smul.f32 %s2060, %s2063
          %v2065 = vstv %s2036
          %v2066 = vlog2.pop %v2065
          %v2067 = vmul.f32 %v2066, 0.6931472
          %s2068 = vtos %v2067
          %v2069 = vstv %s2046
          %v2070 = vlog2.pop %v2069
          %v2071 = vmul.f32 %v2070, 0.6931472
          %s2072 = vtos %v2071
          %s2073 = ssub.f32 %s2068, %s2072
          %s2074 = sadd.f32 %s2064, %s2073
        $region96: #{tpu_custom_call.1} parent=31 // pred_fallthru
          %s2075 = sphi 0, %s1988
          %s2076 = sphi 0, %s2074
        %p2077 = pneg %p1893
        // Predicated region
        $region97: #{tpu_custom_call.1} parent=31 // pred_check
          _
        $region98: #{tpu_custom_call.1} parent=31 // pred_check_branch
          %2079 = sbr.rel (%p1893) target = $region100
        $region99: #{tpu_custom_call.1} parent=31 // pred_region
          _
        $region100: #{tpu_custom_call.1} parent=31 // pred_fallthru
          %s2080 = sphi %s2075, 0.0
          %s2081 = sphi %s2076, 0.0
        %s2082 = sadd.f32 %s1828, %s2080
        %s2083 = sadd.f32 %s1829, %s2081
        %s2084 = sadd.f32 %s1830, %s1892
        %vm2085 = vcmp.eq.s32.totalorder %v292, 8
        %vm2086 = vcmp.eq.s32.totalorder %v293, 8
        %v2087 = vsel %vm2085, 1, 0
        %v2088 = vsel %vm2086, 1, 0
        %v2089 = vcvt.s32.f32 %v2087
        %v2090 = vcvt.s32.f32 %v2088
        %v2091 = vrot.slane %v2089, 7
        %v2092 = vrot.slane %v2090, 7
        %v2093 = vsel %vm313, %v2091, %v2092
        %v2094 = vsel %vm313, %v2092, %v2091
        %v2095 = vsel %vm299, %v2094, 0.0
        %v2096 = vsel %vm300, %v2093, 0.0
        %v2097 = vrot.slane %v2089, 1
        %v2098 = vrot.slane %v2090, 1
        %v2099 = vsel %vm320, %v2097, %v2098
        %v2100 = vsel %vm320, %v2098, %v2097
        %v2101 = vsel %vm301, %v2099, 0.0
        %v2102 = vsel %vm302, %v2100, 0.0
        %2103 = vrot.lane.b32.xlu0 %v2089, 1
        %v2104 = vpop.permute.xlu0 %2103
        %2105 = vrot.lane.b32.xlu0 %v2090, 1
        %v2106 = vpop.permute.xlu0 %2105
        %v2107 = vsel %vm303, %v2104, 0.0
        %v2108 = vsel %vm303, %v2106, 0.0
        %2109 = vrot.lane.b32.xlu0 %v2089, 127
        %v2110 = vpop.permute.xlu0 %2109
        %2111 = vrot.lane.b32.xlu0 %v2090, 127
        %v2112 = vpop.permute.xlu0 %2111
        %v2113 = vsel %vm304, %v2110, 0.0
        %v2114 = vsel %vm304, %v2112, 0.0
        %v2115 = vmax.f32 %v2089, %v2095
        %v2116 = vmax.f32 %v2090, %v2096
        %v2117 = vmax.f32 %v2101, %v2107
        %v2118 = vmax.f32 %v2102, %v2108
        %v2119 = vmax.f32 %v2115, %v2117
        %v2120 = vmax.f32 %v2116, %v2118
        %v2121 = vmax.f32 %v2119, %v2113
        %v2122 = vmax.f32 %v2120, %v2114
        %v2123 = vmin.f32 %v2089, %v2095
        %v2124 = vmin.f32 %v2090, %v2096
        %v2125 = vmin.f32 %v2101, %v2107
        %v2126 = vmin.f32 %v2102, %v2108
        %v2127 = vmin.f32 %v2123, %v2125
        %v2128 = vmin.f32 %v2124, %v2126
        %v2129 = vmin.f32 %v2127, %v2113
        %v2130 = vmin.f32 %v2128, %v2114
        %v2131 = vsub.f32 %v2121, %v2129
        %v2132 = vsub.f32 %v2122, %v2130
        %v2133 = vsub.f32 1.0, %v2131
        %v2134 = vsub.f32 1.0, %v2132
        %v2135 = vmul.f32 %v2089, %v2133
        %v2136 = vmul.f32 %v2090, %v2134
        %v2137 = vadd.f32 %v2131, %v2132
        %2138 = vadd.xlane.f32.xlu0 %v2137
        %v2139 = vpop.xlane.xlu0 %2138
        %v2140 = vrot.slane %v2139, 4
        %v2141 = vadd.f32 %v2139, %v2140
        %v2142 = vrot.slane %v2141, 2
        %v2143 = vadd.f32 %v2141, %v2142
        %v2144 = vrot.slane %v2143, 1
        %v2145 = vadd.f32 %v2143, %v2144
        %s2146 = vtos %v2145
        %p2147 = scmp.gt.f32.partialorder %s2146, 0.0
        // Predicated region
        $region101: #{tpu_custom_call.1} parent=31 // pred_check
          %p2148 = pneg %p2147
        $region102: #{tpu_custom_call.1} parent=31 // pred_check_branch
          %2150 = sbr.rel (%p2148) target = $region104
        $region103: #{tpu_custom_call.1} parent=31 // pred_region
          %s2151 = scalar_lea.vmem %s248, 128 [#allocation5]
          %v2152 = vld [vmem:[%s2151] sm:$0xff]
          %v2153 = vld [vmem:[%s2151 + $0x8] sm:$0xff]
          %s2154 = scalar_lea.vmem %s257, 128 [#allocation7]
          %v2155 = vld [vmem:[%s2154] sm:$0xff]
          %v2156 = vld [vmem:[%s2154 + $0x8] sm:$0xff]
          %v2157 = vmul.f32 %v2152, %v2131
          %v2158 = vmul.f32 %v2153, %v2132
          %v2159 = vmul.f32 %v2155, %v2131
          %v2160 = vmul.f32 %v2156, %v2132
          %v2161 = vmax.f32 %v2157, %v2158
          %2162 = vmax.xlane.f32.xlu0 %v2161
          %v2163 = vpop.xlane.xlu0 %2162
          %v2164 = vrot.slane %v2163, 4
          %v2165 = vmax.f32 %v2163, %v2164
          %v2166 = vrot.slane %v2165, 2
          %v2167 = vmax.f32 %v2165, %v2166
          %v2168 = vrot.slane %v2167, 1
          %v2169 = vmax.f32 %v2167, %v2168
          %s2170 = vtos %v2169
          %v2171 = vmax.f32 %v2159, %v2160
          %2172 = vmax.xlane.f32.xlu0 %v2171
          %v2173 = vpop.xlane.xlu0 %2172
          %v2174 = vrot.slane %v2173, 4
          %v2175 = vmax.f32 %v2173, %v2174
          %v2176 = vrot.slane %v2175, 2
          %v2177 = vmax.f32 %v2175, %v2176
          %v2178 = vrot.slane %v2177, 1
          %v2179 = vmax.f32 %v2177, %v2178
          %s2180 = vtos %v2179
          %v2181 = vstv %s2170
          %v2182 = vsub.f32 %v2157, %v2181
          %v2183 = vsub.f32 %v2158, %v2181
          %v2184 = vstv %s2180
          %v2185 = vsub.f32 %v2159, %v2184
          %v2186 = vsub.f32 %v2160, %v2184
          %v2187 = vmul.f32 %v2185, 1.442695
          %v2188 = vpow.pop %v2187
          %v2189 = vmul.f32 %v2186, 1.442695
          %v2190 = vpow.pop %v2189
          %v2191 = vmul.f32 %v2182, 1.442695
          %v2192 = vpow.pop %v2191
          %v2193 = vmul.f32 %v2183, 1.442695
          %v2194 = vpow.pop %v2193
          %v2195 = vadd.f32 %v2192, %v2194
          %2196 = vadd.xlane.f32.xlu0 %v2195
          %v2197 = vpop.xlane.xlu0 %2196
          %v2198 = vrot.slane %v2197, 4
          %v2199 = vadd.f32 %v2197, %v2198
          %v2200 = vrot.slane %v2199, 2
          %v2201 = vadd.f32 %v2199, %v2200
          %v2202 = vrot.slane %v2201, 1
          %v2203 = vadd.f32 %v2201, %v2202
          %s2204 = vtos %v2203
          %v2205 = vadd.f32 %v2188, %v2190
          %2206 = vadd.xlane.f32.xlu0 %v2205
          %v2207 = vpop.xlane.xlu0 %2206
          %v2208 = vrot.slane %v2207, 4
          %v2209 = vadd.f32 %v2207, %v2208
          %v2210 = vrot.slane %v2209, 2
          %v2211 = vadd.f32 %v2209, %v2210
          %v2212 = vrot.slane %v2211, 1
          %v2213 = vadd.f32 %v2211, %v2212
          %s2214 = vtos %v2213
          %v2215 = vsub.f32 %v2185, %v2182
          %v2216 = vsub.f32 %v2186, %v2183
          %v2217 = vmul.f32 %v2188, %v2215
          %v2218 = vmul.f32 %v2190, %v2216
          %v2219 = vadd.f32 %v2217, %v2218
          %2220 = vadd.xlane.f32.xlu0 %v2219
          %v2221 = vpop.xlane.xlu0 %2220
          %v2222 = vrot.slane %v2221, 4
          %v2223 = vadd.f32 %v2221, %v2222
          %v2224 = vrot.slane %v2223, 2
          %v2225 = vadd.f32 %v2223, %v2224
          %v2226 = vrot.slane %v2225, 1
          %v2227 = vadd.f32 %v2225, %v2226
          %s2228 = vtos %v2227
          %v2229 = vstv %s2214
          %v2230 = vrcp.pop %v2229
          %s2231 = vtos %v2230
          %s2232 = smul.f32 %s2228, %s2231
          %v2233 = vstv %s2204
          %v2234 = vlog2.pop %v2233
          %v2235 = vmul.f32 %v2234, 0.6931472
          %s2236 = vtos %v2235
          %v2237 = vstv %s2214
          %v2238 = vlog2.pop %v2237
          %v2239 = vmul.f32 %v2238, 0.6931472
          %s2240 = vtos %v2239
          %s2241 = ssub.f32 %s2236, %s2240
          %s2242 = sadd.f32 %s2232, %s2241
          %v2243 = vmul.f32 %v2152, %v2135
          %v2244 = vmul.f32 %v2153, %v2136
          %v2245 = vmul.f32 %v2155, %v2135
          %v2246 = vmul.f32 %v2156, %v2136
          %v2247 = vmax.f32 %v2243, %v2244
          %2248 = vmax.xlane.f32.xlu0 %v2247
          %v2249 = vpop.xlane.xlu0 %2248
          %v2250 = vrot.slane %v2249, 4
          %v2251 = vmax.f32 %v2249, %v2250
          %v2252 = vrot.slane %v2251, 2
          %v2253 = vmax.f32 %v2251, %v2252
          %v2254 = vrot.slane %v2253, 1
          %v2255 = vmax.f32 %v2253, %v2254
          %s2256 = vtos %v2255
          %v2257 = vmax.f32 %v2245, %v2246
          %2258 = vmax.xlane.f32.xlu0 %v2257
          %v2259 = vpop.xlane.xlu0 %2258
          %v2260 = vrot.slane %v2259, 4
          %v2261 = vmax.f32 %v2259, %v2260
          %v2262 = vrot.slane %v2261, 2
          %v2263 = vmax.f32 %v2261, %v2262
          %v2264 = vrot.slane %v2263, 1
          %v2265 = vmax.f32 %v2263, %v2264
          %s2266 = vtos %v2265
          %v2267 = vstv %s2256
          %v2268 = vsub.f32 %v2243, %v2267
          %v2269 = vsub.f32 %v2244, %v2267
          %v2270 = vstv %s2266
          %v2271 = vsub.f32 %v2245, %v2270
          %v2272 = vsub.f32 %v2246, %v2270
          %v2273 = vmul.f32 %v2271, 1.442695
          %v2274 = vpow.pop %v2273
          %v2275 = vmul.f32 %v2272, 1.442695
          %v2276 = vpow.pop %v2275
          %v2277 = vmul.f32 %v2268, 1.442695
          %v2278 = vpow.pop %v2277
          %v2279 = vmul.f32 %v2269, 1.442695
          %v2280 = vpow.pop %v2279
          %v2281 = vadd.f32 %v2278, %v2280
          %2282 = vadd.xlane.f32.xlu0 %v2281
          %v2283 = vpop.xlane.xlu0 %2282
          %v2284 = vrot.slane %v2283, 4
          %v2285 = vadd.f32 %v2283, %v2284
          %v2286 = vrot.slane %v2285, 2
          %v2287 = vadd.f32 %v2285, %v2286
          %v2288 = vrot.slane %v2287, 1
          %v2289 = vadd.f32 %v2287, %v2288
          %s2290 = vtos %v2289
          %v2291 = vadd.f32 %v2274, %v2276
          %2292 = vadd.xlane.f32.xlu0 %v2291
          %v2293 = vpop.xlane.xlu0 %2292
          %v2294 = vrot.slane %v2293, 4
          %v2295 = vadd.f32 %v2293, %v2294
          %v2296 = vrot.slane %v2295, 2
          %v2297 = vadd.f32 %v2295, %v2296
          %v2298 = vrot.slane %v2297, 1
          %v2299 = vadd.f32 %v2297, %v2298
          %s2300 = vtos %v2299
          %v2301 = vsub.f32 %v2271, %v2268
          %v2302 = vsub.f32 %v2272, %v2269
          %v2303 = vmul.f32 %v2274, %v2301
          %v2304 = vmul.f32 %v2276, %v2302
          %v2305 = vadd.f32 %v2303, %v2304
          %2306 = vadd.xlane.f32.xlu0 %v2305
          %v2307 = vpop.xlane.xlu0 %2306
          %v2308 = vrot.slane %v2307, 4
          %v2309 = vadd.f32 %v2307, %v2308
          %v2310 = vrot.slane %v2309, 2
          %v2311 = vadd.f32 %v2309, %v2310
          %v2312 = vrot.slane %v2311, 1
          %v2313 = vadd.f32 %v2311, %v2312
          %s2314 = vtos %v2313
          %v2315 = vstv %s2300
          %v2316 = vrcp.pop %v2315
          %s2317 = vtos %v2316
          %s2318 = smul.f32 %s2314, %s2317
          %v2319 = vstv %s2290
          %v2320 = vlog2.pop %v2319
          %v2321 = vmul.f32 %v2320, 0.6931472
          %s2322 = vtos %v2321
          %v2323 = vstv %s2300
          %v2324 = vlog2.pop %v2323
          %v2325 = vmul.f32 %v2324, 0.6931472
          %s2326 = vtos %v2325
          %s2327 = ssub.f32 %s2322, %s2326
          %s2328 = sadd.f32 %s2318, %s2327
        $region104: #{tpu_custom_call.1} parent=31 // pred_fallthru
          %s2329 = sphi 0, %s2242
          %s2330 = sphi 0, %s2328
        %p2331 = pneg %p2147
        // Predicated region
        $region105: #{tpu_custom_call.1} parent=31 // pred_check
          _
        $region106: #{tpu_custom_call.1} parent=31 // pred_check_branch
          %2333 = sbr.rel (%p2147) target = $region108
        $region107: #{tpu_custom_call.1} parent=31 // pred_region
          _
        $region108: #{tpu_custom_call.1} parent=31 // pred_fallthru
          %s2334 = sphi %s2329, 0.0
          %s2335 = sphi %s2330, 0.0
        %s2336 = sadd.f32 %s2082, %s2334
        %s2337 = sadd.f32 %s2083, %s2335
        %s2338 = sadd.f32 %s2084, %s2146
        %vm2339 = vcmp.eq.s32.totalorder %v292, 9
        %vm2340 = vcmp.eq.s32.totalorder %v293, 9
        %v2341 = vsel %vm2339, 1, 0
        %v2342 = vsel %vm2340, 1, 0
        %v2343 = vcvt.s32.f32 %v2341
        %v2344 = vcvt.s32.f32 %v2342
        %v2345 = vrot.slane %v2343, 7
        %v2346 = vrot.slane %v2344, 7
        %v2347 = vsel %vm313, %v2345, %v2346
        %v2348 = vsel %vm313, %v2346, %v2345
        %v2349 = vsel %vm299, %v2348, 0.0
        %v2350 = vsel %vm300, %v2347, 0.0
        %v2351 = vrot.slane %v2343, 1
        %v2352 = vrot.slane %v2344, 1
        %v2353 = vsel %vm320, %v2351, %v2352
        %v2354 = vsel %vm320, %v2352, %v2351
        %v2355 = vsel %vm301, %v2353, 0.0
        %v2356 = vsel %vm302, %v2354, 0.0
        %2357 = vrot.lane.b32.xlu0 %v2343, 1
        %v2358 = vpop.permute.xlu0 %2357
        %2359 = vrot.lane.b32.xlu0 %v2344, 1
        %v2360 = vpop.permute.xlu0 %2359
        %v2361 = vsel %vm303, %v2358, 0.0
        %v2362 = vsel %vm303, %v2360, 0.0
        %2363 = vrot.lane.b32.xlu0 %v2343, 127
        %v2364 = vpop.permute.xlu0 %2363
        %2365 = vrot.lane.b32.xlu0 %v2344, 127
        %v2366 = vpop.permute.xlu0 %2365
        %v2367 = vsel %vm304, %v2364, 0.0
        %v2368 = vsel %vm304, %v2366, 0.0
        %v2369 = vmax.f32 %v2343, %v2349
        %v2370 = vmax.f32 %v2344, %v2350
        %v2371 = vmax.f32 %v2355, %v2361
        %v2372 = vmax.f32 %v2356, %v2362
        %v2373 = vmax.f32 %v2369, %v2371
        %v2374 = vmax.f32 %v2370, %v2372
        %v2375 = vmax.f32 %v2373, %v2367
        %v2376 = vmax.f32 %v2374, %v2368
        %v2377 = vmin.f32 %v2343, %v2349
        %v2378 = vmin.f32 %v2344, %v2350
        %v2379 = vmin.f32 %v2355, %v2361
        %v2380 = vmin.f32 %v2356, %v2362
        %v2381 = vmin.f32 %v2377, %v2379
        %v2382 = vmin.f32 %v2378, %v2380
        %v2383 = vmin.f32 %v2381, %v2367
        %v2384 = vmin.f32 %v2382, %v2368
        %v2385 = vsub.f32 %v2375, %v2383
        %v2386 = vsub.f32 %v2376, %v2384
        %v2387 = vsub.f32 1.0, %v2385
        %v2388 = vsub.f32 1.0, %v2386
        %v2389 = vmul.f32 %v2343, %v2387
        %v2390 = vmul.f32 %v2344, %v2388
        %v2391 = vadd.f32 %v2385, %v2386
        %2392 = vadd.xlane.f32.xlu0 %v2391
        %v2393 = vpop.xlane.xlu0 %2392
        %v2394 = vrot.slane %v2393, 4
        %v2395 = vadd.f32 %v2393, %v2394
        %v2396 = vrot.slane %v2395, 2
        %v2397 = vadd.f32 %v2395, %v2396
        %v2398 = vrot.slane %v2397, 1
        %v2399 = vadd.f32 %v2397, %v2398
        %s2400 = vtos %v2399
        %p2401 = scmp.gt.f32.partialorder %s2400, 0.0
        // Predicated region
        $region109: #{tpu_custom_call.1} parent=31 // pred_check
          %p2402 = pneg %p2401
        $region110: #{tpu_custom_call.1} parent=31 // pred_check_branch
          %2404 = sbr.rel (%p2402) target = $region112
        $region111: #{tpu_custom_call.1} parent=31 // pred_region
          %s2405 = scalar_lea.vmem %s248, 144 [#allocation5]
          %v2406 = vld [vmem:[%s2405] sm:$0xff]
          %v2407 = vld [vmem:[%s2405 + $0x8] sm:$0xff]
          %s2408 = scalar_lea.vmem %s257, 144 [#allocation7]
          %v2409 = vld [vmem:[%s2408] sm:$0xff]
          %v2410 = vld [vmem:[%s2408 + $0x8] sm:$0xff]
          %v2411 = vmul.f32 %v2406, %v2385
          %v2412 = vmul.f32 %v2407, %v2386
          %v2413 = vmul.f32 %v2409, %v2385
          %v2414 = vmul.f32 %v2410, %v2386
          %v2415 = vmax.f32 %v2411, %v2412
          %2416 = vmax.xlane.f32.xlu0 %v2415
          %v2417 = vpop.xlane.xlu0 %2416
          %v2418 = vrot.slane %v2417, 4
          %v2419 = vmax.f32 %v2417, %v2418
          %v2420 = vrot.slane %v2419, 2
          %v2421 = vmax.f32 %v2419, %v2420
          %v2422 = vrot.slane %v2421, 1
          %v2423 = vmax.f32 %v2421, %v2422
          %s2424 = vtos %v2423
          %v2425 = vmax.f32 %v2413, %v2414
          %2426 = vmax.xlane.f32.xlu0 %v2425
          %v2427 = vpop.xlane.xlu0 %2426
          %v2428 = vrot.slane %v2427, 4
          %v2429 = vmax.f32 %v2427, %v2428
          %v2430 = vrot.slane %v2429, 2
          %v2431 = vmax.f32 %v2429, %v2430
          %v2432 = vrot.slane %v2431, 1
          %v2433 = vmax.f32 %v2431, %v2432
          %s2434 = vtos %v2433
          %v2435 = vstv %s2424
          %v2436 = vsub.f32 %v2411, %v2435
          %v2437 = vsub.f32 %v2412, %v2435
          %v2438 = vstv %s2434
          %v2439 = vsub.f32 %v2413, %v2438
          %v2440 = vsub.f32 %v2414, %v2438
          %v2441 = vmul.f32 %v2439, 1.442695
          %v2442 = vpow.pop %v2441
          %v2443 = vmul.f32 %v2440, 1.442695
          %v2444 = vpow.pop %v2443
          %v2445 = vmul.f32 %v2436, 1.442695
          %v2446 = vpow.pop %v2445
          %v2447 = vmul.f32 %v2437, 1.442695
          %v2448 = vpow.pop %v2447
          %v2449 = vadd.f32 %v2446, %v2448
          %2450 = vadd.xlane.f32.xlu0 %v2449
          %v2451 = vpop.xlane.xlu0 %2450
          %v2452 = vrot.slane %v2451, 4
          %v2453 = vadd.f32 %v2451, %v2452
          %v2454 = vrot.slane %v2453, 2
          %v2455 = vadd.f32 %v2453, %v2454
          %v2456 = vrot.slane %v2455, 1
          %v2457 = vadd.f32 %v2455, %v2456
          %s2458 = vtos %v2457
          %v2459 = vadd.f32 %v2442, %v2444
          %2460 = vadd.xlane.f32.xlu0 %v2459
          %v2461 = vpop.xlane.xlu0 %2460
          %v2462 = vrot.slane %v2461, 4
          %v2463 = vadd.f32 %v2461, %v2462
          %v2464 = vrot.slane %v2463, 2
          %v2465 = vadd.f32 %v2463, %v2464
          %v2466 = vrot.slane %v2465, 1
          %v2467 = vadd.f32 %v2465, %v2466
          %s2468 = vtos %v2467
          %v2469 = vsub.f32 %v2439, %v2436
          %v2470 = vsub.f32 %v2440, %v2437
          %v2471 = vmul.f32 %v2442, %v2469
          %v2472 = vmul.f32 %v2444, %v2470
          %v2473 = vadd.f32 %v2471, %v2472
          %2474 = vadd.xlane.f32.xlu0 %v2473
          %v2475 = vpop.xlane.xlu0 %2474
          %v2476 = vrot.slane %v2475, 4
          %v2477 = vadd.f32 %v2475, %v2476
          %v2478 = vrot.slane %v2477, 2
          %v2479 = vadd.f32 %v2477, %v2478
          %v2480 = vrot.slane %v2479, 1
          %v2481 = vadd.f32 %v2479, %v2480
          %s2482 = vtos %v2481
          %v2483 = vstv %s2468
          %v2484 = vrcp.pop %v2483
          %s2485 = vtos %v2484
          %s2486 = smul.f32 %s2482, %s2485
          %v2487 = vstv %s2458
          %v2488 = vlog2.pop %v2487
          %v2489 = vmul.f32 %v2488, 0.6931472
          %s2490 = vtos %v2489
          %v2491 = vstv %s2468
          %v2492 = vlog2.pop %v2491
          %v2493 = vmul.f32 %v2492, 0.6931472
          %s2494 = vtos %v2493
          %s2495 = ssub.f32 %s2490, %s2494
          %s2496 = sadd.f32 %s2486, %s2495
          %v2497 = vmul.f32 %v2406, %v2389
          %v2498 = vmul.f32 %v2407, %v2390
          %v2499 = vmul.f32 %v2409, %v2389
          %v2500 = vmul.f32 %v2410, %v2390
          %v2501 = vmax.f32 %v2497, %v2498
          %2502 = vmax.xlane.f32.xlu0 %v2501
          %v2503 = vpop.xlane.xlu0 %2502
          %v2504 = vrot.slane %v2503, 4
          %v2505 = vmax.f32 %v2503, %v2504
          %v2506 = vrot.slane %v2505, 2
          %v2507 = vmax.f32 %v2505, %v2506
          %v2508 = vrot.slane %v2507, 1
          %v2509 = vmax.f32 %v2507, %v2508
          %s2510 = vtos %v2509
          %v2511 = vmax.f32 %v2499, %v2500
          %2512 = vmax.xlane.f32.xlu0 %v2511
          %v2513 = vpop.xlane.xlu0 %2512
          %v2514 = vrot.slane %v2513, 4
          %v2515 = vmax.f32 %v2513, %v2514
          %v2516 = vrot.slane %v2515, 2
          %v2517 = vmax.f32 %v2515, %v2516
          %v2518 = vrot.slane %v2517, 1
          %v2519 = vmax.f32 %v2517, %v2518
          %s2520 = vtos %v2519
          %v2521 = vstv %s2510
          %v2522 = vsub.f32 %v2497, %v2521
          %v2523 = vsub.f32 %v2498, %v2521
          %v2524 = vstv %s2520
          %v2525 = vsub.f32 %v2499, %v2524
          %v2526 = vsub.f32 %v2500, %v2524
          %v2527 = vmul.f32 %v2525, 1.442695
          %v2528 = vpow.pop %v2527
          %v2529 = vmul.f32 %v2526, 1.442695
          %v2530 = vpow.pop %v2529
          %v2531 = vmul.f32 %v2522, 1.442695
          %v2532 = vpow.pop %v2531
          %v2533 = vmul.f32 %v2523, 1.442695
          %v2534 = vpow.pop %v2533
          %v2535 = vadd.f32 %v2532, %v2534
          %2536 = vadd.xlane.f32.xlu0 %v2535
          %v2537 = vpop.xlane.xlu0 %2536
          %v2538 = vrot.slane %v2537, 4
          %v2539 = vadd.f32 %v2537, %v2538
          %v2540 = vrot.slane %v2539, 2
          %v2541 = vadd.f32 %v2539, %v2540
          %v2542 = vrot.slane %v2541, 1
          %v2543 = vadd.f32 %v2541, %v2542
          %s2544 = vtos %v2543
          %v2545 = vadd.f32 %v2528, %v2530
          %2546 = vadd.xlane.f32.xlu0 %v2545
          %v2547 = vpop.xlane.xlu0 %2546
          %v2548 = vrot.slane %v2547, 4
          %v2549 = vadd.f32 %v2547, %v2548
          %v2550 = vrot.slane %v2549, 2
          %v2551 = vadd.f32 %v2549, %v2550
          %v2552 = vrot.slane %v2551, 1
          %v2553 = vadd.f32 %v2551, %v2552
          %s2554 = vtos %v2553
          %v2555 = vsub.f32 %v2525, %v2522
          %v2556 = vsub.f32 %v2526, %v2523
          %v2557 = vmul.f32 %v2528, %v2555
          %v2558 = vmul.f32 %v2530, %v2556
          %v2559 = vadd.f32 %v2557, %v2558
          %2560 = vadd.xlane.f32.xlu0 %v2559
          %v2561 = vpop.xlane.xlu0 %2560
          %v2562 = vrot.slane %v2561, 4
          %v2563 = vadd.f32 %v2561, %v2562
          %v2564 = vrot.slane %v2563, 2
          %v2565 = vadd.f32 %v2563, %v2564
          %v2566 = vrot.slane %v2565, 1
          %v2567 = vadd.f32 %v2565, %v2566
          %s2568 = vtos %v2567
          %v2569 = vstv %s2554
          %v2570 = vrcp.pop %v2569
          %s2571 = vtos %v2570
          %s2572 = smul.f32 %s2568, %s2571
          %v2573 = vstv %s2544
          %v2574 = vlog2.pop %v2573
          %v2575 = vmul.f32 %v2574, 0.6931472
          %s2576 = vtos %v2575
          %v2577 = vstv %s2554
          %v2578 = vlog2.pop %v2577
          %v2579 = vmul.f32 %v2578, 0.6931472
          %s2580 = vtos %v2579
          %s2581 = ssub.f32 %s2576, %s2580
          %s2582 = sadd.f32 %s2572, %s2581
        $region112: #{tpu_custom_call.1} parent=31 // pred_fallthru
          %s2583 = sphi 0, %s2496
          %s2584 = sphi 0, %s2582
        %p2585 = pneg %p2401
        // Predicated region
        $region113: #{tpu_custom_call.1} parent=31 // pred_check
          _
        $region114: #{tpu_custom_call.1} parent=31 // pred_check_branch
          %2587 = sbr.rel (%p2401) target = $region116
        $region115: #{tpu_custom_call.1} parent=31 // pred_region
          _
        $region116: #{tpu_custom_call.1} parent=31 // pred_fallthru
          %s2588 = sphi %s2583, 0.0
          %s2589 = sphi %s2584, 0.0
        %s2590 = sadd.f32 %s2336, %s2588
        %s2591 = sadd.f32 %s2337, %s2589
        %s2592 = sadd.f32 %s2338, %s2400
        %vm2593 = vcmp.eq.s32.totalorder %v292, 10
        %vm2594 = vcmp.eq.s32.totalorder %v293, 10
        %v2595 = vsel %vm2593, 1, 0
        %v2596 = vsel %vm2594, 1, 0
        %v2597 = vcvt.s32.f32 %v2595
        %v2598 = vcvt.s32.f32 %v2596
        %v2599 = vrot.slane %v2597, 7
        %v2600 = vrot.slane %v2598, 7
        %v2601 = vsel %vm313, %v2599, %v2600
        %v2602 = vsel %vm313, %v2600, %v2599
        %v2603 = vsel %vm299, %v2602, 0.0
        %v2604 = vsel %vm300, %v2601, 0.0
        %v2605 = vrot.slane %v2597, 1
        %v2606 = vrot.slane %v2598, 1
        %v2607 = vsel %vm320, %v2605, %v2606
        %v2608 = vsel %vm320, %v2606, %v2605
        %v2609 = vsel %vm301, %v2607, 0.0
        %v2610 = vsel %vm302, %v2608, 0.0
        %2611 = vrot.lane.b32.xlu0 %v2597, 1
        %v2612 = vpop.permute.xlu0 %2611
        %2613 = vrot.lane.b32.xlu0 %v2598, 1
        %v2614 = vpop.permute.xlu0 %2613
        %v2615 = vsel %vm303, %v2612, 0.0
        %v2616 = vsel %vm303, %v2614, 0.0
        %2617 = vrot.lane.b32.xlu0 %v2597, 127
        %v2618 = vpop.permute.xlu0 %2617
        %2619 = vrot.lane.b32.xlu0 %v2598, 127
        %v2620 = vpop.permute.xlu0 %2619
        %v2621 = vsel %vm304, %v2618, 0.0
        %v2622 = vsel %vm304, %v2620, 0.0
        %v2623 = vmax.f32 %v2597, %v2603
        %v2624 = vmax.f32 %v2598, %v2604
        %v2625 = vmax.f32 %v2609, %v2615
        %v2626 = vmax.f32 %v2610, %v2616
        %v2627 = vmax.f32 %v2623, %v2625
        %v2628 = vmax.f32 %v2624, %v2626
        %v2629 = vmax.f32 %v2627, %v2621
        %v2630 = vmax.f32 %v2628, %v2622
        %v2631 = vmin.f32 %v2597, %v2603
        %v2632 = vmin.f32 %v2598, %v2604
        %v2633 = vmin.f32 %v2609, %v2615
        %v2634 = vmin.f32 %v2610, %v2616
        %v2635 = vmin.f32 %v2631, %v2633
        %v2636 = vmin.f32 %v2632, %v2634
        %v2637 = vmin.f32 %v2635, %v2621
        %v2638 = vmin.f32 %v2636, %v2622
        %v2639 = vsub.f32 %v2629, %v2637
        %v2640 = vsub.f32 %v2630, %v2638
        %v2641 = vsub.f32 1.0, %v2639
        %v2642 = vsub.f32 1.0, %v2640
        %v2643 = vmul.f32 %v2597, %v2641
        %v2644 = vmul.f32 %v2598, %v2642
        %v2645 = vadd.f32 %v2639, %v2640
        %2646 = vadd.xlane.f32.xlu0 %v2645
        %v2647 = vpop.xlane.xlu0 %2646
        %v2648 = vrot.slane %v2647, 4
        %v2649 = vadd.f32 %v2647, %v2648
        %v2650 = vrot.slane %v2649, 2
        %v2651 = vadd.f32 %v2649, %v2650
        %v2652 = vrot.slane %v2651, 1
        %v2653 = vadd.f32 %v2651, %v2652
        %s2654 = vtos %v2653
        %p2655 = scmp.gt.f32.partialorder %s2654, 0.0
        // Predicated region
        $region117: #{tpu_custom_call.1} parent=31 // pred_check
          %p2656 = pneg %p2655
        $region118: #{tpu_custom_call.1} parent=31 // pred_check_branch
          %2658 = sbr.rel (%p2656) target = $region120
        $region119: #{tpu_custom_call.1} parent=31 // pred_region
          %s2659 = scalar_lea.vmem %s248, 160 [#allocation5]
          %v2660 = vld [vmem:[%s2659] sm:$0xff]
          %v2661 = vld [vmem:[%s2659 + $0x8] sm:$0xff]
          %s2662 = scalar_lea.vmem %s257, 160 [#allocation7]
          %v2663 = vld [vmem:[%s2662] sm:$0xff]
          %v2664 = vld [vmem:[%s2662 + $0x8] sm:$0xff]
          %v2665 = vmul.f32 %v2660, %v2639
          %v2666 = vmul.f32 %v2661, %v2640
          %v2667 = vmul.f32 %v2663, %v2639
          %v2668 = vmul.f32 %v2664, %v2640
          %v2669 = vmax.f32 %v2665, %v2666
          %2670 = vmax.xlane.f32.xlu0 %v2669
          %v2671 = vpop.xlane.xlu0 %2670
          %v2672 = vrot.slane %v2671, 4
          %v2673 = vmax.f32 %v2671, %v2672
          %v2674 = vrot.slane %v2673, 2
          %v2675 = vmax.f32 %v2673, %v2674
          %v2676 = vrot.slane %v2675, 1
          %v2677 = vmax.f32 %v2675, %v2676
          %s2678 = vtos %v2677
          %v2679 = vmax.f32 %v2667, %v2668
          %2680 = vmax.xlane.f32.xlu0 %v2679
          %v2681 = vpop.xlane.xlu0 %2680
          %v2682 = vrot.slane %v2681, 4
          %v2683 = vmax.f32 %v2681, %v2682
          %v2684 = vrot.slane %v2683, 2
          %v2685 = vmax.f32 %v2683, %v2684
          %v2686 = vrot.slane %v2685, 1
          %v2687 = vmax.f32 %v2685, %v2686
          %s2688 = vtos %v2687
          %v2689 = vstv %s2678
          %v2690 = vsub.f32 %v2665, %v2689
          %v2691 = vsub.f32 %v2666, %v2689
          %v2692 = vstv %s2688
          %v2693 = vsub.f32 %v2667, %v2692
          %v2694 = vsub.f32 %v2668, %v2692
          %v2695 = vmul.f32 %v2693, 1.442695
          %v2696 = vpow.pop %v2695
          %v2697 = vmul.f32 %v2694, 1.442695
          %v2698 = vpow.pop %v2697
          %v2699 = vmul.f32 %v2690, 1.442695
          %v2700 = vpow.pop %v2699
          %v2701 = vmul.f32 %v2691, 1.442695
          %v2702 = vpow.pop %v2701
          %v2703 = vadd.f32 %v2700, %v2702
          %2704 = vadd.xlane.f32.xlu0 %v2703
          %v2705 = vpop.xlane.xlu0 %2704
          %v2706 = vrot.slane %v2705, 4
          %v2707 = vadd.f32 %v2705, %v2706
          %v2708 = vrot.slane %v2707, 2
          %v2709 = vadd.f32 %v2707, %v2708
          %v2710 = vrot.slane %v2709, 1
          %v2711 = vadd.f32 %v2709, %v2710
          %s2712 = vtos %v2711
          %v2713 = vadd.f32 %v2696, %v2698
          %2714 = vadd.xlane.f32.xlu0 %v2713
          %v2715 = vpop.xlane.xlu0 %2714
          %v2716 = vrot.slane %v2715, 4
          %v2717 = vadd.f32 %v2715, %v2716
          %v2718 = vrot.slane %v2717, 2
          %v2719 = vadd.f32 %v2717, %v2718
          %v2720 = vrot.slane %v2719, 1
          %v2721 = vadd.f32 %v2719, %v2720
          %s2722 = vtos %v2721
          %v2723 = vsub.f32 %v2693, %v2690
          %v2724 = vsub.f32 %v2694, %v2691
          %v2725 = vmul.f32 %v2696, %v2723
          %v2726 = vmul.f32 %v2698, %v2724
          %v2727 = vadd.f32 %v2725, %v2726
          %2728 = vadd.xlane.f32.xlu0 %v2727
          %v2729 = vpop.xlane.xlu0 %2728
          %v2730 = vrot.slane %v2729, 4
          %v2731 = vadd.f32 %v2729, %v2730
          %v2732 = vrot.slane %v2731, 2
          %v2733 = vadd.f32 %v2731, %v2732
          %v2734 = vrot.slane %v2733, 1
          %v2735 = vadd.f32 %v2733, %v2734
          %s2736 = vtos %v2735
          %v2737 = vstv %s2722
          %v2738 = vrcp.pop %v2737
          %s2739 = vtos %v2738
          %s2740 = smul.f32 %s2736, %s2739
          %v2741 = vstv %s2712
          %v2742 = vlog2.pop %v2741
          %v2743 = vmul.f32 %v2742, 0.6931472
          %s2744 = vtos %v2743
          %v2745 = vstv %s2722
          %v2746 = vlog2.pop %v2745
          %v2747 = vmul.f32 %v2746, 0.6931472
          %s2748 = vtos %v2747
          %s2749 = ssub.f32 %s2744, %s2748
          %s2750 = sadd.f32 %s2740, %s2749
          %v2751 = vmul.f32 %v2660, %v2643
          %v2752 = vmul.f32 %v2661, %v2644
          %v2753 = vmul.f32 %v2663, %v2643
          %v2754 = vmul.f32 %v2664, %v2644
          %v2755 = vmax.f32 %v2751, %v2752
          %2756 = vmax.xlane.f32.xlu0 %v2755
          %v2757 = vpop.xlane.xlu0 %2756
          %v2758 = vrot.slane %v2757, 4
          %v2759 = vmax.f32 %v2757, %v2758
          %v2760 = vrot.slane %v2759, 2
          %v2761 = vmax.f32 %v2759, %v2760
          %v2762 = vrot.slane %v2761, 1
          %v2763 = vmax.f32 %v2761, %v2762
          %s2764 = vtos %v2763
          %v2765 = vmax.f32 %v2753, %v2754
          %2766 = vmax.xlane.f32.xlu0 %v2765
          %v2767 = vpop.xlane.xlu0 %2766
          %v2768 = vrot.slane %v2767, 4
          %v2769 = vmax.f32 %v2767, %v2768
          %v2770 = vrot.slane %v2769, 2
          %v2771 = vmax.f32 %v2769, %v2770
          %v2772 = vrot.slane %v2771, 1
          %v2773 = vmax.f32 %v2771, %v2772
          %s2774 = vtos %v2773
          %v2775 = vstv %s2764
          %v2776 = vsub.f32 %v2751, %v2775
          %v2777 = vsub.f32 %v2752, %v2775
          %v2778 = vstv %s2774
          %v2779 = vsub.f32 %v2753, %v2778
          %v2780 = vsub.f32 %v2754, %v2778
          %v2781 = vmul.f32 %v2779, 1.442695
          %v2782 = vpow.pop %v2781
          %v2783 = vmul.f32 %v2780, 1.442695
          %v2784 = vpow.pop %v2783
          %v2785 = vmul.f32 %v2776, 1.442695
          %v2786 = vpow.pop %v2785
          %v2787 = vmul.f32 %v2777, 1.442695
          %v2788 = vpow.pop %v2787
          %v2789 = vadd.f32 %v2786, %v2788
          %2790 = vadd.xlane.f32.xlu0 %v2789
          %v2791 = vpop.xlane.xlu0 %2790
          %v2792 = vrot.slane %v2791, 4
          %v2793 = vadd.f32 %v2791, %v2792
          %v2794 = vrot.slane %v2793, 2
          %v2795 = vadd.f32 %v2793, %v2794
          %v2796 = vrot.slane %v2795, 1
          %v2797 = vadd.f32 %v2795, %v2796
          %s2798 = vtos %v2797
          %v2799 = vadd.f32 %v2782, %v2784
          %2800 = vadd.xlane.f32.xlu0 %v2799
          %v2801 = vpop.xlane.xlu0 %2800
          %v2802 = vrot.slane %v2801, 4
          %v2803 = vadd.f32 %v2801, %v2802
          %v2804 = vrot.slane %v2803, 2
          %v2805 = vadd.f32 %v2803, %v2804
          %v2806 = vrot.slane %v2805, 1
          %v2807 = vadd.f32 %v2805, %v2806
          %s2808 = vtos %v2807
          %v2809 = vsub.f32 %v2779, %v2776
          %v2810 = vsub.f32 %v2780, %v2777
          %v2811 = vmul.f32 %v2782, %v2809
          %v2812 = vmul.f32 %v2784, %v2810
          %v2813 = vadd.f32 %v2811, %v2812
          %2814 = vadd.xlane.f32.xlu0 %v2813
          %v2815 = vpop.xlane.xlu0 %2814
          %v2816 = vrot.slane %v2815, 4
          %v2817 = vadd.f32 %v2815, %v2816
          %v2818 = vrot.slane %v2817, 2
          %v2819 = vadd.f32 %v2817, %v2818
          %v2820 = vrot.slane %v2819, 1
          %v2821 = vadd.f32 %v2819, %v2820
          %s2822 = vtos %v2821
          %v2823 = vstv %s2808
          %v2824 = vrcp.pop %v2823
          %s2825 = vtos %v2824
          %s2826 = smul.f32 %s2822, %s2825
          %v2827 = vstv %s2798
          %v2828 = vlog2.pop %v2827
          %v2829 = vmul.f32 %v2828, 0.6931472
          %s2830 = vtos %v2829
          %v2831 = vstv %s2808
          %v2832 = vlog2.pop %v2831
          %v2833 = vmul.f32 %v2832, 0.6931472
          %s2834 = vtos %v2833
          %s2835 = ssub.f32 %s2830, %s2834
          %s2836 = sadd.f32 %s2826, %s2835
        $region120: #{tpu_custom_call.1} parent=31 // pred_fallthru
          %s2837 = sphi 0, %s2750
          %s2838 = sphi 0, %s2836
        %p2839 = pneg %p2655
        // Predicated region
        $region121: #{tpu_custom_call.1} parent=31 // pred_check
          _
        $region122: #{tpu_custom_call.1} parent=31 // pred_check_branch
          %2841 = sbr.rel (%p2655) target = $region124
        $region123: #{tpu_custom_call.1} parent=31 // pred_region
          _
        $region124: #{tpu_custom_call.1} parent=31 // pred_fallthru
          %s2842 = sphi %s2837, 0.0
          %s2843 = sphi %s2838, 0.0
        %s2844 = sadd.f32 %s2590, %s2842
        %s2845 = sadd.f32 %s2591, %s2843
        %s2846 = sadd.f32 %s2592, %s2654
        %vm2847 = vcmp.eq.s32.totalorder %v292, 11
        %vm2848 = vcmp.eq.s32.totalorder %v293, 11
        %v2849 = vsel %vm2847, 1, 0
        %v2850 = vsel %vm2848, 1, 0
        %v2851 = vcvt.s32.f32 %v2849
        %v2852 = vcvt.s32.f32 %v2850
        %v2853 = vrot.slane %v2851, 7
        %v2854 = vrot.slane %v2852, 7
        %v2855 = vsel %vm313, %v2853, %v2854
        %v2856 = vsel %vm313, %v2854, %v2853
        %v2857 = vsel %vm299, %v2856, 0.0
        %v2858 = vsel %vm300, %v2855, 0.0
        %v2859 = vrot.slane %v2851, 1
        %v2860 = vrot.slane %v2852, 1
        %v2861 = vsel %vm320, %v2859, %v2860
        %v2862 = vsel %vm320, %v2860, %v2859
        %v2863 = vsel %vm301, %v2861, 0.0
        %v2864 = vsel %vm302, %v2862, 0.0
        %2865 = vrot.lane.b32.xlu0 %v2851, 1
        %v2866 = vpop.permute.xlu0 %2865
        %2867 = vrot.lane.b32.xlu0 %v2852, 1
        %v2868 = vpop.permute.xlu0 %2867
        %v2869 = vsel %vm303, %v2866, 0.0
        %v2870 = vsel %vm303, %v2868, 0.0
        %2871 = vrot.lane.b32.xlu0 %v2851, 127
        %v2872 = vpop.permute.xlu0 %2871
        %2873 = vrot.lane.b32.xlu0 %v2852, 127
        %v2874 = vpop.permute.xlu0 %2873
        %v2875 = vsel %vm304, %v2872, 0.0
        %v2876 = vsel %vm304, %v2874, 0.0
        %v2877 = vmax.f32 %v2851, %v2857
        %v2878 = vmax.f32 %v2852, %v2858
        %v2879 = vmax.f32 %v2863, %v2869
        %v2880 = vmax.f32 %v2864, %v2870
        %v2881 = vmax.f32 %v2877, %v2879
        %v2882 = vmax.f32 %v2878, %v2880
        %v2883 = vmax.f32 %v2881, %v2875
        %v2884 = vmax.f32 %v2882, %v2876
        %v2885 = vmin.f32 %v2851, %v2857
        %v2886 = vmin.f32 %v2852, %v2858
        %v2887 = vmin.f32 %v2863, %v2869
        %v2888 = vmin.f32 %v2864, %v2870
        %v2889 = vmin.f32 %v2885, %v2887
        %v2890 = vmin.f32 %v2886, %v2888
        %v2891 = vmin.f32 %v2889, %v2875
        %v2892 = vmin.f32 %v2890, %v2876
        %v2893 = vsub.f32 %v2883, %v2891
        %v2894 = vsub.f32 %v2884, %v2892
        %v2895 = vsub.f32 1.0, %v2893
        %v2896 = vsub.f32 1.0, %v2894
        %v2897 = vmul.f32 %v2851, %v2895
        %v2898 = vmul.f32 %v2852, %v2896
        %v2899 = vadd.f32 %v2893, %v2894
        %2900 = vadd.xlane.f32.xlu0 %v2899
        %v2901 = vpop.xlane.xlu0 %2900
        %v2902 = vrot.slane %v2901, 4
        %v2903 = vadd.f32 %v2901, %v2902
        %v2904 = vrot.slane %v2903, 2
        %v2905 = vadd.f32 %v2903, %v2904
        %v2906 = vrot.slane %v2905, 1
        %v2907 = vadd.f32 %v2905, %v2906
        %s2908 = vtos %v2907
        %p2909 = scmp.gt.f32.partialorder %s2908, 0.0
        // Predicated region
        $region125: #{tpu_custom_call.1} parent=31 // pred_check
          %p2910 = pneg %p2909
        $region126: #{tpu_custom_call.1} parent=31 // pred_check_branch
          %2912 = sbr.rel (%p2910) target = $region128
        $region127: #{tpu_custom_call.1} parent=31 // pred_region
          %s2913 = scalar_lea.vmem %s248, 176 [#allocation5]
          %v2914 = vld [vmem:[%s2913] sm:$0xff]
          %v2915 = vld [vmem:[%s2913 + $0x8] sm:$0xff]
          %s2916 = scalar_lea.vmem %s257, 176 [#allocation7]
          %v2917 = vld [vmem:[%s2916] sm:$0xff]
          %v2918 = vld [vmem:[%s2916 + $0x8] sm:$0xff]
          %v2919 = vmul.f32 %v2914, %v2893
          %v2920 = vmul.f32 %v2915, %v2894
          %v2921 = vmul.f32 %v2917, %v2893
          %v2922 = vmul.f32 %v2918, %v2894
          %v2923 = vmax.f32 %v2919, %v2920
          %2924 = vmax.xlane.f32.xlu0 %v2923
          %v2925 = vpop.xlane.xlu0 %2924
          %v2926 = vrot.slane %v2925, 4
          %v2927 = vmax.f32 %v2925, %v2926
          %v2928 = vrot.slane %v2927, 2
          %v2929 = vmax.f32 %v2927, %v2928
          %v2930 = vrot.slane %v2929, 1
          %v2931 = vmax.f32 %v2929, %v2930
          %s2932 = vtos %v2931
          %v2933 = vmax.f32 %v2921, %v2922
          %2934 = vmax.xlane.f32.xlu0 %v2933
          %v2935 = vpop.xlane.xlu0 %2934
          %v2936 = vrot.slane %v2935, 4
          %v2937 = vmax.f32 %v2935, %v2936
          %v2938 = vrot.slane %v2937, 2
          %v2939 = vmax.f32 %v2937, %v2938
          %v2940 = vrot.slane %v2939, 1
          %v2941 = vmax.f32 %v2939, %v2940
          %s2942 = vtos %v2941
          %v2943 = vstv %s2932
          %v2944 = vsub.f32 %v2919, %v2943
          %v2945 = vsub.f32 %v2920, %v2943
          %v2946 = vstv %s2942
          %v2947 = vsub.f32 %v2921, %v2946
          %v2948 = vsub.f32 %v2922, %v2946
          %v2949 = vmul.f32 %v2947, 1.442695
          %v2950 = vpow.pop %v2949
          %v2951 = vmul.f32 %v2948, 1.442695
          %v2952 = vpow.pop %v2951
          %v2953 = vmul.f32 %v2944, 1.442695
          %v2954 = vpow.pop %v2953
          %v2955 = vmul.f32 %v2945, 1.442695
          %v2956 = vpow.pop %v2955
          %v2957 = vadd.f32 %v2954, %v2956
          %2958 = vadd.xlane.f32.xlu0 %v2957
          %v2959 = vpop.xlane.xlu0 %2958
          %v2960 = vrot.slane %v2959, 4
          %v2961 = vadd.f32 %v2959, %v2960
          %v2962 = vrot.slane %v2961, 2
          %v2963 = vadd.f32 %v2961, %v2962
          %v2964 = vrot.slane %v2963, 1
          %v2965 = vadd.f32 %v2963, %v2964
          %s2966 = vtos %v2965
          %v2967 = vadd.f32 %v2950, %v2952
          %2968 = vadd.xlane.f32.xlu0 %v2967
          %v2969 = vpop.xlane.xlu0 %2968
          %v2970 = vrot.slane %v2969, 4
          %v2971 = vadd.f32 %v2969, %v2970
          %v2972 = vrot.slane %v2971, 2
          %v2973 = vadd.f32 %v2971, %v2972
          %v2974 = vrot.slane %v2973, 1
          %v2975 = vadd.f32 %v2973, %v2974
          %s2976 = vtos %v2975
          %v2977 = vsub.f32 %v2947, %v2944
          %v2978 = vsub.f32 %v2948, %v2945
          %v2979 = vmul.f32 %v2950, %v2977
          %v2980 = vmul.f32 %v2952, %v2978
          %v2981 = vadd.f32 %v2979, %v2980
          %2982 = vadd.xlane.f32.xlu0 %v2981
          %v2983 = vpop.xlane.xlu0 %2982
          %v2984 = vrot.slane %v2983, 4
          %v2985 = vadd.f32 %v2983, %v2984
          %v2986 = vrot.slane %v2985, 2
          %v2987 = vadd.f32 %v2985, %v2986
          %v2988 = vrot.slane %v2987, 1
          %v2989 = vadd.f32 %v2987, %v2988
          %s2990 = vtos %v2989
          %v2991 = vstv %s2976
          %v2992 = vrcp.pop %v2991
          %s2993 = vtos %v2992
          %s2994 = smul.f32 %s2990, %s2993
          %v2995 = vstv %s2966
          %v2996 = vlog2.pop %v2995
          %v2997 = vmul.f32 %v2996, 0.6931472
          %s2998 = vtos %v2997
          %v2999 = vstv %s2976
          %v3000 = vlog2.pop %v2999
          %v3001 = vmul.f32 %v3000, 0.6931472
          %s3002 = vtos %v3001
          %s3003 = ssub.f32 %s2998, %s3002
          %s3004 = sadd.f32 %s2994, %s3003
          %v3005 = vmul.f32 %v2914, %v2897
          %v3006 = vmul.f32 %v2915, %v2898
          %v3007 = vmul.f32 %v2917, %v2897
          %v3008 = vmul.f32 %v2918, %v2898
          %v3009 = vmax.f32 %v3005, %v3006
          %3010 = vmax.xlane.f32.xlu0 %v3009
          %v3011 = vpop.xlane.xlu0 %3010
          %v3012 = vrot.slane %v3011, 4
          %v3013 = vmax.f32 %v3011, %v3012
          %v3014 = vrot.slane %v3013, 2
          %v3015 = vmax.f32 %v3013, %v3014
          %v3016 = vrot.slane %v3015, 1
          %v3017 = vmax.f32 %v3015, %v3016
          %s3018 = vtos %v3017
          %v3019 = vmax.f32 %v3007, %v3008
          %3020 = vmax.xlane.f32.xlu0 %v3019
          %v3021 = vpop.xlane.xlu0 %3020
          %v3022 = vrot.slane %v3021, 4
          %v3023 = vmax.f32 %v3021, %v3022
          %v3024 = vrot.slane %v3023, 2
          %v3025 = vmax.f32 %v3023, %v3024
          %v3026 = vrot.slane %v3025, 1
          %v3027 = vmax.f32 %v3025, %v3026
          %s3028 = vtos %v3027
          %v3029 = vstv %s3018
          %v3030 = vsub.f32 %v3005, %v3029
          %v3031 = vsub.f32 %v3006, %v3029
          %v3032 = vstv %s3028
          %v3033 = vsub.f32 %v3007, %v3032
          %v3034 = vsub.f32 %v3008, %v3032
          %v3035 = vmul.f32 %v3033, 1.442695
          %v3036 = vpow.pop %v3035
          %v3037 = vmul.f32 %v3034, 1.442695
          %v3038 = vpow.pop %v3037
          %v3039 = vmul.f32 %v3030, 1.442695
          %v3040 = vpow.pop %v3039
          %v3041 = vmul.f32 %v3031, 1.442695
          %v3042 = vpow.pop %v3041
          %v3043 = vadd.f32 %v3040, %v3042
          %3044 = vadd.xlane.f32.xlu0 %v3043
          %v3045 = vpop.xlane.xlu0 %3044
          %v3046 = vrot.slane %v3045, 4
          %v3047 = vadd.f32 %v3045, %v3046
          %v3048 = vrot.slane %v3047, 2
          %v3049 = vadd.f32 %v3047, %v3048
          %v3050 = vrot.slane %v3049, 1
          %v3051 = vadd.f32 %v3049, %v3050
          %s3052 = vtos %v3051
          %v3053 = vadd.f32 %v3036, %v3038
          %3054 = vadd.xlane.f32.xlu0 %v3053
          %v3055 = vpop.xlane.xlu0 %3054
          %v3056 = vrot.slane %v3055, 4
          %v3057 = vadd.f32 %v3055, %v3056
          %v3058 = vrot.slane %v3057, 2
          %v3059 = vadd.f32 %v3057, %v3058
          %v3060 = vrot.slane %v3059, 1
          %v3061 = vadd.f32 %v3059, %v3060
          %s3062 = vtos %v3061
          %v3063 = vsub.f32 %v3033, %v3030
          %v3064 = vsub.f32 %v3034, %v3031
          %v3065 = vmul.f32 %v3036, %v3063
          %v3066 = vmul.f32 %v3038, %v3064
          %v3067 = vadd.f32 %v3065, %v3066
          %3068 = vadd.xlane.f32.xlu0 %v3067
          %v3069 = vpop.xlane.xlu0 %3068
          %v3070 = vrot.slane %v3069, 4
          %v3071 = vadd.f32 %v3069, %v3070
          %v3072 = vrot.slane %v3071, 2
          %v3073 = vadd.f32 %v3071, %v3072
          %v3074 = vrot.slane %v3073, 1
          %v3075 = vadd.f32 %v3073, %v3074
          %s3076 = vtos %v3075
          %v3077 = vstv %s3062
          %v3078 = vrcp.pop %v3077
          %s3079 = vtos %v3078
          %s3080 = smul.f32 %s3076, %s3079
          %v3081 = vstv %s3052
          %v3082 = vlog2.pop %v3081
          %v3083 = vmul.f32 %v3082, 0.6931472
          %s3084 = vtos %v3083
          %v3085 = vstv %s3062
          %v3086 = vlog2.pop %v3085
          %v3087 = vmul.f32 %v3086, 0.6931472
          %s3088 = vtos %v3087
          %s3089 = ssub.f32 %s3084, %s3088
          %s3090 = sadd.f32 %s3080, %s3089
        $region128: #{tpu_custom_call.1} parent=31 // pred_fallthru
          %s3091 = sphi 0, %s3004
          %s3092 = sphi 0, %s3090
        %p3093 = pneg %p2909
        // Predicated region
        $region129: #{tpu_custom_call.1} parent=31 // pred_check
          _
        $region130: #{tpu_custom_call.1} parent=31 // pred_check_branch
          %3095 = sbr.rel (%p2909) target = $region132
        $region131: #{tpu_custom_call.1} parent=31 // pred_region
          _
        $region132: #{tpu_custom_call.1} parent=31 // pred_fallthru
          %s3096 = sphi %s3091, 0.0
          %s3097 = sphi %s3092, 0.0
        %s3098 = sadd.f32 %s2844, %s3096
        %s3099 = sadd.f32 %s2845, %s3097
        %s3100 = sadd.f32 %s2846, %s2908
        %vm3101 = vcmp.eq.s32.totalorder %v292, 12
        %vm3102 = vcmp.eq.s32.totalorder %v293, 12
        %v3103 = vsel %vm3101, 1, 0
        %v3104 = vsel %vm3102, 1, 0
        %v3105 = vcvt.s32.f32 %v3103
        %v3106 = vcvt.s32.f32 %v3104
        %v3107 = vrot.slane %v3105, 7
        %v3108 = vrot.slane %v3106, 7
        %v3109 = vsel %vm313, %v3107, %v3108
        %v3110 = vsel %vm313, %v3108, %v3107
        %v3111 = vsel %vm299, %v3110, 0.0
        %v3112 = vsel %vm300, %v3109, 0.0
        %v3113 = vrot.slane %v3105, 1
        %v3114 = vrot.slane %v3106, 1
        %v3115 = vsel %vm320, %v3113, %v3114
        %v3116 = vsel %vm320, %v3114, %v3113
        %v3117 = vsel %vm301, %v3115, 0.0
        %v3118 = vsel %vm302, %v3116, 0.0
        %3119 = vrot.lane.b32.xlu0 %v3105, 1
        %v3120 = vpop.permute.xlu0 %3119
        %3121 = vrot.lane.b32.xlu0 %v3106, 1
        %v3122 = vpop.permute.xlu0 %3121
        %v3123 = vsel %vm303, %v3120, 0.0
        %v3124 = vsel %vm303, %v3122, 0.0
        %3125 = vrot.lane.b32.xlu0 %v3105, 127
        %v3126 = vpop.permute.xlu0 %3125
        %3127 = vrot.lane.b32.xlu0 %v3106, 127
        %v3128 = vpop.permute.xlu0 %3127
        %v3129 = vsel %vm304, %v3126, 0.0
        %v3130 = vsel %vm304, %v3128, 0.0
        %v3131 = vmax.f32 %v3105, %v3111
        %v3132 = vmax.f32 %v3106, %v3112
        %v3133 = vmax.f32 %v3117, %v3123
        %v3134 = vmax.f32 %v3118, %v3124
        %v3135 = vmax.f32 %v3131, %v3133
        %v3136 = vmax.f32 %v3132, %v3134
        %v3137 = vmax.f32 %v3135, %v3129
        %v3138 = vmax.f32 %v3136, %v3130
        %v3139 = vmin.f32 %v3105, %v3111
        %v3140 = vmin.f32 %v3106, %v3112
        %v3141 = vmin.f32 %v3117, %v3123
        %v3142 = vmin.f32 %v3118, %v3124
        %v3143 = vmin.f32 %v3139, %v3141
        %v3144 = vmin.f32 %v3140, %v3142
        %v3145 = vmin.f32 %v3143, %v3129
        %v3146 = vmin.f32 %v3144, %v3130
        %v3147 = vsub.f32 %v3137, %v3145
        %v3148 = vsub.f32 %v3138, %v3146
        %v3149 = vsub.f32 1.0, %v3147
        %v3150 = vsub.f32 1.0, %v3148
        %v3151 = vmul.f32 %v3105, %v3149
        %v3152 = vmul.f32 %v3106, %v3150
        %v3153 = vadd.f32 %v3147, %v3148
        %3154 = vadd.xlane.f32.xlu0 %v3153
        %v3155 = vpop.xlane.xlu0 %3154
        %v3156 = vrot.slane %v3155, 4
        %v3157 = vadd.f32 %v3155, %v3156
        %v3158 = vrot.slane %v3157, 2
        %v3159 = vadd.f32 %v3157, %v3158
        %v3160 = vrot.slane %v3159, 1
        %v3161 = vadd.f32 %v3159, %v3160
        %s3162 = vtos %v3161
        %p3163 = scmp.gt.f32.partialorder %s3162, 0.0
        // Predicated region
        $region133: #{tpu_custom_call.1} parent=31 // pred_check
          %p3164 = pneg %p3163
        $region134: #{tpu_custom_call.1} parent=31 // pred_check_branch
          %3166 = sbr.rel (%p3164) target = $region136
        $region135: #{tpu_custom_call.1} parent=31 // pred_region
          %s3167 = scalar_lea.vmem %s248, 192 [#allocation5]
          %v3168 = vld [vmem:[%s3167] sm:$0xff]
          %v3169 = vld [vmem:[%s3167 + $0x8] sm:$0xff]
          %s3170 = scalar_lea.vmem %s257, 192 [#allocation7]
          %v3171 = vld [vmem:[%s3170] sm:$0xff]
          %v3172 = vld [vmem:[%s3170 + $0x8] sm:$0xff]
          %v3173 = vmul.f32 %v3168, %v3147
          %v3174 = vmul.f32 %v3169, %v3148
          %v3175 = vmul.f32 %v3171, %v3147
          %v3176 = vmul.f32 %v3172, %v3148
          %v3177 = vmax.f32 %v3173, %v3174
          %3178 = vmax.xlane.f32.xlu0 %v3177
          %v3179 = vpop.xlane.xlu0 %3178
          %v3180 = vrot.slane %v3179, 4
          %v3181 = vmax.f32 %v3179, %v3180
          %v3182 = vrot.slane %v3181, 2
          %v3183 = vmax.f32 %v3181, %v3182
          %v3184 = vrot.slane %v3183, 1
          %v3185 = vmax.f32 %v3183, %v3184
          %s3186 = vtos %v3185
          %v3187 = vmax.f32 %v3175, %v3176
          %3188 = vmax.xlane.f32.xlu0 %v3187
          %v3189 = vpop.xlane.xlu0 %3188
          %v3190 = vrot.slane %v3189, 4
          %v3191 = vmax.f32 %v3189, %v3190
          %v3192 = vrot.slane %v3191, 2
          %v3193 = vmax.f32 %v3191, %v3192
          %v3194 = vrot.slane %v3193, 1
          %v3195 = vmax.f32 %v3193, %v3194
          %s3196 = vtos %v3195
          %v3197 = vstv %s3186
          %v3198 = vsub.f32 %v3173, %v3197
          %v3199 = vsub.f32 %v3174, %v3197
          %v3200 = vstv %s3196
          %v3201 = vsub.f32 %v3175, %v3200
          %v3202 = vsub.f32 %v3176, %v3200
          %v3203 = vmul.f32 %v3201, 1.442695
          %v3204 = vpow.pop %v3203
          %v3205 = vmul.f32 %v3202, 1.442695
          %v3206 = vpow.pop %v3205
          %v3207 = vmul.f32 %v3198, 1.442695
          %v3208 = vpow.pop %v3207
          %v3209 = vmul.f32 %v3199, 1.442695
          %v3210 = vpow.pop %v3209
          %v3211 = vadd.f32 %v3208, %v3210
          %3212 = vadd.xlane.f32.xlu0 %v3211
          %v3213 = vpop.xlane.xlu0 %3212
          %v3214 = vrot.slane %v3213, 4
          %v3215 = vadd.f32 %v3213, %v3214
          %v3216 = vrot.slane %v3215, 2
          %v3217 = vadd.f32 %v3215, %v3216
          %v3218 = vrot.slane %v3217, 1
          %v3219 = vadd.f32 %v3217, %v3218
          %s3220 = vtos %v3219
          %v3221 = vadd.f32 %v3204, %v3206
          %3222 = vadd.xlane.f32.xlu0 %v3221
          %v3223 = vpop.xlane.xlu0 %3222
          %v3224 = vrot.slane %v3223, 4
          %v3225 = vadd.f32 %v3223, %v3224
          %v3226 = vrot.slane %v3225, 2
          %v3227 = vadd.f32 %v3225, %v3226
          %v3228 = vrot.slane %v3227, 1
          %v3229 = vadd.f32 %v3227, %v3228
          %s3230 = vtos %v3229
          %v3231 = vsub.f32 %v3201, %v3198
          %v3232 = vsub.f32 %v3202, %v3199
          %v3233 = vmul.f32 %v3204, %v3231
          %v3234 = vmul.f32 %v3206, %v3232
          %v3235 = vadd.f32 %v3233, %v3234
          %3236 = vadd.xlane.f32.xlu0 %v3235
          %v3237 = vpop.xlane.xlu0 %3236
          %v3238 = vrot.slane %v3237, 4
          %v3239 = vadd.f32 %v3237, %v3238
          %v3240 = vrot.slane %v3239, 2
          %v3241 = vadd.f32 %v3239, %v3240
          %v3242 = vrot.slane %v3241, 1
          %v3243 = vadd.f32 %v3241, %v3242
          %s3244 = vtos %v3243
          %v3245 = vstv %s3230
          %v3246 = vrcp.pop %v3245
          %s3247 = vtos %v3246
          %s3248 = smul.f32 %s3244, %s3247
          %v3249 = vstv %s3220
          %v3250 = vlog2.pop %v3249
          %v3251 = vmul.f32 %v3250, 0.6931472
          %s3252 = vtos %v3251
          %v3253 = vstv %s3230
          %v3254 = vlog2.pop %v3253
          %v3255 = vmul.f32 %v3254, 0.6931472
          %s3256 = vtos %v3255
          %s3257 = ssub.f32 %s3252, %s3256
          %s3258 = sadd.f32 %s3248, %s3257
          %v3259 = vmul.f32 %v3168, %v3151
          %v3260 = vmul.f32 %v3169, %v3152
          %v3261 = vmul.f32 %v3171, %v3151
          %v3262 = vmul.f32 %v3172, %v3152
          %v3263 = vmax.f32 %v3259, %v3260
          %3264 = vmax.xlane.f32.xlu0 %v3263
          %v3265 = vpop.xlane.xlu0 %3264
          %v3266 = vrot.slane %v3265, 4
          %v3267 = vmax.f32 %v3265, %v3266
          %v3268 = vrot.slane %v3267, 2
          %v3269 = vmax.f32 %v3267, %v3268
          %v3270 = vrot.slane %v3269, 1
          %v3271 = vmax.f32 %v3269, %v3270
          %s3272 = vtos %v3271
          %v3273 = vmax.f32 %v3261, %v3262
          %3274 = vmax.xlane.f32.xlu0 %v3273
          %v3275 = vpop.xlane.xlu0 %3274
          %v3276 = vrot.slane %v3275, 4
          %v3277 = vmax.f32 %v3275, %v3276
          %v3278 = vrot.slane %v3277, 2
          %v3279 = vmax.f32 %v3277, %v3278
          %v3280 = vrot.slane %v3279, 1
          %v3281 = vmax.f32 %v3279, %v3280
          %s3282 = vtos %v3281
          %v3283 = vstv %s3272
          %v3284 = vsub.f32 %v3259, %v3283
          %v3285 = vsub.f32 %v3260, %v3283
          %v3286 = vstv %s3282
          %v3287 = vsub.f32 %v3261, %v3286
          %v3288 = vsub.f32 %v3262, %v3286
          %v3289 = vmul.f32 %v3287, 1.442695
          %v3290 = vpow.pop %v3289
          %v3291 = vmul.f32 %v3288, 1.442695
          %v3292 = vpow.pop %v3291
          %v3293 = vmul.f32 %v3284, 1.442695
          %v3294 = vpow.pop %v3293
          %v3295 = vmul.f32 %v3285, 1.442695
          %v3296 = vpow.pop %v3295
          %v3297 = vadd.f32 %v3294, %v3296
          %3298 = vadd.xlane.f32.xlu0 %v3297
          %v3299 = vpop.xlane.xlu0 %3298
          %v3300 = vrot.slane %v3299, 4
          %v3301 = vadd.f32 %v3299, %v3300
          %v3302 = vrot.slane %v3301, 2
          %v3303 = vadd.f32 %v3301, %v3302
          %v3304 = vrot.slane %v3303, 1
          %v3305 = vadd.f32 %v3303, %v3304
          %s3306 = vtos %v3305
          %v3307 = vadd.f32 %v3290, %v3292
          %3308 = vadd.xlane.f32.xlu0 %v3307
          %v3309 = vpop.xlane.xlu0 %3308
          %v3310 = vrot.slane %v3309, 4
          %v3311 = vadd.f32 %v3309, %v3310
          %v3312 = vrot.slane %v3311, 2
          %v3313 = vadd.f32 %v3311, %v3312
          %v3314 = vrot.slane %v3313, 1
          %v3315 = vadd.f32 %v3313, %v3314
          %s3316 = vtos %v3315
          %v3317 = vsub.f32 %v3287, %v3284
          %v3318 = vsub.f32 %v3288, %v3285
          %v3319 = vmul.f32 %v3290, %v3317
          %v3320 = vmul.f32 %v3292, %v3318
          %v3321 = vadd.f32 %v3319, %v3320
          %3322 = vadd.xlane.f32.xlu0 %v3321
          %v3323 = vpop.xlane.xlu0 %3322
          %v3324 = vrot.slane %v3323, 4
          %v3325 = vadd.f32 %v3323, %v3324
          %v3326 = vrot.slane %v3325, 2
          %v3327 = vadd.f32 %v3325, %v3326
          %v3328 = vrot.slane %v3327, 1
          %v3329 = vadd.f32 %v3327, %v3328
          %s3330 = vtos %v3329
          %v3331 = vstv %s3316
          %v3332 = vrcp.pop %v3331
          %s3333 = vtos %v3332
          %s3334 = smul.f32 %s3330, %s3333
          %v3335 = vstv %s3306
          %v3336 = vlog2.pop %v3335
          %v3337 = vmul.f32 %v3336, 0.6931472
          %s3338 = vtos %v3337
          %v3339 = vstv %s3316
          %v3340 = vlog2.pop %v3339
          %v3341 = vmul.f32 %v3340, 0.6931472
          %s3342 = vtos %v3341
          %s3343 = ssub.f32 %s3338, %s3342
          %s3344 = sadd.f32 %s3334, %s3343
        $region136: #{tpu_custom_call.1} parent=31 // pred_fallthru
          %s3345 = sphi 0, %s3258
          %s3346 = sphi 0, %s3344
        %p3347 = pneg %p3163
        // Predicated region
        $region137: #{tpu_custom_call.1} parent=31 // pred_check
          _
        $region138: #{tpu_custom_call.1} parent=31 // pred_check_branch
          %3349 = sbr.rel (%p3163) target = $region140
        $region139: #{tpu_custom_call.1} parent=31 // pred_region
          _
        $region140: #{tpu_custom_call.1} parent=31 // pred_fallthru
          %s3350 = sphi %s3345, 0.0
          %s3351 = sphi %s3346, 0.0
        %s3352 = sadd.f32 %s3098, %s3350
        %s3353 = sadd.f32 %s3099, %s3351
        %s3354 = sadd.f32 %s3100, %s3162
        %vm3355 = vcmp.eq.s32.totalorder %v292, 13
        %vm3356 = vcmp.eq.s32.totalorder %v293, 13
        %v3357 = vsel %vm3355, 1, 0
        %v3358 = vsel %vm3356, 1, 0
        %v3359 = vcvt.s32.f32 %v3357
        %v3360 = vcvt.s32.f32 %v3358
        %v3361 = vrot.slane %v3359, 7
        %v3362 = vrot.slane %v3360, 7
        %v3363 = vsel %vm313, %v3361, %v3362
        %v3364 = vsel %vm313, %v3362, %v3361
        %v3365 = vsel %vm299, %v3364, 0.0
        %v3366 = vsel %vm300, %v3363, 0.0
        %v3367 = vrot.slane %v3359, 1
        %v3368 = vrot.slane %v3360, 1
        %v3369 = vsel %vm320, %v3367, %v3368
        %v3370 = vsel %vm320, %v3368, %v3367
        %v3371 = vsel %vm301, %v3369, 0.0
        %v3372 = vsel %vm302, %v3370, 0.0
        %3373 = vrot.lane.b32.xlu0 %v3359, 1
        %v3374 = vpop.permute.xlu0 %3373
        %3375 = vrot.lane.b32.xlu0 %v3360, 1
        %v3376 = vpop.permute.xlu0 %3375
        %v3377 = vsel %vm303, %v3374, 0.0
        %v3378 = vsel %vm303, %v3376, 0.0
        %3379 = vrot.lane.b32.xlu0 %v3359, 127
        %v3380 = vpop.permute.xlu0 %3379
        %3381 = vrot.lane.b32.xlu0 %v3360, 127
        %v3382 = vpop.permute.xlu0 %3381
        %v3383 = vsel %vm304, %v3380, 0.0
        %v3384 = vsel %vm304, %v3382, 0.0
        %v3385 = vmax.f32 %v3359, %v3365
        %v3386 = vmax.f32 %v3360, %v3366
        %v3387 = vmax.f32 %v3371, %v3377
        %v3388 = vmax.f32 %v3372, %v3378
        %v3389 = vmax.f32 %v3385, %v3387
        %v3390 = vmax.f32 %v3386, %v3388
        %v3391 = vmax.f32 %v3389, %v3383
        %v3392 = vmax.f32 %v3390, %v3384
        %v3393 = vmin.f32 %v3359, %v3365
        %v3394 = vmin.f32 %v3360, %v3366
        %v3395 = vmin.f32 %v3371, %v3377
        %v3396 = vmin.f32 %v3372, %v3378
        %v3397 = vmin.f32 %v3393, %v3395
        %v3398 = vmin.f32 %v3394, %v3396
        %v3399 = vmin.f32 %v3397, %v3383
        %v3400 = vmin.f32 %v3398, %v3384
        %v3401 = vsub.f32 %v3391, %v3399
        %v3402 = vsub.f32 %v3392, %v3400
        %v3403 = vsub.f32 1.0, %v3401
        %v3404 = vsub.f32 1.0, %v3402
        %v3405 = vmul.f32 %v3359, %v3403
        %v3406 = vmul.f32 %v3360, %v3404
        %v3407 = vadd.f32 %v3401, %v3402
        %3408 = vadd.xlane.f32.xlu0 %v3407
        %v3409 = vpop.xlane.xlu0 %3408
        %v3410 = vrot.slane %v3409, 4
        %v3411 = vadd.f32 %v3409, %v3410
        %v3412 = vrot.slane %v3411, 2
        %v3413 = vadd.f32 %v3411, %v3412
        %v3414 = vrot.slane %v3413, 1
        %v3415 = vadd.f32 %v3413, %v3414
        %s3416 = vtos %v3415
        %p3417 = scmp.gt.f32.partialorder %s3416, 0.0
        // Predicated region
        $region141: #{tpu_custom_call.1} parent=31 // pred_check
          %p3418 = pneg %p3417
        $region142: #{tpu_custom_call.1} parent=31 // pred_check_branch
          %3420 = sbr.rel (%p3418) target = $region144
        $region143: #{tpu_custom_call.1} parent=31 // pred_region
          %s3421 = scalar_lea.vmem %s248, 208 [#allocation5]
          %v3422 = vld [vmem:[%s3421] sm:$0xff]
          %v3423 = vld [vmem:[%s3421 + $0x8] sm:$0xff]
          %s3424 = scalar_lea.vmem %s257, 208 [#allocation7]
          %v3425 = vld [vmem:[%s3424] sm:$0xff]
          %v3426 = vld [vmem:[%s3424 + $0x8] sm:$0xff]
          %v3427 = vmul.f32 %v3422, %v3401
          %v3428 = vmul.f32 %v3423, %v3402
          %v3429 = vmul.f32 %v3425, %v3401
          %v3430 = vmul.f32 %v3426, %v3402
          %v3431 = vmax.f32 %v3427, %v3428
          %3432 = vmax.xlane.f32.xlu0 %v3431
          %v3433 = vpop.xlane.xlu0 %3432
          %v3434 = vrot.slane %v3433, 4
          %v3435 = vmax.f32 %v3433, %v3434
          %v3436 = vrot.slane %v3435, 2
          %v3437 = vmax.f32 %v3435, %v3436
          %v3438 = vrot.slane %v3437, 1
          %v3439 = vmax.f32 %v3437, %v3438
          %s3440 = vtos %v3439
          %v3441 = vmax.f32 %v3429, %v3430
          %3442 = vmax.xlane.f32.xlu0 %v3441
          %v3443 = vpop.xlane.xlu0 %3442
          %v3444 = vrot.slane %v3443, 4
          %v3445 = vmax.f32 %v3443, %v3444
          %v3446 = vrot.slane %v3445, 2
          %v3447 = vmax.f32 %v3445, %v3446
          %v3448 = vrot.slane %v3447, 1
          %v3449 = vmax.f32 %v3447, %v3448
          %s3450 = vtos %v3449
          %v3451 = vstv %s3440
          %v3452 = vsub.f32 %v3427, %v3451
          %v3453 = vsub.f32 %v3428, %v3451
          %v3454 = vstv %s3450
          %v3455 = vsub.f32 %v3429, %v3454
          %v3456 = vsub.f32 %v3430, %v3454
          %v3457 = vmul.f32 %v3455, 1.442695
          %v3458 = vpow.pop %v3457
          %v3459 = vmul.f32 %v3456, 1.442695
          %v3460 = vpow.pop %v3459
          %v3461 = vmul.f32 %v3452, 1.442695
          %v3462 = vpow.pop %v3461
          %v3463 = vmul.f32 %v3453, 1.442695
          %v3464 = vpow.pop %v3463
          %v3465 = vadd.f32 %v3462, %v3464
          %3466 = vadd.xlane.f32.xlu0 %v3465
          %v3467 = vpop.xlane.xlu0 %3466
          %v3468 = vrot.slane %v3467, 4
          %v3469 = vadd.f32 %v3467, %v3468
          %v3470 = vrot.slane %v3469, 2
          %v3471 = vadd.f32 %v3469, %v3470
          %v3472 = vrot.slane %v3471, 1
          %v3473 = vadd.f32 %v3471, %v3472
          %s3474 = vtos %v3473
          %v3475 = vadd.f32 %v3458, %v3460
          %3476 = vadd.xlane.f32.xlu0 %v3475
          %v3477 = vpop.xlane.xlu0 %3476
          %v3478 = vrot.slane %v3477, 4
          %v3479 = vadd.f32 %v3477, %v3478
          %v3480 = vrot.slane %v3479, 2
          %v3481 = vadd.f32 %v3479, %v3480
          %v3482 = vrot.slane %v3481, 1
          %v3483 = vadd.f32 %v3481, %v3482
          %s3484 = vtos %v3483
          %v3485 = vsub.f32 %v3455, %v3452
          %v3486 = vsub.f32 %v3456, %v3453
          %v3487 = vmul.f32 %v3458, %v3485
          %v3488 = vmul.f32 %v3460, %v3486
          %v3489 = vadd.f32 %v3487, %v3488
          %3490 = vadd.xlane.f32.xlu0 %v3489
          %v3491 = vpop.xlane.xlu0 %3490
          %v3492 = vrot.slane %v3491, 4
          %v3493 = vadd.f32 %v3491, %v3492
          %v3494 = vrot.slane %v3493, 2
          %v3495 = vadd.f32 %v3493, %v3494
          %v3496 = vrot.slane %v3495, 1
          %v3497 = vadd.f32 %v3495, %v3496
          %s3498 = vtos %v3497
          %v3499 = vstv %s3484
          %v3500 = vrcp.pop %v3499
          %s3501 = vtos %v3500
          %s3502 = smul.f32 %s3498, %s3501
          %v3503 = vstv %s3474
          %v3504 = vlog2.pop %v3503
          %v3505 = vmul.f32 %v3504, 0.6931472
          %s3506 = vtos %v3505
          %v3507 = vstv %s3484
          %v3508 = vlog2.pop %v3507
          %v3509 = vmul.f32 %v3508, 0.6931472
          %s3510 = vtos %v3509
          %s3511 = ssub.f32 %s3506, %s3510
          %s3512 = sadd.f32 %s3502, %s3511
          %v3513 = vmul.f32 %v3422, %v3405
          %v3514 = vmul.f32 %v3423, %v3406
          %v3515 = vmul.f32 %v3425, %v3405
          %v3516 = vmul.f32 %v3426, %v3406
          %v3517 = vmax.f32 %v3513, %v3514
          %3518 = vmax.xlane.f32.xlu0 %v3517
          %v3519 = vpop.xlane.xlu0 %3518
          %v3520 = vrot.slane %v3519, 4
          %v3521 = vmax.f32 %v3519, %v3520
          %v3522 = vrot.slane %v3521, 2
          %v3523 = vmax.f32 %v3521, %v3522
          %v3524 = vrot.slane %v3523, 1
          %v3525 = vmax.f32 %v3523, %v3524
          %s3526 = vtos %v3525
          %v3527 = vmax.f32 %v3515, %v3516
          %3528 = vmax.xlane.f32.xlu0 %v3527
          %v3529 = vpop.xlane.xlu0 %3528
          %v3530 = vrot.slane %v3529, 4
          %v3531 = vmax.f32 %v3529, %v3530
          %v3532 = vrot.slane %v3531, 2
          %v3533 = vmax.f32 %v3531, %v3532
          %v3534 = vrot.slane %v3533, 1
          %v3535 = vmax.f32 %v3533, %v3534
          %s3536 = vtos %v3535
          %v3537 = vstv %s3526
          %v3538 = vsub.f32 %v3513, %v3537
          %v3539 = vsub.f32 %v3514, %v3537
          %v3540 = vstv %s3536
          %v3541 = vsub.f32 %v3515, %v3540
          %v3542 = vsub.f32 %v3516, %v3540
          %v3543 = vmul.f32 %v3541, 1.442695
          %v3544 = vpow.pop %v3543
          %v3545 = vmul.f32 %v3542, 1.442695
          %v3546 = vpow.pop %v3545
          %v3547 = vmul.f32 %v3538, 1.442695
          %v3548 = vpow.pop %v3547
          %v3549 = vmul.f32 %v3539, 1.442695
          %v3550 = vpow.pop %v3549
          %v3551 = vadd.f32 %v3548, %v3550
          %3552 = vadd.xlane.f32.xlu0 %v3551
          %v3553 = vpop.xlane.xlu0 %3552
          %v3554 = vrot.slane %v3553, 4
          %v3555 = vadd.f32 %v3553, %v3554
          %v3556 = vrot.slane %v3555, 2
          %v3557 = vadd.f32 %v3555, %v3556
          %v3558 = vrot.slane %v3557, 1
          %v3559 = vadd.f32 %v3557, %v3558
          %s3560 = vtos %v3559
          %v3561 = vadd.f32 %v3544, %v3546
          %3562 = vadd.xlane.f32.xlu0 %v3561
          %v3563 = vpop.xlane.xlu0 %3562
          %v3564 = vrot.slane %v3563, 4
          %v3565 = vadd.f32 %v3563, %v3564
          %v3566 = vrot.slane %v3565, 2
          %v3567 = vadd.f32 %v3565, %v3566
          %v3568 = vrot.slane %v3567, 1
          %v3569 = vadd.f32 %v3567, %v3568
          %s3570 = vtos %v3569
          %v3571 = vsub.f32 %v3541, %v3538
          %v3572 = vsub.f32 %v3542, %v3539
          %v3573 = vmul.f32 %v3544, %v3571
          %v3574 = vmul.f32 %v3546, %v3572
          %v3575 = vadd.f32 %v3573, %v3574
          %3576 = vadd.xlane.f32.xlu0 %v3575
          %v3577 = vpop.xlane.xlu0 %3576
          %v3578 = vrot.slane %v3577, 4
          %v3579 = vadd.f32 %v3577, %v3578
          %v3580 = vrot.slane %v3579, 2
          %v3581 = vadd.f32 %v3579, %v3580
          %v3582 = vrot.slane %v3581, 1
          %v3583 = vadd.f32 %v3581, %v3582
          %s3584 = vtos %v3583
          %v3585 = vstv %s3570
          %v3586 = vrcp.pop %v3585
          %s3587 = vtos %v3586
          %s3588 = smul.f32 %s3584, %s3587
          %v3589 = vstv %s3560
          %v3590 = vlog2.pop %v3589
          %v3591 = vmul.f32 %v3590, 0.6931472
          %s3592 = vtos %v3591
          %v3593 = vstv %s3570
          %v3594 = vlog2.pop %v3593
          %v3595 = vmul.f32 %v3594, 0.6931472
          %s3596 = vtos %v3595
          %s3597 = ssub.f32 %s3592, %s3596
          %s3598 = sadd.f32 %s3588, %s3597
        $region144: #{tpu_custom_call.1} parent=31 // pred_fallthru
          %s3599 = sphi 0, %s3512
          %s3600 = sphi 0, %s3598
        %p3601 = pneg %p3417
        // Predicated region
        $region145: #{tpu_custom_call.1} parent=31 // pred_check
          _
        $region146: #{tpu_custom_call.1} parent=31 // pred_check_branch
          %3603 = sbr.rel (%p3417) target = $region148
        $region147: #{tpu_custom_call.1} parent=31 // pred_region
          _
        $region148: #{tpu_custom_call.1} parent=31 // pred_fallthru
          %s3604 = sphi %s3599, 0.0
          %s3605 = sphi %s3600, 0.0
        %s3606 = sadd.f32 %s3352, %s3604
        %s3607 = sadd.f32 %s3353, %s3605
        %s3608 = sadd.f32 %s3354, %s3416
        %vm3609 = vcmp.eq.s32.totalorder %v295, 0
        %vm3610 = vcmp.eq.s32.totalorder %v295, 1
        %vm3611 = vcmp.eq.s32.totalorder %v295, 2
        %v3612 = vstv %s3608
        %v3613 = vsel %vm3611, %v3612, 0.0
        %v3614 = vstv %s3607
        %v3615 = vsel %vm3610, %v3614, %v3613
        %v3616 = vstv %s3606
        %v3617 = vsel %vm3609, %v3616, %v3615
        %3618 = vst [vmem:[%s289] sm:$0xff] %v3617
        %s3619 = sand.u32 %s127, 1
        %s3620 = scalar_lea.sflag [#allocation4], %s3619
        %s3621 = sand.u32 %s127, 1
        %s3622 = smul.addr %s3621, 8
        %s3623 = scalar_lea.vmem [#allocation8], %s3622
        // Predicated region
        $region149: #{tpu_custom_call.1} parent=31 // pred_check
          %p3624 = pneg %p137
        $region150: #{tpu_custom_call.1} parent=31 // pred_check_branch
          %3626 = sbr.rel (%p3624) target = $region152
        $region151: #{tpu_custom_call.1} parent=31 // pred_region
          %s3628 = ssub.s32 128, 128
          %3629 = vsyncadd %s3620, %s3628
          %s3630 = sadd.s32 %s28, %s27
          %s3631 = smul.addr %s3630, 128
          %s3632 = scalar_lea.hbm %s3, %s3631
          %s3634 = sshll.u32 %s3623, 4
          %s3635 = int_to_ptr.vmem [resolvable:$true] %s3634
          %3637 = dma.vmem_to_hbm [thread:$0]  %s3635, 128, %s3632, %s3620
        $region152: #{tpu_custom_call.1} parent=31 // pred_fallthru
          _
      $region32: #{tpu_custom_call.1} parent=5 // pred_fallthru
        _
      %p3638 = scmp.le.s32.totalorder 2, %s18
      // Predicated region
      $region153: #{tpu_custom_call.1} parent=5 // pred_check
        %p3639 = pneg %p3638
      $region154: #{tpu_custom_call.1} parent=5 // pred_check_branch
        %3641 = sbr.rel (%p3639) target = $region156
      $region155: #{tpu_custom_call.1} parent=5 // pred_region
        %s3642 = ssub.s32 %s18, 2
        // Predicated region
        $region157: #{tpu_custom_call.1} parent=155 // pred_check
          %p3643 = pneg %p143
        $region158: #{tpu_custom_call.1} parent=155 // pred_check_branch
          %3645 = sbr.rel (%p3643) target = $region160
        $region159: #{tpu_custom_call.1} parent=155 // pred_region
          %s3646 = sand.u32 %s128, 1
          %s3647 = scalar_lea.sflag [#allocation4], %s3646
          %s3648 = sand.u32 %s128, 1
          %s3649 = smul.addr %s3648, 8
          %s3650 = scalar_lea.vmem [#allocation8], %s3649
          %3651 = dma.done %s3647, 128
        $region160: #{tpu_custom_call.1} parent=155 // pred_fallthru
          _
      $region156: #{tpu_custom_call.1} parent=5 // pred_fallthru
        _
    $region6: #{tpu_custom_call.1} parent=1 // loop_footer
      %s22 = sadd.s32 1, %s18
    $region7: #{tpu_custom_call.1} parent=1 // loop_footer_branch
      %17 = sbr.rel target = $region3
    $region8: #{tpu_custom_call.1} parent=1 // loop_exit
      _
    %3652 = vsyncpa [#allocation3], 1
    %s3653 = scalar_lea.sflag [#allocation3], 1
    %3654 = vsyncpa %s3653, 1
    %3655 = vsyncpa [#allocation6], 1
    %s3656 = scalar_lea.sflag [#allocation6], 1
    %3657 = vsyncpa %s3656, 1
    %3658 = vsyncpa [#allocation4], 1
    %s3659 = scalar_lea.sflag [#allocation4], 1
    %3660 = vsyncpa %s3659, 1

</llo_original>
